<compile_context>
chip_gen: v5e
topology: v5e:2x2
jax: 0.10.0
libtpu: 0.0.40
codegen_flags: <defaults>
</compile_context>

<pallas_src>
import functools

import jax
import jax.numpy as jnp
from jax import lax
from jax.experimental import pallas as pl
from jax.experimental.pallas import tpu as pltpu

N_CLASSES = 6
C_OUT = 2          # gen_conf['c_out'] = 2  /  disc_conf['c_in'] = 2
Z_DIM = 32
H = W = 16
P4 = 16            # 4*4 base-resolution spatial positions
NGF0 = 64          # generator feature maps at 4x4
NGF1 = 32          # generator feature maps at 8x8
NDF1 = 32          # discriminator feature maps at 8x8
NDF2 = 64          # discriminator feature maps at 4x4
LANE = 128         # lane-dense width for the scalar loss outputs


def _softplus(x):
    # numerically-stable softplus (EUP exp/log; VPU max/abs)
    return jnp.maximum(x, 0.0) + jnp.log(1.0 + jnp.exp(-jnp.abs(x)))


# ----------------------------------------------------------------------------
# The single fused kernel: one grid step == one class (all weights + activations in VMEM)
# ----------------------------------------------------------------------------
def _fused_gan_kernel(
    zb1_ref, zb2_ref, xr_ref,
    gfc_w_ref, gfc_b_ref, gdc1_w_ref, gdc1_b_ref, gdc2_w_ref, gdc2_b_ref,
    dc1_w_ref, dc1_b_ref, dc2_w_ref, dc2_b_ref, dfc_w_ref, dfc_b_ref,
    dloss_ref, gloss_ref,
    *, batch: int):
  f32 = jnp.float32
  bf16 = jnp.bfloat16
  rows = P4 * batch            # activation rows are batch-major: row = b*16 + (y*4 + x)

  # ---- per-class weights (class already selected by the BlockSpec; leading block dim = 1) --
  gfc_w = gfc_w_ref[0].astype(bf16)                               # (P4*Z, NGF0)
  gfc_b = gfc_b_ref[0]                                            # (P4, NGF0)
  gdc1_b = gdc1_b_ref[0]                                          # (1, NGF1)  per-channel
  gdc2_w = gdc2_w_ref[0].astype(bf16)                             # (NGF1, 4*C_OUT) cols=(kh,kw,c)
  gdc2_b = jnp.concatenate([gdc2_b_ref[0]] * 4, axis=-1)          # (1, 4*C_OUT) channel bias tiled
  dc1_w = dc1_w_ref[0].astype(bf16)                               # (4*C_OUT, NDF1) rows=(dy,dx,c)
  dc1_b = dc1_b_ref[0]                                            # (1, NDF1)
  dc2_w = dc2_w_ref[0].astype(bf16)                               # (4*NDF1, NDF2) rows=(dy,dx,c)
  dc2_b = dc2_b_ref[0]                                            # (1, NDF2)
  dfc_w = dfc_w_ref[0]                                            # (P4, NDF2)
  dfc_b = dfc_b_ref[0]                                            # (1, 1)

  # position-dependent tensors tiled over the batch-major rows
  gfc_b_rows = jnp.concatenate([gfc_b] * batch, axis=0)           # (rows, NGF0)
  dfc_w_rows = jnp.concatenate([dfc_w] * batch, axis=0)           # (rows, NDF2)

  # selection matrix: sel[b, r] = 1 iff row r belongs to sample b (rows b*16 .. b*16+15)
  r_idx = lax.broadcasted_iota(jnp.int32, (batch, rows), 1)
  b_idx = lax.broadcasted_iota(jnp.int32, (batch, rows), 0)
  sel = ((r_idx >= b_idx * P4) & (r_idx < b_idx * P4 + P4)).astype(f32)

  def lrelu(y):
      return jnp.where(y > 0.0, y, 0.2 * y)

  def generator(zb):
      """zb: (rows, P4*Z) bf16 block-diagonal noise -> 4 groups of (rows, 4*C_OUT) tanh patches.

      Group g=(kh1,kw1), row (b, y, x) holds the generated 2x2 pixel block at 16x16 position
      (4y+2kh1+kh2, 4x+2kw1+kw2), which is exactly the 2x2 patch the discriminator's first
      stride-2 conv consumes at 8x8 patch position (2y+kh1, 2x+kw1) — so no sub-pixel shuffle
      or patch extraction is ever materialized for fake images.
      """
      h0 = jnp.dot(zb, gfc_w, preferred_element_type=f32) + gfc_b_rows
      h0 = jnp.maximum(h0, 0.0).astype(bf16)                      # (rows, NGF0)
      patches = []
      for g in range(4):                                          # g = (kh1, kw1)
          w1g = gdc1_w_ref[0, g].astype(bf16)                     # (NGF0, NGF1)
          h1g = jnp.maximum(
              jnp.dot(h0, w1g, preferred_element_type=f32) + gdc1_b, 0.0)
          pg = jnp.tanh(
              jnp.dot(h1g.astype(bf16), gdc2_w, preferred_element_type=f32) + gdc2_b)
          patches.append(pg)                                      # (rows, 4*C_OUT)
      return patches

  def discriminator(patches):
      """patches: 4 groups of (rows, 4*C_OUT) 2x2 image patches -> per-sample logits (batch, 1)."""
      feats = []
      for g in range(4):
          hg = lrelu(jnp.dot(patches[g].astype(bf16), dc1_w,
                             preferred_element_type=f32) + dc1_b)
          feats.append(hg)                                        # (rows, NDF1) f32
      # d_c2 input at 4x4 position (y, x) is the concat over (dy, dx) of the 8x8 features
      x2 = jnp.concatenate(feats, axis=-1).astype(bf16)           # (rows, 4*NDF1)
      h2 = lrelu(jnp.dot(x2, dc2_w, preferred_element_type=f32) + dc2_b)   # (rows, NDF2)
      # final dense (K = P4*NDF2 -> 1) as VPU multiply + per-sample reduce (no 1-column matmul)
      prod = h2 * dfc_w_rows                                      # (rows, NDF2)
      per_b = jnp.dot(sel, prod, preferred_element_type=f32)      # (batch, NDF2)
      return jnp.sum(per_b, axis=-1, keepdims=True) + dfc_b       # (batch, 1)

  # ---- pass 1: discriminator-update forward (fake detached in torch; fwd identical) ----
  fake1 = generator(zb1_ref[...].astype(bf16))
  real_patches = [xr_ref[0, g] for g in range(4)]
  logit_real = discriminator(real_patches)
  logit_fake = discriminator(fake1)
  # BCE-with-logits: target 1 on real -> softplus(-lr); target 0 on fake -> softplus(lf)
  d_part = jnp.mean(_softplus(-logit_real) + _softplus(logit_fake))

  # ---- pass 2: generator-update forward (fresh noise, discriminator frozen) ----
  fake2 = generator(zb2_ref[...].astype(bf16))
  logit_fake2 = discriminator(fake2)
  g_part = jnp.mean(_softplus(-logit_fake2))

  # lane-dense scalar outputs (one 128-wide row per class)
  dloss_ref[...] = jnp.broadcast_to(d_part, (1, 1, LANE)).astype(f32)
  gloss_ref[...] = jnp.broadcast_to(g_part, (1, 1, LANE)).astype(f32)


# ----------------------------------------------------------------------------
# Wrapper-side (cheap, one-shot) input packing
# ----------------------------------------------------------------------------
def _block_diag_z(z):
    """(B, Z) -> (B*P4, P4*Z): row b*16+p holds z[b] in column block p (zeros elsewhere).

    This lets the z -> 4x4xNGF0 dense layer produce (batch, position)-major rows directly
    with a single matmul against a per-position-blocked weight — no in-kernel reshape.
    """
    b = z.shape[0]
    eye = jnp.eye(P4, dtype=z.dtype)
    zb = z[:, None, None, :] * eye[None, :, :, None]           # (B, P4, P4, Z)
    return zb.reshape(b * P4, P4 * Z_DIM)


def _group_real_patches(x):
    """(6, B, C, 16, 16) -> (6, 4, B*P4, 4*C) stride-2 2x2 patches, grouped to mirror the
    generator's two successive 2x upsamples: group = (dy1, dx1), row = b*16 + y*4 + x,
    col = (dy2, dx2, channel)."""
    c, b = x.shape[0], x.shape[1]
    xt = x.transpose(0, 1, 3, 4, 2)                            # (6, B, H, W, C)
    xt = xt.reshape(c, b, 4, 2, 2, 4, 2, 2, C_OUT)             # (cls,b, y,dy1,dy2, x,dx1,dx2, ch)
    xt = xt.transpose(0, 3, 6, 1, 2, 5, 4, 7, 8)               # (cls, dy1, dx1, b, y, x, dy2, dx2, ch)
    return xt.reshape(c, 4, b * P4, 4 * C_OUT)


# ----------------------------------------------------------------------------
# Module-level forward: (disc_loss, gen_loss), matching BioGanInd6Class.forward math
# ----------------------------------------------------------------------------
def biogan_ind6class_forward(x, params, key):
    batch = x.shape[1]
    rows = P4 * batch
    kz1, kz2 = jax.random.split(key)
    # the same noise drives all 6 independent per-class generators (shared, not broadcast 6x)
    z1 = jax.random.normal(kz1, (batch, Z_DIM), jnp.float32)
    z2 = jax.random.normal(kz2, (batch, Z_DIM), jnp.float32)
    zb1 = _block_diag_z(z1)
    zb2 = _block_diag_z(z2)
    xr = _group_real_patches(x)

    cls3 = lambda i: (i, 0, 0)
    cls4 = lambda i: (i, 0, 0, 0)
    shared2 = lambda i: (0, 0)

    d_part, g_part = pl.pallas_call(
        functools.partial(_fused_gan_kernel, batch=batch),
        out_shape=(jax.ShapeDtypeStruct((N_CLASSES, 1, LANE), jnp.float32),
                   jax.ShapeDtypeStruct((N_CLASSES, 1, LANE), jnp.float32)),
        grid=(N_CLASSES,),
        in_specs=[
            pl.BlockSpec((rows, P4 * Z_DIM), shared2),            # zb1 (shared across classes)
            pl.BlockSpec((rows, P4 * Z_DIM), shared2),            # zb2 (shared across classes)
            pl.BlockSpec((1, 4, rows, 4 * C_OUT), cls4),          # grouped real patches
            pl.BlockSpec((1, P4 * Z_DIM, NGF0), cls3),            # g_fc_w
            pl.BlockSpec((1, P4, NGF0), cls3),                    # g_fc_b
            pl.BlockSpec((1, 4, NGF0, NGF1), cls4),               # g_dc1_w
            pl.BlockSpec((1, 1, NGF1), cls3),                     # g_dc1_b
            pl.BlockSpec((1, NGF1, 4 * C_OUT), cls3),             # g_dc2_w
            pl.BlockSpec((1, 1, C_OUT), cls3),                    # g_dc2_b
            pl.BlockSpec((1, 4 * C_OUT, NDF1), cls3),             # d_c1_w
            pl.BlockSpec((1, 1, NDF1), cls3),                     # d_c1_b
            pl.BlockSpec((1, 4 * NDF1, NDF2), cls3),              # d_c2_w
            pl.BlockSpec((1, 1, NDF2), cls3),                     # d_c2_b
            pl.BlockSpec((1, P4, NDF2), cls3),                    # d_fc_w
            pl.BlockSpec((1, 1, 1), cls3),                        # d_fc_b
        ],
        out_specs=(pl.BlockSpec((1, 1, LANE), cls3),
                   pl.BlockSpec((1, 1, LANE), cls3)),
        compiler_params=pltpu.CompilerParams(
            dimension_semantics=("parallel",)),                   # classes shard across TCs (v7x)
    )(zb1, zb2, xr,
      params["g_fc_w"], params["g_fc_b"],
      params["g_dc1_w"], params["g_dc1_b"],
      params["g_dc2_w"], params["g_dc2_b"],
      params["d_c1_w"], params["d_c1_b"],
      params["d_c2_w"], params["d_c2_b"],
      params["d_fc_w"], params["d_fc_b"])

    # cross-class mean outside the class-parallel kernel (6-element reductions)
    d_loss = jnp.mean(d_part[:, 0, 0])
    g_loss = jnp.mean(g_part[:, 0, 0])
    return d_loss, g_loss


# ----------------------------------------------------------------------------
# Deterministic parameter init (weights_init_naive ~ N(0, 0.02), biases = 0),
# stored directly in the matmul-ready per-class layouts the kernel consumes.
# ----------------------------------------------------------------------------
def init_params(key):
    ks = jax.random.split(key, 6)
    std = 0.02

    def w(k, shape):
        return std * jax.random.normal(k, shape, jnp.float32)

    return {
        # generator (6 independent per-class generators)
        "g_fc_w": w(ks[0], (N_CLASSES, P4 * Z_DIM, NGF0)),   # dense z -> 4x4xNGF0, blocked per position
        "g_fc_b": jnp.zeros((N_CLASSES, P4, NGF0), jnp.float32),
        "g_dc1_w": w(ks[1], (N_CLASSES, 4, NGF0, NGF1)),     # ConvT 2x2 s2, grouped by (kh, kw)
        "g_dc1_b": jnp.zeros((N_CLASSES, 1, NGF1), jnp.float32),
        "g_dc2_w": w(ks[2], (N_CLASSES, NGF1, 4 * C_OUT)),   # ConvT 2x2 s2, cols = (kh, kw, c_out)
        "g_dc2_b": jnp.zeros((N_CLASSES, 1, C_OUT), jnp.float32),
        # discriminator (6 independent per-class discriminators)
        "d_c1_w": w(ks[3], (N_CLASSES, 4 * C_OUT, NDF1)),    # Conv 2x2 s2, rows = (dy, dx, c_in)
        "d_c1_b": jnp.zeros((N_CLASSES, 1, NDF1), jnp.float32),
        "d_c2_w": w(ks[4], (N_CLASSES, 4 * NDF1, NDF2)),     # Conv 2x2 s2, rows = (dy, dx, c_in)
        "d_c2_b": jnp.zeros((N_CLASSES, 1, NDF2), jnp.float32),
        "d_fc_w": w(ks[5], (N_CLASSES, P4, NDF2)),           # dense 4x4xNDF2 -> 1, viewed (p4, c)
        "d_fc_b": jnp.zeros((N_CLASSES, 1, 1), jnp.float32),
    }


if __name__ == "__main__":
    root_key = jax.random.PRNGKey(0)
    k_params, k_x, k_noise = jax.random.split(root_key, 3)

    B = 2
    # x: (6 classes, batch, 2 channels, H, W) — same convention as the torch module
    x = jax.random.normal(k_x, (N_CLASSES, B, C_OUT, H, W), jnp.float32)
    params = init_params(k_params)

    fwd = jax.jit(biogan_ind6class_forward)
    d_loss, g_loss = fwd(x, params, k_noise)
    jax.block_until_ready((d_loss, g_loss))

    assert d_loss.shape == () and g_loss.shape == ()
    assert bool(jnp.isfinite(d_loss)) and bool(jnp.isfinite(g_loss))
    print("KERNEL_OK")
</pallas_src>

<mosaic_0001>
module attributes {stable_mosaic.version = 11 : i64} {
  func.func @_fused_gan_kernel(%arg0: i32, %arg1: memref<32x512xf32, #tpu.memory_space<vmem>>, %arg2: memref<32x512xf32, #tpu.memory_space<vmem>>, %arg3: memref<1x4x32x8xf32, #tpu.memory_space<vmem>>, %arg4: memref<1x512x64xf32, #tpu.memory_space<vmem>>, %arg5: memref<1x16x64xf32, #tpu.memory_space<vmem>>, %arg6: memref<1x4x64x32xf32, #tpu.memory_space<vmem>>, %arg7: memref<1x1x32xf32, #tpu.memory_space<vmem>>, %arg8: memref<1x32x8xf32, #tpu.memory_space<vmem>>, %arg9: memref<1x1x2xf32, #tpu.memory_space<vmem>>, %arg10: memref<1x8x32xf32, #tpu.memory_space<vmem>>, %arg11: memref<1x1x32xf32, #tpu.memory_space<vmem>>, %arg12: memref<1x128x64xf32, #tpu.memory_space<vmem>>, %arg13: memref<1x1x64xf32, #tpu.memory_space<vmem>>, %arg14: memref<1x16x64xf32, #tpu.memory_space<vmem>>, %arg15: memref<1x1x1xf32, #tpu.memory_space<vmem>>, %arg16: memref<1x1x128xf32, #tpu.memory_space<vmem>>, %arg17: memref<1x1x128xf32, #tpu.memory_space<vmem>>) attributes {dimension_semantics = [#tpu.dimension_semantics<parallel>], iteration_bounds = array<i64: 6>, scalar_prefetch = 0 : i64, scratch_operands = 0 : i64, tpu.core_type = #tpu.core_type<tc>, window_params = [{pipeline_mode = #tpu.pipeline_mode<synchronous>, transform_indices = @transform_0, window_bounds = array<i64: 32, 512>}, {pipeline_mode = #tpu.pipeline_mode<synchronous>, transform_indices = @transform_1, window_bounds = array<i64: 32, 512>}, {transform_indices = @transform_2, window_bounds = array<i64: 1, 4, 32, 8>}, {transform_indices = @transform_3, window_bounds = array<i64: 1, 512, 64>}, {transform_indices = @transform_4, window_bounds = array<i64: 1, 16, 64>}, {transform_indices = @transform_5, window_bounds = array<i64: 1, 4, 64, 32>}, {transform_indices = @transform_6, window_bounds = array<i64: 1, 1, 32>}, {transform_indices = @transform_7, window_bounds = array<i64: 1, 32, 8>}, {transform_indices = @transform_8, window_bounds = array<i64: 1, 1, 2>}, {transform_indices = @transform_9, window_bounds = array<i64: 1, 8, 32>}, {transform_indices = @transform_10, window_bounds = array<i64: 1, 1, 32>}, {transform_indices = @transform_11, window_bounds = array<i64: 1, 128, 64>}, {transform_indices = @transform_12, window_bounds = array<i64: 1, 1, 64>}, {transform_indices = @transform_13, window_bounds = array<i64: 1, 16, 64>}, {transform_indices = @transform_14, window_bounds = array<i64: 1, 1, 1>}, {transform_indices = @transform_15, window_bounds = array<i64: 1, 1, 128>}, {transform_indices = @transform_16, window_bounds = array<i64: 1, 1, 128>}]} {
    %c0 = arith.constant 0 : index
    %c0_0 = arith.constant 0 : index
    %c0_1 = arith.constant 0 : index
    %0 = vector.load %arg4[%c0, %c0_0, %c0_1] : memref<1x512x64xf32, #tpu.memory_space<vmem>>, vector<1x512x64xf32>
    %1 = vector.shape_cast %0 : vector<1x512x64xf32> to vector<512x64xf32>
    %2 = arith.truncf %1 : vector<512x64xf32> to vector<512x64xbf16>
    %c0_2 = arith.constant 0 : index
    %c0_3 = arith.constant 0 : index
    %c0_4 = arith.constant 0 : index
    %3 = vector.load %arg5[%c0_2, %c0_3, %c0_4] : memref<1x16x64xf32, #tpu.memory_space<vmem>>, vector<1x16x64xf32>
    %4 = vector.shape_cast %3 : vector<1x16x64xf32> to vector<16x64xf32>
    %c0_5 = arith.constant 0 : index
    %c0_6 = arith.constant 0 : index
    %c0_7 = arith.constant 0 : index
    %5 = vector.load %arg7[%c0_5, %c0_6, %c0_7] : memref<1x1x32xf32, #tpu.memory_space<vmem>>, vector<1x1x32xf32>
    %6 = vector.shape_cast %5 : vector<1x1x32xf32> to vector<1x32xf32>
    %c0_8 = arith.constant 0 : index
    %c0_9 = arith.constant 0 : index
    %c0_10 = arith.constant 0 : index
    %7 = vector.load %arg8[%c0_8, %c0_9, %c0_10] : memref<1x32x8xf32, #tpu.memory_space<vmem>>, vector<1x32x8xf32>
    %8 = vector.shape_cast %7 : vector<1x32x8xf32> to vector<32x8xf32>
    %9 = arith.truncf %8 : vector<32x8xf32> to vector<32x8xbf16>
    %c0_11 = arith.constant 0 : index
    %c0_12 = arith.constant 0 : index
    %c0_13 = arith.constant 0 : index
    %10 = vector.load %arg9[%c0_11, %c0_12, %c0_13] : memref<1x1x2xf32, #tpu.memory_space<vmem>>, vector<1x1x2xf32>
    %11 = vector.shape_cast %10 : vector<1x1x2xf32> to vector<1x2xf32>
    %12 = tpu.concatenate %11, %11, %11, %11 in 1 : vector<1x2xf32>, vector<1x2xf32>, vector<1x2xf32>, vector<1x2xf32> -> vector<1x8xf32>
    %c0_14 = arith.constant 0 : index
    %c0_15 = arith.constant 0 : index
    %c0_16 = arith.constant 0 : index
    %13 = vector.load %arg10[%c0_14, %c0_15, %c0_16] : memref<1x8x32xf32, #tpu.memory_space<vmem>>, vector<1x8x32xf32>
    %14 = vector.shape_cast %13 : vector<1x8x32xf32> to vector<8x32xf32>
    %15 = arith.truncf %14 : vector<8x32xf32> to vector<8x32xbf16>
    %c0_17 = arith.constant 0 : index
    %c0_18 = arith.constant 0 : index
    %c0_19 = arith.constant 0 : index
    %16 = vector.load %arg11[%c0_17, %c0_18, %c0_19] : memref<1x1x32xf32, #tpu.memory_space<vmem>>, vector<1x1x32xf32>
    %17 = vector.shape_cast %16 : vector<1x1x32xf32> to vector<1x32xf32>
    %c0_20 = arith.constant 0 : index
    %c0_21 = arith.constant 0 : index
    %c0_22 = arith.constant 0 : index
    %18 = vector.load %arg12[%c0_20, %c0_21, %c0_22] : memref<1x128x64xf32, #tpu.memory_space<vmem>>, vector<1x128x64xf32>
    %19 = vector.shape_cast %18 : vector<1x128x64xf32> to vector<128x64xf32>
    %20 = arith.truncf %19 : vector<128x64xf32> to vector<128x64xbf16>
    %c0_23 = arith.constant 0 : index
    %c0_24 = arith.constant 0 : index
    %c0_25 = arith.constant 0 : index
    %21 = vector.load %arg13[%c0_23, %c0_24, %c0_25] : memref<1x1x64xf32, #tpu.memory_space<vmem>>, vector<1x1x64xf32>
    %22 = vector.shape_cast %21 : vector<1x1x64xf32> to vector<1x64xf32>
    %c0_26 = arith.constant 0 : index
    %c0_27 = arith.constant 0 : index
    %c0_28 = arith.constant 0 : index
    %23 = vector.load %arg14[%c0_26, %c0_27, %c0_28] : memref<1x16x64xf32, #tpu.memory_space<vmem>>, vector<1x16x64xf32>
    %24 = vector.shape_cast %23 : vector<1x16x64xf32> to vector<16x64xf32>
    %c0_29 = arith.constant 0 : index
    %c0_30 = arith.constant 0 : index
    %c0_31 = arith.constant 0 : index
    %25 = vector.load %arg15[%c0_29, %c0_30, %c0_31] : memref<1x1x1xf32, #tpu.memory_space<vmem>>, vector<1x1x1xf32>
    %26 = vector.shape_cast %25 : vector<1x1x1xf32> to vector<1x1xf32>
    %27 = tpu.concatenate %4, %4 in 0 : vector<16x64xf32>, vector<16x64xf32> -> vector<32x64xf32>
    %28 = tpu.concatenate %24, %24 in 0 : vector<16x64xf32>, vector<16x64xf32> -> vector<32x64xf32>
    %29 = tpu.iota {dimensions = array<i32: 1>} : vector<2x32xi32>
    %30 = tpu.iota {dimensions = array<i32: 0>} : vector<2x32xi32>
    %c16_i32 = arith.constant 16 : i32
    %31 = vector.broadcast %c16_i32 : i32 to vector<2x32xi32>
    %32 = arith.muli %30, %31 : vector<2x32xi32>
    %33 = arith.cmpi sge, %29, %32 : vector<2x32xi32>
    %c16_i32_32 = arith.constant 16 : i32
    %34 = vector.broadcast %c16_i32_32 : i32 to vector<2x32xi32>
    %35 = arith.muli %30, %34 : vector<2x32xi32>
    %c16_i32_33 = arith.constant 16 : i32
    %36 = vector.broadcast %c16_i32_33 : i32 to vector<2x32xi32>
    %37 = arith.addi %35, %36 : vector<2x32xi32>
    %38 = arith.cmpi slt, %29, %37 : vector<2x32xi32>
    %39 = arith.andi %33, %38 : vector<2x32xi1>
    %40 = arith.extui %39 : vector<2x32xi1> to vector<2x32xi32>
    %41 = arith.sitofp %40 : vector<2x32xi32> to vector<2x32xf32>
    %c0_34 = arith.constant 0 : index
    %c0_35 = arith.constant 0 : index
    %42 = vector.load %arg1[%c0_34, %c0_35] : memref<32x512xf32, #tpu.memory_space<vmem>>, vector<32x512xf32>
    %43 = arith.truncf %42 : vector<32x512xf32> to vector<32x512xbf16>
    %cst = arith.constant dense<0.000000e+00> : vector<32x64xf32>
    %44 = tpu.matmul %43, %2, %cst {dimension_numbers = #tpu.dot_dimension_numbers<[1], [0], [0], [1], [0, 0, 1, 1], [], []>} : vector<32x512xbf16>, vector<512x64xbf16>, vector<32x64xf32> -> vector<32x64xf32>
    %45 = arith.addf %44, %27 : vector<32x64xf32>
    %cst_36 = arith.constant 0.000000e+00 : f32
    %46 = vector.broadcast %cst_36 : f32 to vector<32x64xf32>
    %47 = arith.maximumf %45, %46 : vector<32x64xf32>
    %48 = arith.truncf %47 : vector<32x64xf32> to vector<32x64xbf16>
    %c0_37 = arith.constant 0 : index
    %c0_38 = arith.constant 0 : index
    %c0_39 = arith.constant 0 : index
    %c0_40 = arith.constant 0 : index
    %49 = vector.load %arg6[%c0_37, %c0_38, %c0_39, %c0_40] : memref<1x4x64x32xf32, #tpu.memory_space<vmem>>, vector<1x1x64x32xf32>
    %50 = vector.shape_cast %49 : vector<1x1x64x32xf32> to vector<64x32xf32>
    %51 = arith.truncf %50 : vector<64x32xf32> to vector<64x32xbf16>
    %cst_41 = arith.constant dense<0.000000e+00> : vector<32x32xf32>
    %52 = tpu.matmul %48, %51, %cst_41 {dimension_numbers = #tpu.dot_dimension_numbers<[1], [0], [0], [1], [0, 0, 1, 1], [], []>} : vector<32x64xbf16>, vector<64x32xbf16>, vector<32x32xf32> -> vector<32x32xf32>
    %53 = vector.broadcast %6 : vector<1x32xf32> to vector<32x32xf32>
    %54 = arith.addf %52, %53 : vector<32x32xf32>
    %cst_42 = arith.constant 0.000000e+00 : f32
    %55 = vector.broadcast %cst_42 : f32 to vector<32x32xf32>
    %56 = arith.maximumf %54, %55 : vector<32x32xf32>
    %57 = arith.truncf %56 : vector<32x32xf32> to vector<32x32xbf16>
    %cst_43 = arith.constant dense<0.000000e+00> : vector<32x8xf32>
    %58 = tpu.matmul %57, %9, %cst_43 {dimension_numbers = #tpu.dot_dimension_numbers<[1], [0], [0], [1], [0, 0, 1, 1], [], []>} : vector<32x32xbf16>, vector<32x8xbf16>, vector<32x8xf32> -> vector<32x8xf32>
    %59 = vector.broadcast %12 : vector<1x8xf32> to vector<32x8xf32>
    %60 = arith.addf %58, %59 : vector<32x8xf32>
    %61 = math.tanh %60 : vector<32x8xf32>
    %c0_44 = arith.constant 0 : index
    %c1 = arith.constant 1 : index
    %c0_45 = arith.constant 0 : index
    %c0_46 = arith.constant 0 : index
    %62 = vector.load %arg6[%c0_44, %c1, %c0_45, %c0_46] : memref<1x4x64x32xf32, #tpu.memory_space<vmem>>, vector<1x1x64x32xf32>
    %63 = vector.shape_cast %62 : vector<1x1x64x32xf32> to vector<64x32xf32>
    %64 = arith.truncf %63 : vector<64x32xf32> to vector<64x32xbf16>
    %cst_47 = arith.constant dense<0.000000e+00> : vector<32x32xf32>
    %65 = tpu.matmul %48, %64, %cst_47 {dimension_numbers = #tpu.dot_dimension_numbers<[1], [0], [0], [1], [0, 0, 1, 1], [], []>} : vector<32x64xbf16>, vector<64x32xbf16>, vector<32x32xf32> -> vector<32x32xf32>
    %66 = vector.broadcast %6 : vector<1x32xf32> to vector<32x32xf32>
    %67 = arith.addf %65, %66 : vector<32x32xf32>
    %cst_48 = arith.constant 0.000000e+00 : f32
    %68 = vector.broadcast %cst_48 : f32 to vector<32x32xf32>
    %69 = arith.maximumf %67, %68 : vector<32x32xf32>
    %70 = arith.truncf %69 : vector<32x32xf32> to vector<32x32xbf16>
    %cst_49 = arith.constant dense<0.000000e+00> : vector<32x8xf32>
    %71 = tpu.matmul %70, %9, %cst_49 {dimension_numbers = #tpu.dot_dimension_numbers<[1], [0], [0], [1], [0, 0, 1, 1], [], []>} : vector<32x32xbf16>, vector<32x8xbf16>, vector<32x8xf32> -> vector<32x8xf32>
    %72 = vector.broadcast %12 : vector<1x8xf32> to vector<32x8xf32>
    %73 = arith.addf %71, %72 : vector<32x8xf32>
    %74 = math.tanh %73 : vector<32x8xf32>
    %c0_50 = arith.constant 0 : index
    %c2 = arith.constant 2 : index
    %c0_51 = arith.constant 0 : index
    %c0_52 = arith.constant 0 : index
    %75 = vector.load %arg6[%c0_50, %c2, %c0_51, %c0_52] : memref<1x4x64x32xf32, #tpu.memory_space<vmem>>, vector<1x1x64x32xf32>
    %76 = vector.shape_cast %75 : vector<1x1x64x32xf32> to vector<64x32xf32>
    %77 = arith.truncf %76 : vector<64x32xf32> to vector<64x32xbf16>
    %cst_53 = arith.constant dense<0.000000e+00> : vector<32x32xf32>
    %78 = tpu.matmul %48, %77, %cst_53 {dimension_numbers = #tpu.dot_dimension_numbers<[1], [0], [0], [1], [0, 0, 1, 1], [], []>} : vector<32x64xbf16>, vector<64x32xbf16>, vector<32x32xf32> -> vector<32x32xf32>
    %79 = vector.broadcast %6 : vector<1x32xf32> to vector<32x32xf32>
    %80 = arith.addf %78, %79 : vector<32x32xf32>
    %cst_54 = arith.constant 0.000000e+00 : f32
    %81 = vector.broadcast %cst_54 : f32 to vector<32x32xf32>
    %82 = arith.maximumf %80, %81 : vector<32x32xf32>
    %83 = arith.truncf %82 : vector<32x32xf32> to vector<32x32xbf16>
    %cst_55 = arith.constant dense<0.000000e+00> : vector<32x8xf32>
    %84 = tpu.matmul %83, %9, %cst_55 {dimension_numbers = #tpu.dot_dimension_numbers<[1], [0], [0], [1], [0, 0, 1, 1], [], []>} : vector<32x32xbf16>, vector<32x8xbf16>, vector<32x8xf32> -> vector<32x8xf32>
    %85 = vector.broadcast %12 : vector<1x8xf32> to vector<32x8xf32>
    %86 = arith.addf %84, %85 : vector<32x8xf32>
    %87 = math.tanh %86 : vector<32x8xf32>
    %c0_56 = arith.constant 0 : index
    %c3 = arith.constant 3 : index
    %c0_57 = arith.constant 0 : index
    %c0_58 = arith.constant 0 : index
    %88 = vector.load %arg6[%c0_56, %c3, %c0_57, %c0_58] : memref<1x4x64x32xf32, #tpu.memory_space<vmem>>, vector<1x1x64x32xf32>
    %89 = vector.shape_cast %88 : vector<1x1x64x32xf32> to vector<64x32xf32>
    %90 = arith.truncf %89 : vector<64x32xf32> to vector<64x32xbf16>
    %cst_59 = arith.constant dense<0.000000e+00> : vector<32x32xf32>
    %91 = tpu.matmul %48, %90, %cst_59 {dimension_numbers = #tpu.dot_dimension_numbers<[1], [0], [0], [1], [0, 0, 1, 1], [], []>} : vector<32x64xbf16>, vector<64x32xbf16>, vector<32x32xf32> -> vector<32x32xf32>
    %92 = vector.broadcast %6 : vector<1x32xf32> to vector<32x32xf32>
    %93 = arith.addf %91, %92 : vector<32x32xf32>
    %cst_60 = arith.constant 0.000000e+00 : f32
    %94 = vector.broadcast %cst_60 : f32 to vector<32x32xf32>
    %95 = arith.maximumf %93, %94 : vector<32x32xf32>
    %96 = arith.truncf %95 : vector<32x32xf32> to vector<32x32xbf16>
    %cst_61 = arith.constant dense<0.000000e+00> : vector<32x8xf32>
    %97 = tpu.matmul %96, %9, %cst_61 {dimension_numbers = #tpu.dot_dimension_numbers<[1], [0], [0], [1], [0, 0, 1, 1], [], []>} : vector<32x32xbf16>, vector<32x8xbf16>, vector<32x8xf32> -> vector<32x8xf32>
    %98 = vector.broadcast %12 : vector<1x8xf32> to vector<32x8xf32>
    %99 = arith.addf %97, %98 : vector<32x8xf32>
    %100 = math.tanh %99 : vector<32x8xf32>
    %c0_62 = arith.constant 0 : index
    %c0_63 = arith.constant 0 : index
    %c0_64 = arith.constant 0 : index
    %c0_65 = arith.constant 0 : index
    %101 = vector.load %arg3[%c0_62, %c0_63, %c0_64, %c0_65] : memref<1x4x32x8xf32, #tpu.memory_space<vmem>>, vector<1x1x32x8xf32>
    %102 = vector.shape_cast %101 : vector<1x1x32x8xf32> to vector<32x8xf32>
    %c0_66 = arith.constant 0 : index
    %c1_67 = arith.constant 1 : index
    %c0_68 = arith.constant 0 : index
    %c0_69 = arith.constant 0 : index
    %103 = vector.load %arg3[%c0_66, %c1_67, %c0_68, %c0_69] : memref<1x4x32x8xf32, #tpu.memory_space<vmem>>, vector<1x1x32x8xf32>
    %104 = vector.shape_cast %103 : vector<1x1x32x8xf32> to vector<32x8xf32>
    %c0_70 = arith.constant 0 : index
    %c2_71 = arith.constant 2 : index
    %c0_72 = arith.constant 0 : index
    %c0_73 = arith.constant 0 : index
    %105 = vector.load %arg3[%c0_70, %c2_71, %c0_72, %c0_73] : memref<1x4x32x8xf32, #tpu.memory_space<vmem>>, vector<1x1x32x8xf32>
    %106 = vector.shape_cast %105 : vector<1x1x32x8xf32> to vector<32x8xf32>
    %c0_74 = arith.constant 0 : index
    %c3_75 = arith.constant 3 : index
    %c0_76 = arith.constant 0 : index
    %c0_77 = arith.constant 0 : index
    %107 = vector.load %arg3[%c0_74, %c3_75, %c0_76, %c0_77] : memref<1x4x32x8xf32, #tpu.memory_space<vmem>>, vector<1x1x32x8xf32>
    %108 = vector.shape_cast %107 : vector<1x1x32x8xf32> to vector<32x8xf32>
    %109 = arith.truncf %102 : vector<32x8xf32> to vector<32x8xbf16>
    %cst_78 = arith.constant dense<0.000000e+00> : vector<32x32xf32>
    %110 = tpu.matmul %109, %15, %cst_78 {dimension_numbers = #tpu.dot_dimension_numbers<[1], [0], [0], [1], [0, 0, 1, 1], [], []>} : vector<32x8xbf16>, vector<8x32xbf16>, vector<32x32xf32> -> vector<32x32xf32>
    %111 = vector.broadcast %17 : vector<1x32xf32> to vector<32x32xf32>
    %112 = arith.addf %110, %111 : vector<32x32xf32>
    %cst_79 = arith.constant 0.000000e+00 : f32
    %113 = vector.broadcast %cst_79 : f32 to vector<32x32xf32>
    %114 = arith.cmpf ogt, %112, %113 : vector<32x32xf32>
    %cst_80 = arith.constant 2.000000e-01 : f32
    %115 = vector.broadcast %cst_80 : f32 to vector<32x32xf32>
    %116 = arith.mulf %115, %112 : vector<32x32xf32>
    %117 = arith.select %114, %112, %116 : vector<32x32xi1>, vector<32x32xf32>
    %118 = arith.truncf %104 : vector<32x8xf32> to vector<32x8xbf16>
    %cst_81 = arith.constant dense<0.000000e+00> : vector<32x32xf32>
    %119 = tpu.matmul %118, %15, %cst_81 {dimension_numbers = #tpu.dot_dimension_numbers<[1], [0], [0], [1], [0, 0, 1, 1], [], []>} : vector<32x8xbf16>, vector<8x32xbf16>, vector<32x32xf32> -> vector<32x32xf32>
    %120 = vector.broadcast %17 : vector<1x32xf32> to vector<32x32xf32>
    %121 = arith.addf %119, %120 : vector<32x32xf32>
    %cst_82 = arith.constant 0.000000e+00 : f32
    %122 = vector.broadcast %cst_82 : f32 to vector<32x32xf32>
    %123 = arith.cmpf ogt, %121, %122 : vector<32x32xf32>
    %cst_83 = arith.constant 2.000000e-01 : f32
    %124 = vector.broadcast %cst_83 : f32 to vector<32x32xf32>
    %125 = arith.mulf %124, %121 : vector<32x32xf32>
    %126 = arith.select %123, %121, %125 : vector<32x32xi1>, vector<32x32xf32>
    %127 = arith.truncf %106 : vector<32x8xf32> to vector<32x8xbf16>
    %cst_84 = arith.constant dense<0.000000e+00> : vector<32x32xf32>
    %128 = tpu.matmul %127, %15, %cst_84 {dimension_numbers = #tpu.dot_dimension_numbers<[1], [0], [0], [1], [0, 0, 1, 1], [], []>} : vector<32x8xbf16>, vector<8x32xbf16>, vector<32x32xf32> -> vector<32x32xf32>
    %129 = vector.broadcast %17 : vector<1x32xf32> to vector<32x32xf32>
    %130 = arith.addf %128, %129 : vector<32x32xf32>
    %cst_85 = arith.constant 0.000000e+00 : f32
    %131 = vector.broadcast %cst_85 : f32 to vector<32x32xf32>
    %132 = arith.cmpf ogt, %130, %131 : vector<32x32xf32>
    %cst_86 = arith.constant 2.000000e-01 : f32
    %133 = vector.broadcast %cst_86 : f32 to vector<32x32xf32>
    %134 = arith.mulf %133, %130 : vector<32x32xf32>
    %135 = arith.select %132, %130, %134 : vector<32x32xi1>, vector<32x32xf32>
    %136 = arith.truncf %108 : vector<32x8xf32> to vector<32x8xbf16>
    %cst_87 = arith.constant dense<0.000000e+00> : vector<32x32xf32>
    %137 = tpu.matmul %136, %15, %cst_87 {dimension_numbers = #tpu.dot_dimension_numbers<[1], [0], [0], [1], [0, 0, 1, 1], [], []>} : vector<32x8xbf16>, vector<8x32xbf16>, vector<32x32xf32> -> vector<32x32xf32>
    %138 = vector.broadcast %17 : vector<1x32xf32> to vector<32x32xf32>
    %139 = arith.addf %137, %138 : vector<32x32xf32>
    %cst_88 = arith.constant 0.000000e+00 : f32
    %140 = vector.broadcast %cst_88 : f32 to vector<32x32xf32>
    %141 = arith.cmpf ogt, %139, %140 : vector<32x32xf32>
    %cst_89 = arith.constant 2.000000e-01 : f32
    %142 = vector.broadcast %cst_89 : f32 to vector<32x32xf32>
    %143 = arith.mulf %142, %139 : vector<32x32xf32>
    %144 = arith.select %141, %139, %143 : vector<32x32xi1>, vector<32x32xf32>
    %145 = tpu.concatenate %117, %126, %135, %144 in 1 : vector<32x32xf32>, vector<32x32xf32>, vector<32x32xf32>, vector<32x32xf32> -> vector<32x128xf32>
    %146 = arith.truncf %145 : vector<32x128xf32> to vector<32x128xbf16>
    %cst_90 = arith.constant dense<0.000000e+00> : vector<32x64xf32>
    %147 = tpu.matmul %146, %20, %cst_90 {dimension_numbers = #tpu.dot_dimension_numbers<[1], [0], [0], [1], [0, 0, 1, 1], [], []>} : vector<32x128xbf16>, vector<128x64xbf16>, vector<32x64xf32> -> vector<32x64xf32>
    %148 = vector.broadcast %22 : vector<1x64xf32> to vector<32x64xf32>
    %149 = arith.addf %147, %148 : vector<32x64xf32>
    %cst_91 = arith.constant 0.000000e+00 : f32
    %150 = vector.broadcast %cst_91 : f32 to vector<32x64xf32>
    %151 = arith.cmpf ogt, %149, %150 : vector<32x64xf32>
    %cst_92 = arith.constant 2.000000e-01 : f32
    %152 = vector.broadcast %cst_92 : f32 to vector<32x64xf32>
    %153 = arith.mulf %152, %149 : vector<32x64xf32>
    %154 = arith.select %151, %149, %153 : vector<32x64xi1>, vector<32x64xf32>
    %155 = arith.mulf %154, %28 : vector<32x64xf32>
    %cst_93 = arith.constant dense<0.000000e+00> : vector<2x64xf32>
    %156 = tpu.matmul %41, %155, %cst_93 {dimension_numbers = #tpu.dot_dimension_numbers<[1], [0], [0], [1], [0, 0, 1, 1], [], []>} : vector<2x32xf32>, vector<32x64xf32>, vector<2x64xf32> -> vector<2x64xf32>
    %cst_94 = arith.constant dense<0.000000e+00> : vector<2xf32>
    %157 = vector.multi_reduction <add>, %156, %cst_94 [1] : vector<2x64xf32> to vector<2xf32>
    %158 = vector.shape_cast %157 : vector<2xf32> to vector<2x1xf32>
    %159 = vector.broadcast %26 : vector<1x1xf32> to vector<2x1xf32>
    %160 = arith.addf %158, %159 : vector<2x1xf32>
    %161 = arith.truncf %61 : vector<32x8xf32> to vector<32x8xbf16>
    %cst_95 = arith.constant dense<0.000000e+00> : vector<32x32xf32>
    %162 = tpu.matmul %161, %15, %cst_95 {dimension_numbers = #tpu.dot_dimension_numbers<[1], [0], [0], [1], [0, 0, 1, 1], [], []>} : vector<32x8xbf16>, vector<8x32xbf16>, vector<32x32xf32> -> vector<32x32xf32>
    %163 = vector.broadcast %17 : vector<1x32xf32> to vector<32x32xf32>
    %164 = arith.addf %162, %163 : vector<32x32xf32>
    %cst_96 = arith.constant 0.000000e+00 : f32
    %165 = vector.broadcast %cst_96 : f32 to vector<32x32xf32>
    %166 = arith.cmpf ogt, %164, %165 : vector<32x32xf32>
    %cst_97 = arith.constant 2.000000e-01 : f32
    %167 = vector.broadcast %cst_97 : f32 to vector<32x32xf32>
    %168 = arith.mulf %167, %164 : vector<32x32xf32>
    %169 = arith.select %166, %164, %168 : vector<32x32xi1>, vector<32x32xf32>
    %170 = arith.truncf %74 : vector<32x8xf32> to vector<32x8xbf16>
    %cst_98 = arith.constant dense<0.000000e+00> : vector<32x32xf32>
    %171 = tpu.matmul %170, %15, %cst_98 {dimension_numbers = #tpu.dot_dimension_numbers<[1], [0], [0], [1], [0, 0, 1, 1], [], []>} : vector<32x8xbf16>, vector<8x32xbf16>, vector<32x32xf32> -> vector<32x32xf32>
    %172 = vector.broadcast %17 : vector<1x32xf32> to vector<32x32xf32>
    %173 = arith.addf %171, %172 : vector<32x32xf32>
    %cst_99 = arith.constant 0.000000e+00 : f32
    %174 = vector.broadcast %cst_99 : f32 to vector<32x32xf32>
    %175 = arith.cmpf ogt, %173, %174 : vector<32x32xf32>
    %cst_100 = arith.constant 2.000000e-01 : f32
    %176 = vector.broadcast %cst_100 : f32 to vector<32x32xf32>
    %177 = arith.mulf %176, %173 : vector<32x32xf32>
    %178 = arith.select %175, %173, %177 : vector<32x32xi1>, vector<32x32xf32>
    %179 = arith.truncf %87 : vector<32x8xf32> to vector<32x8xbf16>
    %cst_101 = arith.constant dense<0.000000e+00> : vector<32x32xf32>
    %180 = tpu.matmul %179, %15, %cst_101 {dimension_numbers = #tpu.dot_dimension_numbers<[1], [0], [0], [1], [0, 0, 1, 1], [], []>} : vector<32x8xbf16>, vector<8x32xbf16>, vector<32x32xf32> -> vector<32x32xf32>
    %181 = vector.broadcast %17 : vector<1x32xf32> to vector<32x32xf32>
    %182 = arith.addf %180, %181 : vector<32x32xf32>
    %cst_102 = arith.constant 0.000000e+00 : f32
    %183 = vector.broadcast %cst_102 : f32 to vector<32x32xf32>
    %184 = arith.cmpf ogt, %182, %183 : vector<32x32xf32>
    %cst_103 = arith.constant 2.000000e-01 : f32
    %185 = vector.broadcast %cst_103 : f32 to vector<32x32xf32>
    %186 = arith.mulf %185, %182 : vector<32x32xf32>
    %187 = arith.select %184, %182, %186 : vector<32x32xi1>, vector<32x32xf32>
    %188 = arith.truncf %100 : vector<32x8xf32> to vector<32x8xbf16>
    %cst_104 = arith.constant dense<0.000000e+00> : vector<32x32xf32>
    %189 = tpu.matmul %188, %15, %cst_104 {dimension_numbers = #tpu.dot_dimension_numbers<[1], [0], [0], [1], [0, 0, 1, 1], [], []>} : vector<32x8xbf16>, vector<8x32xbf16>, vector<32x32xf32> -> vector<32x32xf32>
    %190 = vector.broadcast %17 : vector<1x32xf32> to vector<32x32xf32>
    %191 = arith.addf %189, %190 : vector<32x32xf32>
    %cst_105 = arith.constant 0.000000e+00 : f32
    %192 = vector.broadcast %cst_105 : f32 to vector<32x32xf32>
    %193 = arith.cmpf ogt, %191, %192 : vector<32x32xf32>
    %cst_106 = arith.constant 2.000000e-01 : f32
    %194 = vector.broadcast %cst_106 : f32 to vector<32x32xf32>
    %195 = arith.mulf %194, %191 : vector<32x32xf32>
    %196 = arith.select %193, %191, %195 : vector<32x32xi1>, vector<32x32xf32>
    %197 = tpu.concatenate %169, %178, %187, %196 in 1 : vector<32x32xf32>, vector<32x32xf32>, vector<32x32xf32>, vector<32x32xf32> -> vector<32x128xf32>
    %198 = arith.truncf %197 : vector<32x128xf32> to vector<32x128xbf16>
    %cst_107 = arith.constant dense<0.000000e+00> : vector<32x64xf32>
    %199 = tpu.matmul %198, %20, %cst_107 {dimension_numbers = #tpu.dot_dimension_numbers<[1], [0], [0], [1], [0, 0, 1, 1], [], []>} : vector<32x128xbf16>, vector<128x64xbf16>, vector<32x64xf32> -> vector<32x64xf32>
    %200 = vector.broadcast %22 : vector<1x64xf32> to vector<32x64xf32>
    %201 = arith.addf %199, %200 : vector<32x64xf32>
    %cst_108 = arith.constant 0.000000e+00 : f32
    %202 = vector.broadcast %cst_108 : f32 to vector<32x64xf32>
    %203 = arith.cmpf ogt, %201, %202 : vector<32x64xf32>
    %cst_109 = arith.constant 2.000000e-01 : f32
    %204 = vector.broadcast %cst_109 : f32 to vector<32x64xf32>
    %205 = arith.mulf %204, %201 : vector<32x64xf32>
    %206 = arith.select %203, %201, %205 : vector<32x64xi1>, vector<32x64xf32>
    %207 = arith.mulf %206, %28 : vector<32x64xf32>
    %cst_110 = arith.constant dense<0.000000e+00> : vector<2x64xf32>
    %208 = tpu.matmul %41, %207, %cst_110 {dimension_numbers = #tpu.dot_dimension_numbers<[1], [0], [0], [1], [0, 0, 1, 1], [], []>} : vector<2x32xf32>, vector<32x64xf32>, vector<2x64xf32> -> vector<2x64xf32>
    %cst_111 = arith.constant dense<0.000000e+00> : vector<2xf32>
    %209 = vector.multi_reduction <add>, %208, %cst_111 [1] : vector<2x64xf32> to vector<2xf32>
    %210 = vector.shape_cast %209 : vector<2xf32> to vector<2x1xf32>
    %211 = vector.broadcast %26 : vector<1x1xf32> to vector<2x1xf32>
    %212 = arith.addf %210, %211 : vector<2x1xf32>
    %cst_112 = arith.constant 0.000000e+00 : f32
    %213 = vector.broadcast %cst_112 : f32 to vector<2x1xf32>
    %214 = arith.subf %213, %160 : vector<2x1xf32>
    %cst_113 = arith.constant 0.000000e+00 : f32
    %215 = vector.broadcast %cst_113 : f32 to vector<2x1xf32>
    %216 = arith.maximumf %214, %215 : vector<2x1xf32>
    %217 = math.absf %214 : vector<2x1xf32>
    %cst_114 = arith.constant 0.000000e+00 : f32
    %218 = vector.broadcast %cst_114 : f32 to vector<2x1xf32>
    %219 = arith.subf %218, %217 : vector<2x1xf32>
    %220 = math.exp %219 : vector<2x1xf32>
    %cst_115 = arith.constant 1.000000e+00 : f32
    %221 = vector.broadcast %cst_115 : f32 to vector<2x1xf32>
    %222 = arith.addf %221, %220 : vector<2x1xf32>
    %223 = math.log %222 : vector<2x1xf32>
    %224 = arith.addf %216, %223 : vector<2x1xf32>
    %cst_116 = arith.constant 0.000000e+00 : f32
    %225 = vector.broadcast %cst_116 : f32 to vector<2x1xf32>
    %226 = arith.maximumf %212, %225 : vector<2x1xf32>
    %227 = math.absf %212 : vector<2x1xf32>
    %cst_117 = arith.constant 0.000000e+00 : f32
    %228 = vector.broadcast %cst_117 : f32 to vector<2x1xf32>
    %229 = arith.subf %228, %227 : vector<2x1xf32>
    %230 = math.exp %229 : vector<2x1xf32>
    %cst_118 = arith.constant 1.000000e+00 : f32
    %231 = vector.broadcast %cst_118 : f32 to vector<2x1xf32>
    %232 = arith.addf %231, %230 : vector<2x1xf32>
    %233 = math.log %232 : vector<2x1xf32>
    %234 = arith.addf %226, %233 : vector<2x1xf32>
    %235 = arith.addf %224, %234 : vector<2x1xf32>
    %236 = vector.shape_cast %235 : vector<2x1xf32> to vector<1x2x1xf32>
    %cst_119 = arith.constant dense<0.000000e+00> : vector<1xf32>
    %237 = vector.multi_reduction <add>, %236, %cst_119 [1, 2] : vector<1x2x1xf32> to vector<1xf32>
    %238 = vector.shape_cast %237 : vector<1xf32> to vector<1x1x1xf32>
    %239 = vector.extract %238[0, 0, 0] : f32 from vector<1x1x1xf32>
    %cst_120 = arith.constant 2.000000e+00 : f32
    %240 = arith.divf %239, %cst_120 : f32
    %c0_121 = arith.constant 0 : index
    %c0_122 = arith.constant 0 : index
    %241 = vector.load %arg2[%c0_121, %c0_122] : memref<32x512xf32, #tpu.memory_space<vmem>>, vector<32x512xf32>
    %242 = arith.truncf %241 : vector<32x512xf32> to vector<32x512xbf16>
    %cst_123 = arith.constant dense<0.000000e+00> : vector<32x64xf32>
    %243 = tpu.matmul %242, %2, %cst_123 {dimension_numbers = #tpu.dot_dimension_numbers<[1], [0], [0], [1], [0, 0, 1, 1], [], []>} : vector<32x512xbf16>, vector<512x64xbf16>, vector<32x64xf32> -> vector<32x64xf32>
    %244 = arith.addf %243, %27 : vector<32x64xf32>
    %cst_124 = arith.constant 0.000000e+00 : f32
    %245 = vector.broadcast %cst_124 : f32 to vector<32x64xf32>
    %246 = arith.maximumf %244, %245 : vector<32x64xf32>
    %247 = arith.truncf %246 : vector<32x64xf32> to vector<32x64xbf16>
    %c0_125 = arith.constant 0 : index
    %c0_126 = arith.constant 0 : index
    %c0_127 = arith.constant 0 : index
    %c0_128 = arith.constant 0 : index
    %248 = vector.load %arg6[%c0_125, %c0_126, %c0_127, %c0_128] : memref<1x4x64x32xf32, #tpu.memory_space<vmem>>, vector<1x1x64x32xf32>
    %249 = vector.shape_cast %248 : vector<1x1x64x32xf32> to vector<64x32xf32>
    %250 = arith.truncf %249 : vector<64x32xf32> to vector<64x32xbf16>
    %cst_129 = arith.constant dense<0.000000e+00> : vector<32x32xf32>
    %251 = tpu.matmul %247, %250, %cst_129 {dimension_numbers = #tpu.dot_dimension_numbers<[1], [0], [0], [1], [0, 0, 1, 1], [], []>} : vector<32x64xbf16>, vector<64x32xbf16>, vector<32x32xf32> -> vector<32x32xf32>
    %252 = vector.broadcast %6 : vector<1x32xf32> to vector<32x32xf32>
    %253 = arith.addf %251, %252 : vector<32x32xf32>
    %cst_130 = arith.constant 0.000000e+00 : f32
    %254 = vector.broadcast %cst_130 : f32 to vector<32x32xf32>
    %255 = arith.maximumf %253, %254 : vector<32x32xf32>
    %256 = arith.truncf %255 : vector<32x32xf32> to vector<32x32xbf16>
    %cst_131 = arith.constant dense<0.000000e+00> : vector<32x8xf32>
    %257 = tpu.matmul %256, %9, %cst_131 {dimension_numbers = #tpu.dot_dimension_numbers<[1], [0], [0], [1], [0, 0, 1, 1], [], []>} : vector<32x32xbf16>, vector<32x8xbf16>, vector<32x8xf32> -> vector<32x8xf32>
    %258 = vector.broadcast %12 : vector<1x8xf32> to vector<32x8xf32>
    %259 = arith.addf %257, %258 : vector<32x8xf32>
    %260 = math.tanh %259 : vector<32x8xf32>
    %c0_132 = arith.constant 0 : index
    %c1_133 = arith.constant 1 : index
    %c0_134 = arith.constant 0 : index
    %c0_135 = arith.constant 0 : index
    %261 = vector.load %arg6[%c0_132, %c1_133, %c0_134, %c0_135] : memref<1x4x64x32xf32, #tpu.memory_space<vmem>>, vector<1x1x64x32xf32>
    %262 = vector.shape_cast %261 : vector<1x1x64x32xf32> to vector<64x32xf32>
    %263 = arith.truncf %262 : vector<64x32xf32> to vector<64x32xbf16>
    %cst_136 = arith.constant dense<0.000000e+00> : vector<32x32xf32>
    %264 = tpu.matmul %247, %263, %cst_136 {dimension_numbers = #tpu.dot_dimension_numbers<[1], [0], [0], [1], [0, 0, 1, 1], [], []>} : vector<32x64xbf16>, vector<64x32xbf16>, vector<32x32xf32> -> vector<32x32xf32>
    %265 = vector.broadcast %6 : vector<1x32xf32> to vector<32x32xf32>
    %266 = arith.addf %264, %265 : vector<32x32xf32>
    %cst_137 = arith.constant 0.000000e+00 : f32
    %267 = vector.broadcast %cst_137 : f32 to vector<32x32xf32>
    %268 = arith.maximumf %266, %267 : vector<32x32xf32>
    %269 = arith.truncf %268 : vector<32x32xf32> to vector<32x32xbf16>
    %cst_138 = arith.constant dense<0.000000e+00> : vector<32x8xf32>
    %270 = tpu.matmul %269, %9, %cst_138 {dimension_numbers = #tpu.dot_dimension_numbers<[1], [0], [0], [1], [0, 0, 1, 1], [], []>} : vector<32x32xbf16>, vector<32x8xbf16>, vector<32x8xf32> -> vector<32x8xf32>
    %271 = vector.broadcast %12 : vector<1x8xf32> to vector<32x8xf32>
    %272 = arith.addf %270, %271 : vector<32x8xf32>
    %273 = math.tanh %272 : vector<32x8xf32>
    %c0_139 = arith.constant 0 : index
    %c2_140 = arith.constant 2 : index
    %c0_141 = arith.constant 0 : index
    %c0_142 = arith.constant 0 : index
    %274 = vector.load %arg6[%c0_139, %c2_140, %c0_141, %c0_142] : memref<1x4x64x32xf32, #tpu.memory_space<vmem>>, vector<1x1x64x32xf32>
    %275 = vector.shape_cast %274 : vector<1x1x64x32xf32> to vector<64x32xf32>
    %276 = arith.truncf %275 : vector<64x32xf32> to vector<64x32xbf16>
    %cst_143 = arith.constant dense<0.000000e+00> : vector<32x32xf32>
    %277 = tpu.matmul %247, %276, %cst_143 {dimension_numbers = #tpu.dot_dimension_numbers<[1], [0], [0], [1], [0, 0, 1, 1], [], []>} : vector<32x64xbf16>, vector<64x32xbf16>, vector<32x32xf32> -> vector<32x32xf32>
    %278 = vector.broadcast %6 : vector<1x32xf32> to vector<32x32xf32>
    %279 = arith.addf %277, %278 : vector<32x32xf32>
    %cst_144 = arith.constant 0.000000e+00 : f32
    %280 = vector.broadcast %cst_144 : f32 to vector<32x32xf32>
    %281 = arith.maximumf %279, %280 : vector<32x32xf32>
    %282 = arith.truncf %281 : vector<32x32xf32> to vector<32x32xbf16>
    %cst_145 = arith.constant dense<0.000000e+00> : vector<32x8xf32>
    %283 = tpu.matmul %282, %9, %cst_145 {dimension_numbers = #tpu.dot_dimension_numbers<[1], [0], [0], [1], [0, 0, 1, 1], [], []>} : vector<32x32xbf16>, vector<32x8xbf16>, vector<32x8xf32> -> vector<32x8xf32>
    %284 = vector.broadcast %12 : vector<1x8xf32> to vector<32x8xf32>
    %285 = arith.addf %283, %284 : vector<32x8xf32>
    %286 = math.tanh %285 : vector<32x8xf32>
    %c0_146 = arith.constant 0 : index
    %c3_147 = arith.constant 3 : index
    %c0_148 = arith.constant 0 : index
    %c0_149 = arith.constant 0 : index
    %287 = vector.load %arg6[%c0_146, %c3_147, %c0_148, %c0_149] : memref<1x4x64x32xf32, #tpu.memory_space<vmem>>, vector<1x1x64x32xf32>
    %288 = vector.shape_cast %287 : vector<1x1x64x32xf32> to vector<64x32xf32>
    %289 = arith.truncf %288 : vector<64x32xf32> to vector<64x32xbf16>
    %cst_150 = arith.constant dense<0.000000e+00> : vector<32x32xf32>
    %290 = tpu.matmul %247, %289, %cst_150 {dimension_numbers = #tpu.dot_dimension_numbers<[1], [0], [0], [1], [0, 0, 1, 1], [], []>} : vector<32x64xbf16>, vector<64x32xbf16>, vector<32x32xf32> -> vector<32x32xf32>
    %291 = vector.broadcast %6 : vector<1x32xf32> to vector<32x32xf32>
    %292 = arith.addf %290, %291 : vector<32x32xf32>
    %cst_151 = arith.constant 0.000000e+00 : f32
    %293 = vector.broadcast %cst_151 : f32 to vector<32x32xf32>
    %294 = arith.maximumf %292, %293 : vector<32x32xf32>
    %295 = arith.truncf %294 : vector<32x32xf32> to vector<32x32xbf16>
    %cst_152 = arith.constant dense<0.000000e+00> : vector<32x8xf32>
    %296 = tpu.matmul %295, %9, %cst_152 {dimension_numbers = #tpu.dot_dimension_numbers<[1], [0], [0], [1], [0, 0, 1, 1], [], []>} : vector<32x32xbf16>, vector<32x8xbf16>, vector<32x8xf32> -> vector<32x8xf32>
    %297 = vector.broadcast %12 : vector<1x8xf32> to vector<32x8xf32>
    %298 = arith.addf %296, %297 : vector<32x8xf32>
    %299 = math.tanh %298 : vector<32x8xf32>
    %300 = arith.truncf %260 : vector<32x8xf32> to vector<32x8xbf16>
    %cst_153 = arith.constant dense<0.000000e+00> : vector<32x32xf32>
    %301 = tpu.matmul %300, %15, %cst_153 {dimension_numbers = #tpu.dot_dimension_numbers<[1], [0], [0], [1], [0, 0, 1, 1], [], []>} : vector<32x8xbf16>, vector<8x32xbf16>, vector<32x32xf32> -> vector<32x32xf32>
    %302 = vector.broadcast %17 : vector<1x32xf32> to vector<32x32xf32>
    %303 = arith.addf %301, %302 : vector<32x32xf32>
    %cst_154 = arith.constant 0.000000e+00 : f32
    %304 = vector.broadcast %cst_154 : f32 to vector<32x32xf32>
    %305 = arith.cmpf ogt, %303, %304 : vector<32x32xf32>
    %cst_155 = arith.constant 2.000000e-01 : f32
    %306 = vector.broadcast %cst_155 : f32 to vector<32x32xf32>
    %307 = arith.mulf %306, %303 : vector<32x32xf32>
    %308 = arith.select %305, %303, %307 : vector<32x32xi1>, vector<32x32xf32>
    %309 = arith.truncf %273 : vector<32x8xf32> to vector<32x8xbf16>
    %cst_156 = arith.constant dense<0.000000e+00> : vector<32x32xf32>
    %310 = tpu.matmul %309, %15, %cst_156 {dimension_numbers = #tpu.dot_dimension_numbers<[1], [0], [0], [1], [0, 0, 1, 1], [], []>} : vector<32x8xbf16>, vector<8x32xbf16>, vector<32x32xf32> -> vector<32x32xf32>
    %311 = vector.broadcast %17 : vector<1x32xf32> to vector<32x32xf32>
    %312 = arith.addf %310, %311 : vector<32x32xf32>
    %cst_157 = arith.constant 0.000000e+00 : f32
    %313 = vector.broadcast %cst_157 : f32 to vector<32x32xf32>
    %314 = arith.cmpf ogt, %312, %313 : vector<32x32xf32>
    %cst_158 = arith.constant 2.000000e-01 : f32
    %315 = vector.broadcast %cst_158 : f32 to vector<32x32xf32>
    %316 = arith.mulf %315, %312 : vector<32x32xf32>
    %317 = arith.select %314, %312, %316 : vector<32x32xi1>, vector<32x32xf32>
    %318 = arith.truncf %286 : vector<32x8xf32> to vector<32x8xbf16>
    %cst_159 = arith.constant dense<0.000000e+00> : vector<32x32xf32>
    %319 = tpu.matmul %318, %15, %cst_159 {dimension_numbers = #tpu.dot_dimension_numbers<[1], [0], [0], [1], [0, 0, 1, 1], [], []>} : vector<32x8xbf16>, vector<8x32xbf16>, vector<32x32xf32> -> vector<32x32xf32>
    %320 = vector.broadcast %17 : vector<1x32xf32> to vector<32x32xf32>
    %321 = arith.addf %319, %320 : vector<32x32xf32>
    %cst_160 = arith.constant 0.000000e+00 : f32
    %322 = vector.broadcast %cst_160 : f32 to vector<32x32xf32>
    %323 = arith.cmpf ogt, %321, %322 : vector<32x32xf32>
    %cst_161 = arith.constant 2.000000e-01 : f32
    %324 = vector.broadcast %cst_161 : f32 to vector<32x32xf32>
    %325 = arith.mulf %324, %321 : vector<32x32xf32>
    %326 = arith.select %323, %321, %325 : vector<32x32xi1>, vector<32x32xf32>
    %327 = arith.truncf %299 : vector<32x8xf32> to vector<32x8xbf16>
    %cst_162 = arith.constant dense<0.000000e+00> : vector<32x32xf32>
    %328 = tpu.matmul %327, %15, %cst_162 {dimension_numbers = #tpu.dot_dimension_numbers<[1], [0], [0], [1], [0, 0, 1, 1], [], []>} : vector<32x8xbf16>, vector<8x32xbf16>, vector<32x32xf32> -> vector<32x32xf32>
    %329 = vector.broadcast %17 : vector<1x32xf32> to vector<32x32xf32>
    %330 = arith.addf %328, %329 : vector<32x32xf32>
    %cst_163 = arith.constant 0.000000e+00 : f32
    %331 = vector.broadcast %cst_163 : f32 to vector<32x32xf32>
    %332 = arith.cmpf ogt, %330, %331 : vector<32x32xf32>
    %cst_164 = arith.constant 2.000000e-01 : f32
    %333 = vector.broadcast %cst_164 : f32 to vector<32x32xf32>
    %334 = arith.mulf %333, %330 : vector<32x32xf32>
    %335 = arith.select %332, %330, %334 : vector<32x32xi1>, vector<32x32xf32>
    %336 = tpu.concatenate %308, %317, %326, %335 in 1 : vector<32x32xf32>, vector<32x32xf32>, vector<32x32xf32>, vector<32x32xf32> -> vector<32x128xf32>
    %337 = arith.truncf %336 : vector<32x128xf32> to vector<32x128xbf16>
    %cst_165 = arith.constant dense<0.000000e+00> : vector<32x64xf32>
    %338 = tpu.matmul %337, %20, %cst_165 {dimension_numbers = #tpu.dot_dimension_numbers<[1], [0], [0], [1], [0, 0, 1, 1], [], []>} : vector<32x128xbf16>, vector<128x64xbf16>, vector<32x64xf32> -> vector<32x64xf32>
    %339 = vector.broadcast %22 : vector<1x64xf32> to vector<32x64xf32>
    %340 = arith.addf %338, %339 : vector<32x64xf32>
    %cst_166 = arith.constant 0.000000e+00 : f32
    %341 = vector.broadcast %cst_166 : f32 to vector<32x64xf32>
    %342 = arith.cmpf ogt, %340, %341 : vector<32x64xf32>
    %cst_167 = arith.constant 2.000000e-01 : f32
    %343 = vector.broadcast %cst_167 : f32 to vector<32x64xf32>
    %344 = arith.mulf %343, %340 : vector<32x64xf32>
    %345 = arith.select %342, %340, %344 : vector<32x64xi1>, vector<32x64xf32>
    %346 = arith.mulf %345, %28 : vector<32x64xf32>
    %cst_168 = arith.constant dense<0.000000e+00> : vector<2x64xf32>
    %347 = tpu.matmul %41, %346, %cst_168 {dimension_numbers = #tpu.dot_dimension_numbers<[1], [0], [0], [1], [0, 0, 1, 1], [], []>} : vector<2x32xf32>, vector<32x64xf32>, vector<2x64xf32> -> vector<2x64xf32>
    %cst_169 = arith.constant dense<0.000000e+00> : vector<2xf32>
    %348 = vector.multi_reduction <add>, %347, %cst_169 [1] : vector<2x64xf32> to vector<2xf32>
    %349 = vector.shape_cast %348 : vector<2xf32> to vector<2x1xf32>
    %350 = vector.broadcast %26 : vector<1x1xf32> to vector<2x1xf32>
    %351 = arith.addf %349, %350 : vector<2x1xf32>
    %cst_170 = arith.constant 0.000000e+00 : f32
    %352 = vector.broadcast %cst_170 : f32 to vector<2x1xf32>
    %353 = arith.subf %352, %351 : vector<2x1xf32>
    %cst_171 = arith.constant 0.000000e+00 : f32
    %354 = vector.broadcast %cst_171 : f32 to vector<2x1xf32>
    %355 = arith.maximumf %353, %354 : vector<2x1xf32>
    %356 = math.absf %353 : vector<2x1xf32>
    %cst_172 = arith.constant 0.000000e+00 : f32
    %357 = vector.broadcast %cst_172 : f32 to vector<2x1xf32>
    %358 = arith.subf %357, %356 : vector<2x1xf32>
    %359 = math.exp %358 : vector<2x1xf32>
    %cst_173 = arith.constant 1.000000e+00 : f32
    %360 = vector.broadcast %cst_173 : f32 to vector<2x1xf32>
    %361 = arith.addf %360, %359 : vector<2x1xf32>
    %362 = math.log %361 : vector<2x1xf32>
    %363 = arith.addf %355, %362 : vector<2x1xf32>
    %364 = vector.shape_cast %363 : vector<2x1xf32> to vector<1x2x1xf32>
    %cst_174 = arith.constant dense<0.000000e+00> : vector<1xf32>
    %365 = vector.multi_reduction <add>, %364, %cst_174 [1, 2] : vector<1x2x1xf32> to vector<1xf32>
    %366 = vector.shape_cast %365 : vector<1xf32> to vector<1x1x1xf32>
    %367 = vector.extract %366[0, 0, 0] : f32 from vector<1x1x1xf32>
    %cst_175 = arith.constant 2.000000e+00 : f32
    %368 = arith.divf %367, %cst_175 : f32
    %369 = vector.broadcast %240 : f32 to vector<1x1x128xf32>
    %c0_176 = arith.constant 0 : index
    %c0_177 = arith.constant 0 : index
    %c0_178 = arith.constant 0 : index
    %370 = vector.load %arg16[%c0_176, %c0_177, %c0_178] : memref<1x1x128xf32, #tpu.memory_space<vmem>>, vector<1x1x128xf32>
    tpu.vector_store %arg16[%c0_176, %c0_177, %c0_178], %369 {strides = array<i32>} : memref<1x1x128xf32, #tpu.memory_space<vmem>>, vector<1x1x128xf32>,
    %371 = vector.broadcast %368 : f32 to vector<1x1x128xf32>
    %c0_179 = arith.constant 0 : index
    %c0_180 = arith.constant 0 : index
    %c0_181 = arith.constant 0 : index
    %372 = vector.load %arg17[%c0_179, %c0_180, %c0_181] : memref<1x1x128xf32, #tpu.memory_space<vmem>>, vector<1x1x128xf32>
    tpu.vector_store %arg17[%c0_179, %c0_180, %c0_181], %371 {strides = array<i32>} : memref<1x1x128xf32, #tpu.memory_space<vmem>>, vector<1x1x128xf32>,
    return
  }
  func.func @transform_0(%arg0: i32) -> (i32, i32) {
    %c0_i32 = arith.constant 0 : i32
    %c0_i32_0 = arith.constant 0 : i32
    %c0_i32_1 = arith.constant 0 : i32
    return %c0_i32, %c0_i32_0 : i32, i32
  }
  func.func @transform_1(%arg0: i32) -> (i32, i32) {
    %c0_i32 = arith.constant 0 : i32
    %c0_i32_0 = arith.constant 0 : i32
    %c0_i32_1 = arith.constant 0 : i32
    return %c0_i32, %c0_i32_0 : i32, i32
  }
  func.func @transform_2(%arg0: i32) -> (i32, i32, i32, i32) {
    %c0_i32 = arith.constant 0 : i32
    %c0_i32_0 = arith.constant 0 : i32
    %c0_i32_1 = arith.constant 0 : i32
    %c0_i32_2 = arith.constant 0 : i32
    return %arg0, %c0_i32, %c0_i32_0, %c0_i32_1 : i32, i32, i32, i32
  }
  func.func @transform_3(%arg0: i32) -> (i32, i32, i32) {
    %c0_i32 = arith.constant 0 : i32
    %c0_i32_0 = arith.constant 0 : i32
    %c0_i32_1 = arith.constant 0 : i32
    return %arg0, %c0_i32, %c0_i32_0 : i32, i32, i32
  }
  func.func @transform_4(%arg0: i32) -> (i32, i32, i32) {
    %c0_i32 = arith.constant 0 : i32
    %c0_i32_0 = arith.constant 0 : i32
    %c0_i32_1 = arith.constant 0 : i32
    return %arg0, %c0_i32, %c0_i32_0 : i32, i32, i32
  }
  func.func @transform_5(%arg0: i32) -> (i32, i32, i32, i32) {
    %c0_i32 = arith.constant 0 : i32
    %c0_i32_0 = arith.constant 0 : i32
    %c0_i32_1 = arith.constant 0 : i32
    %c0_i32_2 = arith.constant 0 : i32
    return %arg0, %c0_i32, %c0_i32_0, %c0_i32_1 : i32, i32, i32, i32
  }
  func.func @transform_6(%arg0: i32) -> (i32, i32, i32) {
    %c0_i32 = arith.constant 0 : i32
    %c0_i32_0 = arith.constant 0 : i32
    %c0_i32_1 = arith.constant 0 : i32
    return %arg0, %c0_i32, %c0_i32_0 : i32, i32, i32
  }
  func.func @transform_7(%arg0: i32) -> (i32, i32, i32) {
    %c0_i32 = arith.constant 0 : i32
    %c0_i32_0 = arith.constant 0 : i32
    %c0_i32_1 = arith.constant 0 : i32
    return %arg0, %c0_i32, %c0_i32_0 : i32, i32, i32
  }
  func.func @transform_8(%arg0: i32) -> (i32, i32, i32) {
    %c0_i32 = arith.constant 0 : i32
    %c0_i32_0 = arith.constant 0 : i32
    %c0_i32_1 = arith.constant 0 : i32
    return %arg0, %c0_i32, %c0_i32_0 : i32, i32, i32
  }
  func.func @transform_9(%arg0: i32) -> (i32, i32, i32) {
    %c0_i32 = arith.constant 0 : i32
    %c0_i32_0 = arith.constant 0 : i32
    %c0_i32_1 = arith.constant 0 : i32
    return %arg0, %c0_i32, %c0_i32_0 : i32, i32, i32
  }
  func.func @transform_10(%arg0: i32) -> (i32, i32, i32) {
    %c0_i32 = arith.constant 0 : i32
    %c0_i32_0 = arith.constant 0 : i32
    %c0_i32_1 = arith.constant 0 : i32
    return %arg0, %c0_i32, %c0_i32_0 : i32, i32, i32
  }
  func.func @transform_11(%arg0: i32) -> (i32, i32, i32) {
    %c0_i32 = arith.constant 0 : i32
    %c0_i32_0 = arith.constant 0 : i32
    %c0_i32_1 = arith.constant 0 : i32
    return %arg0, %c0_i32, %c0_i32_0 : i32, i32, i32
  }
  func.func @transform_12(%arg0: i32) -> (i32, i32, i32) {
    %c0_i32 = arith.constant 0 : i32
    %c0_i32_0 = arith.constant 0 : i32
    %c0_i32_1 = arith.constant 0 : i32
    return %arg0, %c0_i32, %c0_i32_0 : i32, i32, i32
  }
  func.func @transform_13(%arg0: i32) -> (i32, i32, i32) {
    %c0_i32 = arith.constant 0 : i32
    %c0_i32_0 = arith.constant 0 : i32
    %c0_i32_1 = arith.constant 0 : i32
    return %arg0, %c0_i32, %c0_i32_0 : i32, i32, i32
  }
  func.func @transform_14(%arg0: i32) -> (i32, i32, i32) {
    %c0_i32 = arith.constant 0 : i32
    %c0_i32_0 = arith.constant 0 : i32
    %c0_i32_1 = arith.constant 0 : i32
    return %arg0, %c0_i32, %c0_i32_0 : i32, i32, i32
  }
  func.func @transform_15(%arg0: i32) -> (i32, i32, i32) {
    %c0_i32 = arith.constant 0 : i32
    %c0_i32_0 = arith.constant 0 : i32
    %c0_i32_1 = arith.constant 0 : i32
    return %arg0, %c0_i32, %c0_i32_0 : i32, i32, i32
  }
  func.func @transform_16(%arg0: i32) -> (i32, i32, i32) {
    %c0_i32 = arith.constant 0 : i32
    %c0_i32_0 = arith.constant 0 : i32
    %c0_i32_1 = arith.constant 0 : i32
    return %arg0, %c0_i32, %c0_i32_0 : i32, i32, i32
  }
}

</mosaic_0001>

<llo_original>
// kernel: biogan_ind6class_forward.3
$region0: #{biogan_ind6class_forward.3}
  #allocation0 [shape = 'u32[]', space=smem, size = 0x4, offset = 0x4, fixed_abs, tag = 'smem constant byte address 0x4 - core index']
  #allocation1 [shape = 'u32[72,128]{1,0:T(1,128)}', space=vmem, size = 0x9000, scoped, tag = 'internal scratch']
  %s0 = inlined_call_operand.vmem [shape: f32[32,512], index: 0, kind: input, shape index: {}]
  %s1 = inlined_call_operand.vmem [shape: f32[32,512], index: 1, kind: input, shape index: {}]
  %s2 = inlined_call_operand.vmem [shape: f32[6,4,32,8], index: 2, kind: input, shape index: {}]
  %s3 = inlined_call_operand.vmem [shape: f32[6,512,64], index: 3, kind: input, shape index: {}]
  %s4 = inlined_call_operand.vmem [shape: f32[6,16,64], index: 4, kind: input, shape index: {}]
  %s5 = inlined_call_operand.vmem [shape: f32[6,4,64,32], index: 5, kind: input, shape index: {}]
  %s6 = inlined_call_operand.vmem [shape: f32[6,1,32], index: 6, kind: input, shape index: {}]
  %s7 = inlined_call_operand.vmem [shape: f32[6,32,8], index: 7, kind: input, shape index: {}]
  %s8 = inlined_call_operand.vmem [shape: f32[6,1,2], index: 8, kind: input, shape index: {}]
  %s9 = inlined_call_operand.vmem [shape: f32[6,8,32], index: 9, kind: input, shape index: {}]
  %s10 = inlined_call_operand.vmem [shape: f32[6,1,32], index: 10, kind: input, shape index: {}]
  %s11 = inlined_call_operand.vmem [shape: f32[6,128,64], index: 11, kind: input, shape index: {}]
  %s12 = inlined_call_operand.vmem [shape: f32[6,1,64], index: 12, kind: input, shape index: {}]
  %s13 = inlined_call_operand.vmem [shape: f32[6,16,64], index: 13, kind: input, shape index: {}]
  %s14 = inlined_call_operand.vmem [shape: f32[6,1,1], index: 14, kind: input, shape index: {}]
  %s15 = inlined_call_operand.vmem [shape: f32[6,1,128], index: 15, kind: output, shape index: {0}]
  %s16 = inlined_call_operand.vmem [shape: f32[6,1,128], index: 16, kind: output, shape index: {1}]
  %17 = xla_tuple %s15, %s16
  %s18 = sld [smem:[#allocation0]]
  $region101: #{biogan_ind6class_forward.3} parent=0
    _
  %s20 = ssub.s32 1, %s18
  %s21 = scalar_select 0, %s20, %s18
  loop: start=0, step=1, limit=8
  $region2: #{biogan_ind6class_forward.3} parent=0 // loop_pre_header
    _
  $region3: #{biogan_ind6class_forward.3} parent=0 // loop_header
    %s23 = sphi 0, %s27
    %p24 = scmp.ge.s32.totalorder %s23, 8
    %s31 = sphi 0, %s31
    %s33 = sphi 0, %s31
    %s34 = sphi 0, %s33
    %s48 = sphi 0, %s34
    %s52 = sphi 0, %s52
    %s54 = sphi 0, %s52
    %s55 = sphi 0, %s54
    %s69 = sphi 0, %s55
    %s75 = sphi 0, %s77
    %s78 = sphi 0, %s75
    %s79 = sphi 0, %s78
    %s95 = sphi 0, %s79
    %s101 = sphi 0, %s103
    %s104 = sphi 0, %s101
    %s105 = sphi 0, %s104
    %s121 = sphi 0, %s105
    %s127 = sphi 0, %s129
    %s130 = sphi 0, %s127
    %s131 = sphi 0, %s130
    %s147 = sphi 0, %s131
    %s153 = sphi 0, %s155
    %s156 = sphi 0, %s153
    %s157 = sphi 0, %s156
    %s173 = sphi 0, %s157
    %s179 = sphi 0, %s181
    %s182 = sphi 0, %s179
    %s183 = sphi 0, %s182
    %s199 = sphi 0, %s183
    %s205 = sphi 0, %s207
    %s208 = sphi 0, %s205
    %s209 = sphi 0, %s208
    %s225 = sphi 0, %s209
    %s231 = sphi 0, %s233
    %s234 = sphi 0, %s231
    %s235 = sphi 0, %s234
    %s251 = sphi 0, %s235
    %s257 = sphi 0, %s259
    %s260 = sphi 0, %s257
    %s261 = sphi 0, %s260
    %s277 = sphi 0, %s261
    %s283 = sphi 0, %s285
    %s286 = sphi 0, %s283
    %s287 = sphi 0, %s286
    %s303 = sphi 0, %s287
    %s309 = sphi 0, %s311
    %s312 = sphi 0, %s309
    %s313 = sphi 0, %s312
    %s329 = sphi 0, %s313
    %s335 = sphi 0, %s337
    %s338 = sphi 0, %s335
    %s339 = sphi 0, %s338
    %s355 = sphi 0, %s339
    %s361 = sphi 0, %s363
    %s364 = sphi 0, %s361
    %s365 = sphi 0, %s364
    %s381 = sphi 0, %s365
    %s387 = sphi 0, %s389
    %s390 = sphi 0, %s387
    %s391 = sphi 0, %s390
    %s407 = sphi 0, %s391
    %s413 = sphi 0, %s415
    %s416 = sphi 0, %s413
    %s417 = sphi 0, %s416
    %s433 = sphi 0, %s417
    %s439 = sphi 0, %s441
    %s442 = sphi 0, %s439
    %s443 = sphi 0, %s442
    %s459 = sphi 0, %s443
  $region4: #{biogan_ind6class_forward.3} parent=0 // loop_header_branch
    %26 = sbr.rel (%p24) target = $region8
  $region5: #{biogan_ind6class_forward.3} parent=0 // loop_body
    %s28 = ssub.s32 %s23, 1
    %s29 = ssub.s32 %s23, 2
    %s30 = sadd.s32 %s23, 1
    %s32 = sadd.s32 %s31, 1
    %p35 = scmp.eq.s32.totalorder %s23, 5
    %p36 = scmp.ne.s32.totalorder %s31, %s33
    %p37 = scmp.eq.s32.totalorder %s23, 0
    %p38 = por %p36, %p37
    %p39 = scmp.ne.s32.totalorder %s31, %s33
    %p40 = scmp.eq.s32.totalorder %s28, 5
    %p41 = por %p39, %p40
    %p42 = scmp.ne.s32.totalorder %s33, %s34
    %p43 = scmp.eq.s32.totalorder %s28, 0
    %p44 = por %p42, %p43
    %p45 = scmp.ne.s32.totalorder %s33, %s34
    %p46 = scmp.eq.s32.totalorder %s29, 5
    %p47 = por %p45, %p46
    %p49 = scmp.ne.s32.totalorder %s34, %s48
    %p50 = scmp.eq.s32.totalorder %s29, 0
    %p51 = por %p49, %p50
    %s53 = sadd.s32 %s52, 1
    %p56 = scmp.eq.s32.totalorder %s23, 5
    %p57 = scmp.ne.s32.totalorder %s52, %s54
    %p58 = scmp.eq.s32.totalorder %s23, 0
    %p59 = por %p57, %p58
    %p60 = scmp.ne.s32.totalorder %s52, %s54
    %p61 = scmp.eq.s32.totalorder %s28, 5
    %p62 = por %p60, %p61
    %p63 = scmp.ne.s32.totalorder %s54, %s55
    %p64 = scmp.eq.s32.totalorder %s28, 0
    %p65 = por %p63, %p64
    %p66 = scmp.ne.s32.totalorder %s54, %s55
    %p67 = scmp.eq.s32.totalorder %s29, 5
    %p68 = por %p66, %p67
    %p70 = scmp.ne.s32.totalorder %s55, %s69
    %p71 = scmp.eq.s32.totalorder %s29, 0
    %p72 = por %p70, %p71
    %s73 = ssub.s32 %s23, %s30
    %p74 = scmp.eq.s32.totalorder %s73, 0
    %s76 = sadd.s32 %s75, 1
    %s77 = scalar_select %p74, %s75, %s76
    %p80 = pneg %p74
    %p81 = scmp.eq.s32.totalorder %s23, 5
    %p82 = por %p80, %p81
    %p83 = scmp.ne.s32.totalorder %s75, %s78
    %p84 = scmp.eq.s32.totalorder %s23, 0
    %p85 = por %p83, %p84
    %p86 = scmp.ne.s32.totalorder %s75, %s78
    %p87 = scmp.eq.s32.totalorder %s28, 5
    %p88 = por %p86, %p87
    %p89 = scmp.ne.s32.totalorder %s78, %s79
    %p90 = scmp.eq.s32.totalorder %s28, 0
    %p91 = por %p89, %p90
    %p92 = scmp.ne.s32.totalorder %s78, %s79
    %p93 = scmp.eq.s32.totalorder %s29, 5
    %p94 = por %p92, %p93
    %p96 = scmp.ne.s32.totalorder %s79, %s95
    %p97 = scmp.eq.s32.totalorder %s29, 0
    %p98 = por %p96, %p97
    %s99 = ssub.s32 %s23, %s30
    %p100 = scmp.eq.s32.totalorder %s99, 0
    %s102 = sadd.s32 %s101, 1
    %s103 = scalar_select %p100, %s101, %s102
    %p106 = pneg %p100
    %p107 = scmp.eq.s32.totalorder %s23, 5
    %p108 = por %p106, %p107
    %p109 = scmp.ne.s32.totalorder %s101, %s104
    %p110 = scmp.eq.s32.totalorder %s23, 0
    %p111 = por %p109, %p110
    %p112 = scmp.ne.s32.totalorder %s101, %s104
    %p113 = scmp.eq.s32.totalorder %s28, 5
    %p114 = por %p112, %p113
    %p115 = scmp.ne.s32.totalorder %s104, %s105
    %p116 = scmp.eq.s32.totalorder %s28, 0
    %p117 = por %p115, %p116
    %p118 = scmp.ne.s32.totalorder %s104, %s105
    %p119 = scmp.eq.s32.totalorder %s29, 5
    %p120 = por %p118, %p119
    %p122 = scmp.ne.s32.totalorder %s105, %s121
    %p123 = scmp.eq.s32.totalorder %s29, 0
    %p124 = por %p122, %p123
    %s125 = ssub.s32 %s23, %s30
    %p126 = scmp.eq.s32.totalorder %s125, 0
    %s128 = sadd.s32 %s127, 1
    %s129 = scalar_select %p126, %s127, %s128
    %p132 = pneg %p126
    %p133 = scmp.eq.s32.totalorder %s23, 5
    %p134 = por %p132, %p133
    %p135 = scmp.ne.s32.totalorder %s127, %s130
    %p136 = scmp.eq.s32.totalorder %s23, 0
    %p137 = por %p135, %p136
    %p138 = scmp.ne.s32.totalorder %s127, %s130
    %p139 = scmp.eq.s32.totalorder %s28, 5
    %p140 = por %p138, %p139
    %p141 = scmp.ne.s32.totalorder %s130, %s131
    %p142 = scmp.eq.s32.totalorder %s28, 0
    %p143 = por %p141, %p142
    %p144 = scmp.ne.s32.totalorder %s130, %s131
    %p145 = scmp.eq.s32.totalorder %s29, 5
    %p146 = por %p144, %p145
    %p148 = scmp.ne.s32.totalorder %s131, %s147
    %p149 = scmp.eq.s32.totalorder %s29, 0
    %p150 = por %p148, %p149
    %s151 = ssub.s32 %s23, %s30
    %p152 = scmp.eq.s32.totalorder %s151, 0
    %s154 = sadd.s32 %s153, 1
    %s155 = scalar_select %p152, %s153, %s154
    %p158 = pneg %p152
    %p159 = scmp.eq.s32.totalorder %s23, 5
    %p160 = por %p158, %p159
    %p161 = scmp.ne.s32.totalorder %s153, %s156
    %p162 = scmp.eq.s32.totalorder %s23, 0
    %p163 = por %p161, %p162
    %p164 = scmp.ne.s32.totalorder %s153, %s156
    %p165 = scmp.eq.s32.totalorder %s28, 5
    %p166 = por %p164, %p165
    %p167 = scmp.ne.s32.totalorder %s156, %s157
    %p168 = scmp.eq.s32.totalorder %s28, 0
    %p169 = por %p167, %p168
    %p170 = scmp.ne.s32.totalorder %s156, %s157
    %p171 = scmp.eq.s32.totalorder %s29, 5
    %p172 = por %p170, %p171
    %p174 = scmp.ne.s32.totalorder %s157, %s173
    %p175 = scmp.eq.s32.totalorder %s29, 0
    %p176 = por %p174, %p175
    %s177 = ssub.s32 %s23, %s30
    %p178 = scmp.eq.s32.totalorder %s177, 0
    %s180 = sadd.s32 %s179, 1
    %s181 = scalar_select %p178, %s179, %s180
    %p184 = pneg %p178
    %p185 = scmp.eq.s32.totalorder %s23, 5
    %p186 = por %p184, %p185
    %p187 = scmp.ne.s32.totalorder %s179, %s182
    %p188 = scmp.eq.s32.totalorder %s23, 0
    %p189 = por %p187, %p188
    %p190 = scmp.ne.s32.totalorder %s179, %s182
    %p191 = scmp.eq.s32.totalorder %s28, 5
    %p192 = por %p190, %p191
    %p193 = scmp.ne.s32.totalorder %s182, %s183
    %p194 = scmp.eq.s32.totalorder %s28, 0
    %p195 = por %p193, %p194
    %p196 = scmp.ne.s32.totalorder %s182, %s183
    %p197 = scmp.eq.s32.totalorder %s29, 5
    %p198 = por %p196, %p197
    %p200 = scmp.ne.s32.totalorder %s183, %s199
    %p201 = scmp.eq.s32.totalorder %s29, 0
    %p202 = por %p200, %p201
    %s203 = ssub.s32 %s23, %s30
    %p204 = scmp.eq.s32.totalorder %s203, 0
    %s206 = sadd.s32 %s205, 1
    %s207 = scalar_select %p204, %s205, %s206
    %p210 = pneg %p204
    %p211 = scmp.eq.s32.totalorder %s23, 5
    %p212 = por %p210, %p211
    %p213 = scmp.ne.s32.totalorder %s205, %s208
    %p214 = scmp.eq.s32.totalorder %s23, 0
    %p215 = por %p213, %p214
    %p216 = scmp.ne.s32.totalorder %s205, %s208
    %p217 = scmp.eq.s32.totalorder %s28, 5
    %p218 = por %p216, %p217
    %p219 = scmp.ne.s32.totalorder %s208, %s209
    %p220 = scmp.eq.s32.totalorder %s28, 0
    %p221 = por %p219, %p220
    %p222 = scmp.ne.s32.totalorder %s208, %s209
    %p223 = scmp.eq.s32.totalorder %s29, 5
    %p224 = por %p222, %p223
    %p226 = scmp.ne.s32.totalorder %s209, %s225
    %p227 = scmp.eq.s32.totalorder %s29, 0
    %p228 = por %p226, %p227
    %s229 = ssub.s32 %s23, %s30
    %p230 = scmp.eq.s32.totalorder %s229, 0
    %s232 = sadd.s32 %s231, 1
    %s233 = scalar_select %p230, %s231, %s232
    %p236 = pneg %p230
    %p237 = scmp.eq.s32.totalorder %s23, 5
    %p238 = por %p236, %p237
    %p239 = scmp.ne.s32.totalorder %s231, %s234
    %p240 = scmp.eq.s32.totalorder %s23, 0
    %p241 = por %p239, %p240
    %p242 = scmp.ne.s32.totalorder %s231, %s234
    %p243 = scmp.eq.s32.totalorder %s28, 5
    %p244 = por %p242, %p243
    %p245 = scmp.ne.s32.totalorder %s234, %s235
    %p246 = scmp.eq.s32.totalorder %s28, 0
    %p247 = por %p245, %p246
    %p248 = scmp.ne.s32.totalorder %s234, %s235
    %p249 = scmp.eq.s32.totalorder %s29, 5
    %p250 = por %p248, %p249
    %p252 = scmp.ne.s32.totalorder %s235, %s251
    %p253 = scmp.eq.s32.totalorder %s29, 0
    %p254 = por %p252, %p253
    %s255 = ssub.s32 %s23, %s30
    %p256 = scmp.eq.s32.totalorder %s255, 0
    %s258 = sadd.s32 %s257, 1
    %s259 = scalar_select %p256, %s257, %s258
    %p262 = pneg %p256
    %p263 = scmp.eq.s32.totalorder %s23, 5
    %p264 = por %p262, %p263
    %p265 = scmp.ne.s32.totalorder %s257, %s260
    %p266 = scmp.eq.s32.totalorder %s23, 0
    %p267 = por %p265, %p266
    %p268 = scmp.ne.s32.totalorder %s257, %s260
    %p269 = scmp.eq.s32.totalorder %s28, 5
    %p270 = por %p268, %p269
    %p271 = scmp.ne.s32.totalorder %s260, %s261
    %p272 = scmp.eq.s32.totalorder %s28, 0
    %p273 = por %p271, %p272
    %p274 = scmp.ne.s32.totalorder %s260, %s261
    %p275 = scmp.eq.s32.totalorder %s29, 5
    %p276 = por %p274, %p275
    %p278 = scmp.ne.s32.totalorder %s261, %s277
    %p279 = scmp.eq.s32.totalorder %s29, 0
    %p280 = por %p278, %p279
    %s281 = ssub.s32 %s23, %s30
    %p282 = scmp.eq.s32.totalorder %s281, 0
    %s284 = sadd.s32 %s283, 1
    %s285 = scalar_select %p282, %s283, %s284
    %p288 = pneg %p282
    %p289 = scmp.eq.s32.totalorder %s23, 5
    %p290 = por %p288, %p289
    %p291 = scmp.ne.s32.totalorder %s283, %s286
    %p292 = scmp.eq.s32.totalorder %s23, 0
    %p293 = por %p291, %p292
    %p294 = scmp.ne.s32.totalorder %s283, %s286
    %p295 = scmp.eq.s32.totalorder %s28, 5
    %p296 = por %p294, %p295
    %p297 = scmp.ne.s32.totalorder %s286, %s287
    %p298 = scmp.eq.s32.totalorder %s28, 0
    %p299 = por %p297, %p298
    %p300 = scmp.ne.s32.totalorder %s286, %s287
    %p301 = scmp.eq.s32.totalorder %s29, 5
    %p302 = por %p300, %p301
    %p304 = scmp.ne.s32.totalorder %s287, %s303
    %p305 = scmp.eq.s32.totalorder %s29, 0
    %p306 = por %p304, %p305
    %s307 = ssub.s32 %s23, %s30
    %p308 = scmp.eq.s32.totalorder %s307, 0
    %s310 = sadd.s32 %s309, 1
    %s311 = scalar_select %p308, %s309, %s310
    %p314 = pneg %p308
    %p315 = scmp.eq.s32.totalorder %s23, 5
    %p316 = por %p314, %p315
    %p317 = scmp.ne.s32.totalorder %s309, %s312
    %p318 = scmp.eq.s32.totalorder %s23, 0
    %p319 = por %p317, %p318
    %p320 = scmp.ne.s32.totalorder %s309, %s312
    %p321 = scmp.eq.s32.totalorder %s28, 5
    %p322 = por %p320, %p321
    %p323 = scmp.ne.s32.totalorder %s312, %s313
    %p324 = scmp.eq.s32.totalorder %s28, 0
    %p325 = por %p323, %p324
    %p326 = scmp.ne.s32.totalorder %s312, %s313
    %p327 = scmp.eq.s32.totalorder %s29, 5
    %p328 = por %p326, %p327
    %p330 = scmp.ne.s32.totalorder %s313, %s329
    %p331 = scmp.eq.s32.totalorder %s29, 0
    %p332 = por %p330, %p331
    %s333 = ssub.s32 %s23, %s30
    %p334 = scmp.eq.s32.totalorder %s333, 0
    %s336 = sadd.s32 %s335, 1
    %s337 = scalar_select %p334, %s335, %s336
    %p340 = pneg %p334
    %p341 = scmp.eq.s32.totalorder %s23, 5
    %p342 = por %p340, %p341
    %p343 = scmp.ne.s32.totalorder %s335, %s338
    %p344 = scmp.eq.s32.totalorder %s23, 0
    %p345 = por %p343, %p344
    %p346 = scmp.ne.s32.totalorder %s335, %s338
    %p347 = scmp.eq.s32.totalorder %s28, 5
    %p348 = por %p346, %p347
    %p349 = scmp.ne.s32.totalorder %s338, %s339
    %p350 = scmp.eq.s32.totalorder %s28, 0
    %p351 = por %p349, %p350
    %p352 = scmp.ne.s32.totalorder %s338, %s339
    %p353 = scmp.eq.s32.totalorder %s29, 5
    %p354 = por %p352, %p353
    %p356 = scmp.ne.s32.totalorder %s339, %s355
    %p357 = scmp.eq.s32.totalorder %s29, 0
    %p358 = por %p356, %p357
    %s359 = ssub.s32 %s23, %s30
    %p360 = scmp.eq.s32.totalorder %s359, 0
    %s362 = sadd.s32 %s361, 1
    %s363 = scalar_select %p360, %s361, %s362
    %p366 = pneg %p360
    %p367 = scmp.eq.s32.totalorder %s23, 5
    %p368 = por %p366, %p367
    %p369 = scmp.ne.s32.totalorder %s361, %s364
    %p370 = scmp.eq.s32.totalorder %s23, 0
    %p371 = por %p369, %p370
    %p372 = scmp.ne.s32.totalorder %s361, %s364
    %p373 = scmp.eq.s32.totalorder %s28, 5
    %p374 = por %p372, %p373
    %p375 = scmp.ne.s32.totalorder %s364, %s365
    %p376 = scmp.eq.s32.totalorder %s28, 0
    %p377 = por %p375, %p376
    %p378 = scmp.ne.s32.totalorder %s364, %s365
    %p379 = scmp.eq.s32.totalorder %s29, 5
    %p380 = por %p378, %p379
    %p382 = scmp.ne.s32.totalorder %s365, %s381
    %p383 = scmp.eq.s32.totalorder %s29, 0
    %p384 = por %p382, %p383
    %s385 = ssub.s32 %s23, %s30
    %p386 = scmp.eq.s32.totalorder %s385, 0
    %s388 = sadd.s32 %s387, 1
    %s389 = scalar_select %p386, %s387, %s388
    %p392 = pneg %p386
    %p393 = scmp.eq.s32.totalorder %s23, 5
    %p394 = por %p392, %p393
    %p395 = scmp.ne.s32.totalorder %s387, %s390
    %p396 = scmp.eq.s32.totalorder %s23, 0
    %p397 = por %p395, %p396
    %p398 = scmp.ne.s32.totalorder %s387, %s390
    %p399 = scmp.eq.s32.totalorder %s28, 5
    %p400 = por %p398, %p399
    %p401 = scmp.ne.s32.totalorder %s390, %s391
    %p402 = scmp.eq.s32.totalorder %s28, 0
    %p403 = por %p401, %p402
    %p404 = scmp.ne.s32.totalorder %s390, %s391
    %p405 = scmp.eq.s32.totalorder %s29, 5
    %p406 = por %p404, %p405
    %p408 = scmp.ne.s32.totalorder %s391, %s407
    %p409 = scmp.eq.s32.totalorder %s29, 0
    %p410 = por %p408, %p409
    %s411 = ssub.s32 %s23, %s30
    %p412 = scmp.eq.s32.totalorder %s411, 0
    %s414 = sadd.s32 %s413, 1
    %s415 = scalar_select %p412, %s413, %s414
    %p418 = pneg %p412
    %p419 = scmp.eq.s32.totalorder %s23, 5
    %p420 = por %p418, %p419
    %p421 = scmp.ne.s32.totalorder %s413, %s416
    %p422 = scmp.eq.s32.totalorder %s23, 0
    %p423 = por %p421, %p422
    %p424 = scmp.ne.s32.totalorder %s413, %s416
    %p425 = scmp.eq.s32.totalorder %s28, 5
    %p426 = por %p424, %p425
    %p427 = scmp.ne.s32.totalorder %s416, %s417
    %p428 = scmp.eq.s32.totalorder %s28, 0
    %p429 = por %p427, %p428
    %p430 = scmp.ne.s32.totalorder %s416, %s417
    %p431 = scmp.eq.s32.totalorder %s29, 5
    %p432 = por %p430, %p431
    %p434 = scmp.ne.s32.totalorder %s417, %s433
    %p435 = scmp.eq.s32.totalorder %s29, 0
    %p436 = por %p434, %p435
    %s437 = ssub.s32 %s23, %s30
    %p438 = scmp.eq.s32.totalorder %s437, 0
    %s440 = sadd.s32 %s439, 1
    %s441 = scalar_select %p438, %s439, %s440
    %p444 = pneg %p438
    %p445 = scmp.eq.s32.totalorder %s23, 5
    %p446 = por %p444, %p445
    %p447 = scmp.ne.s32.totalorder %s439, %s442
    %p448 = scmp.eq.s32.totalorder %s23, 0
    %p449 = por %p447, %p448
    %p450 = scmp.ne.s32.totalorder %s439, %s442
    %p451 = scmp.eq.s32.totalorder %s28, 5
    %p452 = por %p450, %p451
    %p453 = scmp.ne.s32.totalorder %s442, %s443
    %p454 = scmp.eq.s32.totalorder %s28, 0
    %p455 = por %p453, %p454
    %p456 = scmp.ne.s32.totalorder %s442, %s443
    %p457 = scmp.eq.s32.totalorder %s29, 5
    %p458 = por %p456, %p457
    %p460 = scmp.ne.s32.totalorder %s443, %s459
    %p461 = scmp.eq.s32.totalorder %s29, 0
    %p462 = por %p460, %p461
    %p463 = scmp.le.s32.totalorder 1, %s23
    %p464 = scmp.lt.s32.totalorder %s23, 7
    %p465 = pnand %p463, %p464
    %p466 = pneg %p465
    // Predicated region
    $region9: #{biogan_ind6class_forward.3} parent=5 // pred_check
      _
    $region10: #{biogan_ind6class_forward.3} parent=5 // pred_check_branch
      %468 = sbr.rel (%p465) target = $region12
    $region11: #{biogan_ind6class_forward.3} parent=5 // pred_region
      %s469 = ssub.s32 %s23, 1
      // Predicated region
      $region13: #{biogan_ind6class_forward.3} parent=11 // pred_check
        %p470 = pneg %p44
      $region14: #{biogan_ind6class_forward.3} parent=11 // pred_check_branch
        %472 = sbr.rel (%p470) target = $region16
      $region15: #{biogan_ind6class_forward.3} parent=11 // pred_region
        _
      $region16: #{biogan_ind6class_forward.3} parent=11 // pred_fallthru
        _
      // Predicated region
      $region17: #{biogan_ind6class_forward.3} parent=11 // pred_check
        %p473 = pneg %p65
      $region18: #{biogan_ind6class_forward.3} parent=11 // pred_check_branch
        %475 = sbr.rel (%p473) target = $region20
      $region19: #{biogan_ind6class_forward.3} parent=11 // pred_region
        _
      $region20: #{biogan_ind6class_forward.3} parent=11 // pred_fallthru
        _
    $region12: #{biogan_ind6class_forward.3} parent=5 // pred_fallthru
      _
    %p476 = scmp.lt.s32.totalorder %s23, 6
    // Predicated region
    $region21: #{biogan_ind6class_forward.3} parent=5 // pred_check
      %p477 = pneg %p476
    $region22: #{biogan_ind6class_forward.3} parent=5 // pred_check_branch
      %479 = sbr.rel (%p477) target = $region24
    $region23: #{biogan_ind6class_forward.3} parent=5 // pred_region
      // Predicated region
      $region25: #{biogan_ind6class_forward.3} parent=23 // pred_check
        %p480 = pneg %p85
      $region26: #{biogan_ind6class_forward.3} parent=23 // pred_check_branch
        %482 = sbr.rel (%p480) target = $region28
      $region27: #{biogan_ind6class_forward.3} parent=23 // pred_region
        %p483 = scmp.lt.s32.totalorder %s23, 5
        %s484 = scalar_select %p483, %s23, 5
        %s485 = smul.addr %s484, 16
        %s486 = smul.addr %s485, 8
        %s487 = scalar_lea.vmem %s2, %s486
      $region28: #{biogan_ind6class_forward.3} parent=23 // pred_fallthru
        _
      // Predicated region
      $region29: #{biogan_ind6class_forward.3} parent=23 // pred_check
        %p488 = pneg %p111
      $region30: #{biogan_ind6class_forward.3} parent=23 // pred_check_branch
        %490 = sbr.rel (%p488) target = $region32
      $region31: #{biogan_ind6class_forward.3} parent=23 // pred_region
        %p491 = scmp.lt.s32.totalorder %s23, 5
        %s492 = scalar_select %p491, %s23, 5
        %s493 = smul.addr %s492, 64
        %s494 = smul.addr %s493, 8
        %s495 = scalar_lea.vmem %s3, %s494
      $region32: #{biogan_ind6class_forward.3} parent=23 // pred_fallthru
        _
      // Predicated region
      $region33: #{biogan_ind6class_forward.3} parent=23 // pred_check
        %p496 = pneg %p137
      $region34: #{biogan_ind6class_forward.3} parent=23 // pred_check_branch
        %498 = sbr.rel (%p496) target = $region36
      $region35: #{biogan_ind6class_forward.3} parent=23 // pred_region
        %p499 = scmp.lt.s32.totalorder %s23, 5
        %s500 = scalar_select %p499, %s23, 5
        %s501 = smul.addr %s500, 2
        %s502 = smul.addr %s501, 8
        %s503 = scalar_lea.vmem %s4, %s502
      $region36: #{biogan_ind6class_forward.3} parent=23 // pred_fallthru
        _
      // Predicated region
      $region37: #{biogan_ind6class_forward.3} parent=23 // pred_check
        %p504 = pneg %p163
      $region38: #{biogan_ind6class_forward.3} parent=23 // pred_check_branch
        %506 = sbr.rel (%p504) target = $region40
      $region39: #{biogan_ind6class_forward.3} parent=23 // pred_region
        %p507 = scmp.lt.s32.totalorder %s23, 5
        %s508 = scalar_select %p507, %s23, 5
        %s509 = smul.addr %s508, 32
        %s510 = smul.addr %s509, 8
        %s511 = scalar_lea.vmem %s5, %s510
      $region40: #{biogan_ind6class_forward.3} parent=23 // pred_fallthru
        _
      // Predicated region
      $region41: #{biogan_ind6class_forward.3} parent=23 // pred_check
        %p512 = pneg %p189
      $region42: #{biogan_ind6class_forward.3} parent=23 // pred_check_branch
        %514 = sbr.rel (%p512) target = $region44
      $region43: #{biogan_ind6class_forward.3} parent=23 // pred_region
        %p515 = scmp.lt.s32.totalorder %s23, 5
        %s516 = scalar_select %p515, %s23, 5
        %s517 = scalar_lea.vmem %s6, %s516
      $region44: #{biogan_ind6class_forward.3} parent=23 // pred_fallthru
        _
      // Predicated region
      $region45: #{biogan_ind6class_forward.3} parent=23 // pred_check
        %p518 = pneg %p215
      $region46: #{biogan_ind6class_forward.3} parent=23 // pred_check_branch
        %520 = sbr.rel (%p518) target = $region48
      $region47: #{biogan_ind6class_forward.3} parent=23 // pred_region
        %p521 = scmp.lt.s32.totalorder %s23, 5
        %s522 = scalar_select %p521, %s23, 5
        %s523 = smul.addr %s522, 4
        %s524 = smul.addr %s523, 8
        %s525 = scalar_lea.vmem %s7, %s524
      $region48: #{biogan_ind6class_forward.3} parent=23 // pred_fallthru
        _
      // Predicated region
      $region49: #{biogan_ind6class_forward.3} parent=23 // pred_check
        %p526 = pneg %p241
      $region50: #{biogan_ind6class_forward.3} parent=23 // pred_check_branch
        %528 = sbr.rel (%p526) target = $region52
      $region51: #{biogan_ind6class_forward.3} parent=23 // pred_region
        %p529 = scmp.lt.s32.totalorder %s23, 5
        %s530 = scalar_select %p529, %s23, 5
        %s531 = scalar_lea.vmem %s8, %s530
      $region52: #{biogan_ind6class_forward.3} parent=23 // pred_fallthru
        _
      // Predicated region
      $region53: #{biogan_ind6class_forward.3} parent=23 // pred_check
        %p532 = pneg %p267
      $region54: #{biogan_ind6class_forward.3} parent=23 // pred_check_branch
        %534 = sbr.rel (%p532) target = $region56
      $region55: #{biogan_ind6class_forward.3} parent=23 // pred_region
        %p535 = scmp.lt.s32.totalorder %s23, 5
        %s536 = scalar_select %p535, %s23, 5
        %s537 = smul.addr %s536, 8
        %s538 = scalar_lea.vmem %s9, %s537
      $region56: #{biogan_ind6class_forward.3} parent=23 // pred_fallthru
        _
      // Predicated region
      $region57: #{biogan_ind6class_forward.3} parent=23 // pred_check
        %p539 = pneg %p293
      $region58: #{biogan_ind6class_forward.3} parent=23 // pred_check_branch
        %541 = sbr.rel (%p539) target = $region60
      $region59: #{biogan_ind6class_forward.3} parent=23 // pred_region
        %p542 = scmp.lt.s32.totalorder %s23, 5
        %s543 = scalar_select %p542, %s23, 5
        %s544 = scalar_lea.vmem %s10, %s543
      $region60: #{biogan_ind6class_forward.3} parent=23 // pred_fallthru
        _
      // Predicated region
      $region61: #{biogan_ind6class_forward.3} parent=23 // pred_check
        %p545 = pneg %p319
      $region62: #{biogan_ind6class_forward.3} parent=23 // pred_check_branch
        %547 = sbr.rel (%p545) target = $region64
      $region63: #{biogan_ind6class_forward.3} parent=23 // pred_region
        %p548 = scmp.lt.s32.totalorder %s23, 5
        %s549 = scalar_select %p548, %s23, 5
        %s550 = smul.addr %s549, 16
        %s551 = smul.addr %s550, 8
        %s552 = scalar_lea.vmem %s11, %s551
      $region64: #{biogan_ind6class_forward.3} parent=23 // pred_fallthru
        _
      // Predicated region
      $region65: #{biogan_ind6class_forward.3} parent=23 // pred_check
        %p553 = pneg %p345
      $region66: #{biogan_ind6class_forward.3} parent=23 // pred_check_branch
        %555 = sbr.rel (%p553) target = $region68
      $region67: #{biogan_ind6class_forward.3} parent=23 // pred_region
        %p556 = scmp.lt.s32.totalorder %s23, 5
        %s557 = scalar_select %p556, %s23, 5
        %s558 = scalar_lea.vmem %s12, %s557
      $region68: #{biogan_ind6class_forward.3} parent=23 // pred_fallthru
        _
      // Predicated region
      $region69: #{biogan_ind6class_forward.3} parent=23 // pred_check
        %p559 = pneg %p371
      $region70: #{biogan_ind6class_forward.3} parent=23 // pred_check_branch
        %561 = sbr.rel (%p559) target = $region72
      $region71: #{biogan_ind6class_forward.3} parent=23 // pred_region
        %p562 = scmp.lt.s32.totalorder %s23, 5
        %s563 = scalar_select %p562, %s23, 5
        %s564 = smul.addr %s563, 2
        %s565 = smul.addr %s564, 8
        %s566 = scalar_lea.vmem %s13, %s565
      $region72: #{biogan_ind6class_forward.3} parent=23 // pred_fallthru
        _
      // Predicated region
      $region73: #{biogan_ind6class_forward.3} parent=23 // pred_check
        %p567 = pneg %p397
      $region74: #{biogan_ind6class_forward.3} parent=23 // pred_check_branch
        %569 = sbr.rel (%p567) target = $region76
      $region75: #{biogan_ind6class_forward.3} parent=23 // pred_region
        %p570 = scmp.lt.s32.totalorder %s23, 5
        %s571 = scalar_select %p570, %s23, 5
        %s572 = scalar_lea.vmem %s14, %s571
      $region76: #{biogan_ind6class_forward.3} parent=23 // pred_fallthru
        _
    $region24: #{biogan_ind6class_forward.3} parent=5 // pred_fallthru
      _
    %p573 = scmp.le.s32.totalorder 1, %s23
    %p574 = scmp.lt.s32.totalorder %s23, 7
    %p575 = pnand %p573, %p574
    %p576 = pneg %p575
    // Predicated region
    $region77: #{biogan_ind6class_forward.3} parent=5 // pred_check
      _
    $region78: #{biogan_ind6class_forward.3} parent=5 // pred_check_branch
      %578 = sbr.rel (%p575) target = $region80
    $region79: #{biogan_ind6class_forward.3} parent=5 // pred_region
      %s579 = ssub.s32 %s23, 1
      %p580 = pneg %p44
      %p581 = pneg %p41
      %p582 = pneg %p65
      %p583 = pneg %p62
      %p584 = scmp.lt.s32.totalorder %s28, 5
      %s585 = scalar_select %p584, %s28, 5
      %s586 = smul.addr %s585, 16
      %s587 = smul.addr %s586, 8
      %s588 = scalar_lea.vmem %s2, %s587
      %p589 = pneg %p91
      %p590 = pneg %p88
      %p591 = scmp.lt.s32.totalorder %s28, 5
      %s592 = scalar_select %p591, %s28, 5
      %s593 = smul.addr %s592, 64
      %s594 = smul.addr %s593, 8
      %s595 = scalar_lea.vmem %s3, %s594
      %p596 = pneg %p117
      %p597 = pneg %p114
      %p598 = scmp.lt.s32.totalorder %s28, 5
      %s599 = scalar_select %p598, %s28, 5
      %s600 = smul.addr %s599, 2
      %s601 = smul.addr %s600, 8
      %s602 = scalar_lea.vmem %s4, %s601
      %p603 = pneg %p143
      %p604 = pneg %p140
      %p605 = scmp.lt.s32.totalorder %s28, 5
      %s606 = scalar_select %p605, %s28, 5
      %s607 = smul.addr %s606, 32
      %s608 = smul.addr %s607, 8
      %s609 = scalar_lea.vmem %s5, %s608
      %p610 = pneg %p169
      %p611 = pneg %p166
      %p612 = scmp.lt.s32.totalorder %s28, 5
      %s613 = scalar_select %p612, %s28, 5
      %s614 = scalar_lea.vmem %s6, %s613
      %p615 = pneg %p195
      %p616 = pneg %p192
      %p617 = scmp.lt.s32.totalorder %s28, 5
      %s618 = scalar_select %p617, %s28, 5
      %s619 = smul.addr %s618, 4
      %s620 = smul.addr %s619, 8
      %s621 = scalar_lea.vmem %s7, %s620
      %p622 = pneg %p221
      %p623 = pneg %p218
      %p624 = scmp.lt.s32.totalorder %s28, 5
      %s625 = scalar_select %p624, %s28, 5
      %s626 = scalar_lea.vmem %s8, %s625
      %p627 = pneg %p247
      %p628 = pneg %p244
      %p629 = scmp.lt.s32.totalorder %s28, 5
      %s630 = scalar_select %p629, %s28, 5
      %s631 = smul.addr %s630, 8
      %s632 = scalar_lea.vmem %s9, %s631
      %p633 = pneg %p273
      %p634 = pneg %p270
      %p635 = scmp.lt.s32.totalorder %s28, 5
      %s636 = scalar_select %p635, %s28, 5
      %s637 = scalar_lea.vmem %s10, %s636
      %p638 = pneg %p299
      %p639 = pneg %p296
      %p640 = scmp.lt.s32.totalorder %s28, 5
      %s641 = scalar_select %p640, %s28, 5
      %s642 = smul.addr %s641, 16
      %s643 = smul.addr %s642, 8
      %s644 = scalar_lea.vmem %s11, %s643
      %p645 = pneg %p325
      %p646 = pneg %p322
      %p647 = scmp.lt.s32.totalorder %s28, 5
      %s648 = scalar_select %p647, %s28, 5
      %s649 = scalar_lea.vmem %s12, %s648
      %p650 = pneg %p351
      %p651 = pneg %p348
      %p652 = scmp.lt.s32.totalorder %s28, 5
      %s653 = scalar_select %p652, %s28, 5
      %s654 = smul.addr %s653, 2
      %s655 = smul.addr %s654, 8
      %s656 = scalar_lea.vmem %s13, %s655
      %p657 = pneg %p377
      %p658 = pneg %p374
      %p659 = scmp.lt.s32.totalorder %s28, 5
      %s660 = scalar_select %p659, %s28, 5
      %s661 = scalar_lea.vmem %s14, %s660
      %p662 = pneg %p403
      %p663 = pneg %p400
      %p664 = pneg %p429
      %p665 = pneg %p426
      %p666 = scmp.lt.s32.totalorder %s28, 5
      %s667 = scalar_select %p666, %s28, 5
      %s668 = scalar_lea.vmem %s15, %s667
      %p669 = pneg %p455
      %p670 = pneg %p452
      %p671 = scmp.lt.s32.totalorder %s28, 5
      %s672 = scalar_select %p671, %s28, 5
      %s673 = scalar_lea.vmem %s16, %s672
      %p674 = scmp.lt.s32.totalorder %s28, 5
      %s675 = scalar_select %p674, %s28, 5
      %s676 = smul.addr %s675, 16
      %s677 = smul.addr %s676, 8
      %s678 = scalar_lea.vmem %s2, %s677
      %p679 = scmp.lt.s32.totalorder %s28, 5
      %s680 = scalar_select %p679, %s28, 5
      %s681 = smul.addr %s680, 64
      %s682 = smul.addr %s681, 8
      %s683 = scalar_lea.vmem %s3, %s682
      %p684 = scmp.lt.s32.totalorder %s28, 5
      %s685 = scalar_select %p684, %s28, 5
      %s686 = smul.addr %s685, 2
      %s687 = smul.addr %s686, 8
      %s688 = scalar_lea.vmem %s4, %s687
      %p689 = scmp.lt.s32.totalorder %s28, 5
      %s690 = scalar_select %p689, %s28, 5
      %s691 = smul.addr %s690, 32
      %s692 = smul.addr %s691, 8
      %s693 = scalar_lea.vmem %s5, %s692
      %p694 = scmp.lt.s32.totalorder %s28, 5
      %s695 = scalar_select %p694, %s28, 5
      %s696 = scalar_lea.vmem %s6, %s695
      %p697 = scmp.lt.s32.totalorder %s28, 5
      %s698 = scalar_select %p697, %s28, 5
      %s699 = smul.addr %s698, 4
      %s700 = smul.addr %s699, 8
      %s701 = scalar_lea.vmem %s7, %s700
      %p702 = scmp.lt.s32.totalorder %s28, 5
      %s703 = scalar_select %p702, %s28, 5
      %s704 = scalar_lea.vmem %s8, %s703
      %p705 = scmp.lt.s32.totalorder %s28, 5
      %s706 = scalar_select %p705, %s28, 5
      %s707 = smul.addr %s706, 8
      %s708 = scalar_lea.vmem %s9, %s707
      %p709 = scmp.lt.s32.totalorder %s28, 5
      %s710 = scalar_select %p709, %s28, 5
      %s711 = scalar_lea.vmem %s10, %s710
      %p712 = scmp.lt.s32.totalorder %s28, 5
      %s713 = scalar_select %p712, %s28, 5
      %s714 = smul.addr %s713, 16
      %s715 = smul.addr %s714, 8
      %s716 = scalar_lea.vmem %s11, %s715
      %p717 = scmp.lt.s32.totalorder %s28, 5
      %s718 = scalar_select %p717, %s28, 5
      %s719 = scalar_lea.vmem %s12, %s718
      %p720 = scmp.lt.s32.totalorder %s28, 5
      %s721 = scalar_select %p720, %s28, 5
      %s722 = smul.addr %s721, 2
      %s723 = smul.addr %s722, 8
      %s724 = scalar_lea.vmem %s13, %s723
      %p725 = scmp.lt.s32.totalorder %s28, 5
      %s726 = scalar_select %p725, %s28, 5
      %s727 = scalar_lea.vmem %s14, %s726
      %p728 = scmp.lt.s32.totalorder %s28, 5
      %s729 = scalar_select %p728, %s28, 5
      %s730 = scalar_lea.vmem %s15, %s729
      %p731 = scmp.lt.s32.totalorder %s28, 5
      %s732 = scalar_select %p731, %s28, 5
      %s733 = scalar_lea.vmem %s16, %s732
      %v735 = vld [vmem:[%s683] sm:$0xff]
      %v736 = vld [vmem:[%s683 + $0x8] sm:$0xff]
      %v737 = vld [vmem:[%s683 + $0x10] sm:$0xff]
      %v738 = vld [vmem:[%s683 + $0x18] sm:$0xff]
      %v739 = vld [vmem:[%s683 + $0x20] sm:$0xff]
      %v740 = vld [vmem:[%s683 + $0x28] sm:$0xff]
      %v741 = vld [vmem:[%s683 + $0x30] sm:$0xff]
      %v742 = vld [vmem:[%s683 + $0x38] sm:$0xff]
      %v743 = vld [vmem:[%s683 + $0x40] sm:$0xff]
      %v744 = vld [vmem:[%s683 + $0x48] sm:$0xff]
      %v745 = vld [vmem:[%s683 + $0x50] sm:$0xff]
      %v746 = vld [vmem:[%s683 + $0x58] sm:$0xff]
      %v747 = vld [vmem:[%s683 + $0x60] sm:$0xff]
      %v748 = vld [vmem:[%s683 + $0x68] sm:$0xff]
      %v749 = vld [vmem:[%s683 + $0x70] sm:$0xff]
      %v750 = vld [vmem:[%s683 + $0x78] sm:$0xff]
      %v751 = vld [vmem:[%s683 + $0x80] sm:$0xff]
      %v752 = vld [vmem:[%s683 + $0x88] sm:$0xff]
      %v753 = vld [vmem:[%s683 + $0x90] sm:$0xff]
      %v754 = vld [vmem:[%s683 + $0x98] sm:$0xff]
      %v755 = vld [vmem:[%s683 + $0xa0] sm:$0xff]
      %v756 = vld [vmem:[%s683 + $0xa8] sm:$0xff]
      %v757 = vld [vmem:[%s683 + $0xb0] sm:$0xff]
      %v758 = vld [vmem:[%s683 + $0xb8] sm:$0xff]
      %v759 = vld [vmem:[%s683 + $0xc0] sm:$0xff]
      %v760 = vld [vmem:[%s683 + $0xc8] sm:$0xff]
      %v761 = vld [vmem:[%s683 + $0xd0] sm:$0xff]
      %v762 = vld [vmem:[%s683 + $0xd8] sm:$0xff]
      %v763 = vld [vmem:[%s683 + $0xe0] sm:$0xff]
      %v764 = vld [vmem:[%s683 + $0xe8] sm:$0xff]
      %v765 = vld [vmem:[%s683 + $0xf0] sm:$0xff]
      %v766 = vld [vmem:[%s683 + $0xf8] sm:$0xff]
      %v767 = vld [vmem:[%s683 + $0x100] sm:$0xff]
      %v768 = vld [vmem:[%s683 + $0x108] sm:$0xff]
      %v769 = vld [vmem:[%s683 + $0x110] sm:$0xff]
      %v770 = vld [vmem:[%s683 + $0x118] sm:$0xff]
      %v771 = vld [vmem:[%s683 + $0x120] sm:$0xff]
      %v772 = vld [vmem:[%s683 + $0x128] sm:$0xff]
      %v773 = vld [vmem:[%s683 + $0x130] sm:$0xff]
      %v774 = vld [vmem:[%s683 + $0x138] sm:$0xff]
      %v775 = vld [vmem:[%s683 + $0x140] sm:$0xff]
      %v776 = vld [vmem:[%s683 + $0x148] sm:$0xff]
      %v777 = vld [vmem:[%s683 + $0x150] sm:$0xff]
      %v778 = vld [vmem:[%s683 + $0x158] sm:$0xff]
      %v779 = vld [vmem:[%s683 + $0x160] sm:$0xff]
      %v780 = vld [vmem:[%s683 + $0x168] sm:$0xff]
      %v781 = vld [vmem:[%s683 + $0x170] sm:$0xff]
      %v782 = vld [vmem:[%s683 + $0x178] sm:$0xff]
      %v783 = vld [vmem:[%s683 + $0x180] sm:$0xff]
      %v784 = vld [vmem:[%s683 + $0x188] sm:$0xff]
      %v785 = vld [vmem:[%s683 + $0x190] sm:$0xff]
      %v786 = vld [vmem:[%s683 + $0x198] sm:$0xff]
      %v787 = vld [vmem:[%s683 + $0x1a0] sm:$0xff]
      %v788 = vld [vmem:[%s683 + $0x1a8] sm:$0xff]
      %v789 = vld [vmem:[%s683 + $0x1b0] sm:$0xff]
      %v790 = vld [vmem:[%s683 + $0x1b8] sm:$0xff]
      %v791 = vld [vmem:[%s683 + $0x1c0] sm:$0xff]
      %v792 = vld [vmem:[%s683 + $0x1c8] sm:$0xff]
      %v793 = vld [vmem:[%s683 + $0x1d0] sm:$0xff]
      %v794 = vld [vmem:[%s683 + $0x1d8] sm:$0xff]
      %v795 = vld [vmem:[%s683 + $0x1e0] sm:$0xff]
      %v796 = vld [vmem:[%s683 + $0x1e8] sm:$0xff]
      %v797 = vld [vmem:[%s683 + $0x1f0] sm:$0xff]
      %v798 = vld [vmem:[%s683 + $0x1f8] sm:$0xff]
      %v799 = vpack.c.bf16 %v736, %v735
      %v800 = vpack.c.bf16 %v738, %v737
      %v801 = vpack.c.bf16 %v740, %v739
      %v802 = vpack.c.bf16 %v742, %v741
      %v803 = vpack.c.bf16 %v744, %v743
      %v804 = vpack.c.bf16 %v746, %v745
      %v805 = vpack.c.bf16 %v748, %v747
      %v806 = vpack.c.bf16 %v750, %v749
      %v807 = vpack.c.bf16 %v752, %v751
      %v808 = vpack.c.bf16 %v754, %v753
      %v809 = vpack.c.bf16 %v756, %v755
      %v810 = vpack.c.bf16 %v758, %v757
      %v811 = vpack.c.bf16 %v760, %v759
      %v812 = vpack.c.bf16 %v762, %v761
      %v813 = vpack.c.bf16 %v764, %v763
      %v814 = vpack.c.bf16 %v766, %v765
      %v815 = vpack.c.bf16 %v768, %v767
      %v816 = vpack.c.bf16 %v770, %v769
      %v817 = vpack.c.bf16 %v772, %v771
      %v818 = vpack.c.bf16 %v774, %v773
      %v819 = vpack.c.bf16 %v776, %v775
      %v820 = vpack.c.bf16 %v778, %v777
      %v821 = vpack.c.bf16 %v780, %v779
      %v822 = vpack.c.bf16 %v782, %v781
      %v823 = vpack.c.bf16 %v784, %v783
      %v824 = vpack.c.bf16 %v786, %v785
      %v825 = vpack.c.bf16 %v788, %v787
      %v826 = vpack.c.bf16 %v790, %v789
      %v827 = vpack.c.bf16 %v792, %v791
      %v828 = vpack.c.bf16 %v794, %v793
      %v829 = vpack.c.bf16 %v796, %v795
      %v830 = vpack.c.bf16 %v798, %v797
      %v831 = vld [vmem:[%s688] sm:$0xff]
      %v832 = vld [vmem:[%s688 + $0x8] sm:$0xff]
      %v833 = vld [vmem:[%s696] sm:$0x1]
      %v834 = vld [vmem:[%s701] sm:$0xff]
      %v835 = vld [vmem:[%s701 + $0x8] sm:$0xff]
      %v836 = vld [vmem:[%s701 + $0x10] sm:$0xff]
      %v837 = vld [vmem:[%s701 + $0x18] sm:$0xff]
      %v838 = vpack.c.bf16 %v835, %v834
      %v839 = vpack.c.bf16 %v837, %v836
      %v840 = vld [vmem:[%s704] sm:$0x1]
      %v842 = vperm.slane %v840, 0
      %843 = vrot.lane.b32.xlu0 %v842, 2
      %v844 = vpop.permute.xlu0 %843
      %846 = vrot.lane.b32.xlu0 %v842, 4
      %v847 = vpop.permute.xlu0 %846
      %849 = vrot.lane.b32.xlu0 %v842, 6
      %v850 = vpop.permute.xlu0 %849
      %vm852 = vcmask 15360
      %v853 = vsel %vm852, %v840, %v844
      %vm854 = vcmask 31744
      %v855 = vsel %vm854, %v853, %v847
      %vm856 = vcmask 48128
      %v857 = vsel %vm856, %v855, %v850
      %v858 = vld [vmem:[%s708] sm:$0xff]
      %v859 = vpack.c.bf16 %v858, %v858
      %v860 = vld [vmem:[%s711] sm:$0x1]
      %v861 = vld [vmem:[%s716] sm:$0xff]
      %v862 = vld [vmem:[%s716 + $0x8] sm:$0xff]
      %v863 = vld [vmem:[%s716 + $0x10] sm:$0xff]
      %v864 = vld [vmem:[%s716 + $0x18] sm:$0xff]
      %v865 = vld [vmem:[%s716 + $0x20] sm:$0xff]
      %v866 = vld [vmem:[%s716 + $0x28] sm:$0xff]
      %v867 = vld [vmem:[%s716 + $0x30] sm:$0xff]
      %v868 = vld [vmem:[%s716 + $0x38] sm:$0xff]
      %v869 = vld [vmem:[%s716 + $0x40] sm:$0xff]
      %v870 = vld [vmem:[%s716 + $0x48] sm:$0xff]
      %v871 = vld [vmem:[%s716 + $0x50] sm:$0xff]
      %v872 = vld [vmem:[%s716 + $0x58] sm:$0xff]
      %v873 = vld [vmem:[%s716 + $0x60] sm:$0xff]
      %v874 = vld [vmem:[%s716 + $0x68] sm:$0xff]
      %v875 = vld [vmem:[%s716 + $0x70] sm:$0xff]
      %v876 = vld [vmem:[%s716 + $0x78] sm:$0xff]
      %v877 = vpack.c.bf16 %v862, %v861
      %v878 = vpack.c.bf16 %v864, %v863
      %v879 = vpack.c.bf16 %v866, %v865
      %v880 = vpack.c.bf16 %v868, %v867
      %v881 = vpack.c.bf16 %v870, %v869
      %v882 = vpack.c.bf16 %v872, %v871
      %v883 = vpack.c.bf16 %v874, %v873
      %v884 = vpack.c.bf16 %v876, %v875
      %v885 = vld [vmem:[%s719] sm:$0x1]
      %v886 = vld [vmem:[%s724] sm:$0xff]
      %v887 = vld [vmem:[%s724 + $0x8] sm:$0xff]
      %v888 = vld [vmem:[%s727] sm:$0x1]
      %v889 = vlaneseq
      %v890 = vand.u32 %v889, 127
      %v891 = vlaneseq
      %v892 = vshrl.u32 %v891, 7
      %v893 = vmul.u32 %v892, 16
      %vm894 = vcmp.ge.s32.totalorder %v890, %v893
      %v895 = vadd.s32 %v893, 16
      %vm896 = vcmp.lt.s32.totalorder %v890, %v895
      %vm897 = vmand %vm894, %vm896
      %v898 = vsel %vm897, 1, 0
      %v899 = vcvt.s32.f32 %v898
      %v900 = vld [vmem:[%s0] sm:$0xff]
      %v901 = vld [vmem:[%s0 + $0x8] sm:$0xff]
      %v902 = vld [vmem:[%s0 + $0x10] sm:$0xff]
      %v903 = vld [vmem:[%s0 + $0x18] sm:$0xff]
      %v904 = vld [vmem:[%s0 + $0x20] sm:$0xff]
      %v905 = vld [vmem:[%s0 + $0x28] sm:$0xff]
      %v906 = vld [vmem:[%s0 + $0x30] sm:$0xff]
      %v907 = vld [vmem:[%s0 + $0x38] sm:$0xff]
      %v908 = vld [vmem:[%s0 + $0x40] sm:$0xff]
      %v909 = vld [vmem:[%s0 + $0x48] sm:$0xff]
      %v910 = vld [vmem:[%s0 + $0x50] sm:$0xff]
      %v911 = vld [vmem:[%s0 + $0x58] sm:$0xff]
      %v912 = vld [vmem:[%s0 + $0x60] sm:$0xff]
      %v913 = vld [vmem:[%s0 + $0x68] sm:$0xff]
      %v914 = vld [vmem:[%s0 + $0x70] sm:$0xff]
      %v915 = vld [vmem:[%s0 + $0x78] sm:$0xff]
      %v916 = vpack.c.bf16 %v904, %v900
      %v917 = vpack.c.bf16 %v905, %v901
      %v918 = vpack.c.bf16 %v906, %v902
      %v919 = vpack.c.bf16 %v907, %v903
      %v920 = vpack.c.bf16 %v912, %v908
      %v921 = vpack.c.bf16 %v913, %v909
      %v922 = vpack.c.bf16 %v914, %v910
      %v923 = vpack.c.bf16 %v915, %v911
      %924 = vmatpush.bf16.msra.mxu0 %v806
      %925 = vmatpush.bf16.msra.mxu0 %v805
      %926 = vmatpush.bf16.msra.mxu0 %v804
      %927 = vmatpush.bf16.msra.mxu0 %v803
      %928 = vmatpush.bf16.msra.mxu0 %v802
      %929 = vmatpush.bf16.msra.mxu0 %v801
      %930 = vmatpush.bf16.msra.mxu0 %v800
      %931 = vmatpush.bf16.msra.mxu0 %v799
      %932 = vmatmul.bf16.gmra.mxu0 %v916
      %v933 = vpop.f32.mrf.mxu0
      %v934 = vadd.f32 %v831, %v933
      %v935 = vpop.f32.mrf.mxu0
      %v936 = vadd.f32 %v832, %v935
      %937 = vmatmul.bf16.gmra.mxu0 %v920
      %v938 = vpop.f32.mrf.mxu0
      %v939 = vadd.f32 %v831, %v938
      %v940 = vpop.f32.mrf.mxu0
      %v941 = vadd.f32 %v832, %v940
      %942 = vdwg.mxu0
      %943 = vmatpush.bf16.msra.mxu0 %v814
      %944 = vmatpush.bf16.msra.mxu0 %v813
      %945 = vmatpush.bf16.msra.mxu0 %v812
      %946 = vmatpush.bf16.msra.mxu0 %v811
      %947 = vmatpush.bf16.msra.mxu0 %v810
      %948 = vmatpush.bf16.msra.mxu0 %v809
      %949 = vmatpush.bf16.msra.mxu0 %v808
      %950 = vmatpush.bf16.msra.mxu0 %v807
      %951 = vmatmul.bf16.gmra.mxu0 %v917
      %v952 = vpop.f32.mrf.mxu0
      %v953 = vadd.f32 %v934, %v952
      %v954 = vpop.f32.mrf.mxu0
      %v955 = vadd.f32 %v936, %v954
      %956 = vmatmul.bf16.gmra.mxu0 %v921
      %v957 = vpop.f32.mrf.mxu0
      %v958 = vadd.f32 %v939, %v957
      %v959 = vpop.f32.mrf.mxu0
      %v960 = vadd.f32 %v941, %v959
      %961 = vdwg.mxu0
      %962 = vmatpush.bf16.msra.mxu0 %v822
      %963 = vmatpush.bf16.msra.mxu0 %v821
      %964 = vmatpush.bf16.msra.mxu0 %v820
      %965 = vmatpush.bf16.msra.mxu0 %v819
      %966 = vmatpush.bf16.msra.mxu0 %v818
      %967 = vmatpush.bf16.msra.mxu0 %v817
      %968 = vmatpush.bf16.msra.mxu0 %v816
      %969 = vmatpush.bf16.msra.mxu0 %v815
      %970 = vmatmul.bf16.gmra.mxu0 %v918
      %v971 = vpop.f32.mrf.mxu0
      %v972 = vadd.f32 %v953, %v971
      %v973 = vpop.f32.mrf.mxu0
      %v974 = vadd.f32 %v955, %v973
      %975 = vmatmul.bf16.gmra.mxu0 %v922
      %v976 = vpop.f32.mrf.mxu0
      %v977 = vadd.f32 %v958, %v976
      %v978 = vpop.f32.mrf.mxu0
      %v979 = vadd.f32 %v960, %v978
      %980 = vdwg.mxu0
      %981 = vmatpush.bf16.msra.mxu0 %v830
      %982 = vmatpush.bf16.msra.mxu0 %v829
      %983 = vmatpush.bf16.msra.mxu0 %v828
      %984 = vmatpush.bf16.msra.mxu0 %v827
      %985 = vmatpush.bf16.msra.mxu0 %v826
      %986 = vmatpush.bf16.msra.mxu0 %v825
      %987 = vmatpush.bf16.msra.mxu0 %v824
      %988 = vmatpush.bf16.msra.mxu0 %v823
      %989 = vmatmul.bf16.gmra.mxu0 %v919
      %v990 = vpop.f32.mrf.mxu0
      %v991 = vadd.f32 %v972, %v990
      %v992 = vpop.f32.mrf.mxu0
      %v993 = vadd.f32 %v974, %v992
      %994 = vmatmul.bf16.gmra.mxu0 %v923
      %v995 = vpop.f32.mrf.mxu0
      %v996 = vadd.f32 %v977, %v995
      %v997 = vpop.f32.mrf.mxu0
      %v998 = vadd.f32 %v979, %v997
      %999 = vdwg.mxu0
      %v1000 = vmax.f32 %v991, 0.0
      %v1001 = vmax.f32 %v993, 0.0
      %v1002 = vmax.f32 %v996, 0.0
      %v1003 = vmax.f32 %v998, 0.0
      %v1004 = vpack.c.bf16 %v1001, %v1000
      %v1005 = vpack.c.bf16 %v1003, %v1002
      %v1006 = vld [vmem:[%s693] sm:$0xff]
      %v1007 = vld [vmem:[%s693 + $0x8] sm:$0xff]
      %v1008 = vld [vmem:[%s693 + $0x10] sm:$0xff]
      %v1009 = vld [vmem:[%s693 + $0x18] sm:$0xff]
      %v1010 = vld [vmem:[%s693 + $0x20] sm:$0xff]
      %v1011 = vld [vmem:[%s693 + $0x28] sm:$0xff]
      %v1012 = vld [vmem:[%s693 + $0x30] sm:$0xff]
      %v1013 = vld [vmem:[%s693 + $0x38] sm:$0xff]
      %v1014 = vpack.c.bf16 %v1007, %v1006
      %v1015 = vpack.c.bf16 %v1009, %v1008
      %v1016 = vpack.c.bf16 %v1011, %v1010
      %v1017 = vpack.c.bf16 %v1013, %v1012
      %v1019 = vperm.slane %v833, 0
      %vm1021 = vcmask 523264
      %v1023 = vsel %vm1021, %v1004, 0
      %v1026 = vsel %vm1021, %v1005, 0
      %1028 = vmatpush.bf16.msra.mxu0 0
      %1029 = vmatpush.bf16.msra.mxu0 0
      %1030 = vmatpush.bf16.msra.mxu0 0
      %1031 = vmatpush.bf16.msra.mxu0 0
      %1032 = vmatpush.bf16.msra.mxu0 %v1017
      %1033 = vmatpush.bf16.msra.mxu0 %v1016
      %1034 = vmatpush.bf16.msra.mxu0 %v1015
      %1035 = vmatpush.bf16.msra.mxu0 %v1014
      %1036 = vmatmul.bf16.gmra.mxu0 %v1023
      %v1037 = vpop.f32.mrf.mxu0
      %v1038 = vadd.f32 %v1019, %v1037
      %v1039 = vpop.f32.mrf.mxu0
      %v1040 = vadd.f32 %v1019, %v1039
      %1041 = vmatmul.bf16.gmra.mxu0 %v1026
      %v1042 = vpop.f32.mrf.mxu0
      %v1043 = vadd.f32 %v1019, %v1042
      %v1044 = vpop.f32.mrf.mxu0
      %v1045 = vadd.f32 %v1019, %v1044
      %1046 = vdwg.mxu0
      %v1047 = vmax.f32 %v1038, 0.0
      %v1048 = vmax.f32 %v1040, 0.0
      %v1049 = vmax.f32 %v1043, 0.0
      %v1050 = vmax.f32 %v1045, 0.0
      %v1051 = vpack.c.bf16 %v1048, %v1047
      %v1052 = vpack.c.bf16 %v1050, %v1049
      %v1053 = vperm.slane %v857, 0
      %vm1054 = vcmask 261120
      %v1056 = vsel %vm1054, %v1051, 0
      %v1059 = vsel %vm1054, %v1052, 0
      %1061 = vmatpush.bf16.msra.mxu0 0
      %1062 = vmatpush.bf16.msra.mxu0 0
      %1063 = vmatpush.bf16.msra.mxu0 0
      %1064 = vmatpush.bf16.msra.mxu0 0
      %1065 = vmatpush.bf16.msra.mxu0 0
      %1066 = vmatpush.bf16.msra.mxu0 0
      %1067 = vmatpush.bf16.msra.mxu0 %v839
      %1068 = vmatpush.bf16.msra.mxu0 %v838
      %1069 = vmatmul.bf16.gmra.mxu0 %v1056
      %v1070 = vpop.f32.mrf.mxu0
      %v1071 = vadd.f32 %v1053, %v1070
      %v1072 = vpop.f32.mrf.mxu0
      %v1073 = vadd.f32 %v1053, %v1072
      %1074 = vmatmul.bf16.gmra.mxu0 %v1059
      %v1075 = vpop.f32.mrf.mxu0
      %v1076 = vadd.f32 %v1053, %v1075
      %v1077 = vpop.f32.mrf.mxu0
      %v1078 = vadd.f32 %v1053, %v1077
      %1079 = vdwg.mxu0
      %v1080 = vtanh.pop %v1071
      %v1081 = vtanh.pop %v1073
      %v1082 = vtanh.pop %v1076
      %v1083 = vtanh.pop %v1078
      %s1084 = scalar_lea.vmem %s693, 64
      %v1085 = vld [vmem:[%s1084] sm:$0xff]
      %v1086 = vld [vmem:[%s1084 + $0x8] sm:$0xff]
      %v1087 = vld [vmem:[%s1084 + $0x10] sm:$0xff]
      %v1088 = vld [vmem:[%s1084 + $0x18] sm:$0xff]
      %v1089 = vld [vmem:[%s1084 + $0x20] sm:$0xff]
      %v1090 = vld [vmem:[%s1084 + $0x28] sm:$0xff]
      %v1091 = vld [vmem:[%s1084 + $0x30] sm:$0xff]
      %v1092 = vld [vmem:[%s1084 + $0x38] sm:$0xff]
      %v1093 = vpack.c.bf16 %v1086, %v1085
      %v1094 = vpack.c.bf16 %v1088, %v1087
      %v1095 = vpack.c.bf16 %v1090, %v1089
      %v1096 = vpack.c.bf16 %v1092, %v1091
      %1097 = vmatpush.bf16.msra.mxu0 0
      %1098 = vmatpush.bf16.msra.mxu0 0
      %1099 = vmatpush.bf16.msra.mxu0 0
      %1100 = vmatpush.bf16.msra.mxu0 0
      %1101 = vmatpush.bf16.msra.mxu0 %v1096
      %1102 = vmatpush.bf16.msra.mxu0 %v1095
      %1103 = vmatpush.bf16.msra.mxu0 %v1094
      %1104 = vmatpush.bf16.msra.mxu0 %v1093
      %1105 = vmatmul.bf16.gmra.mxu0 %v1023
      %v1106 = vpop.f32.mrf.mxu0
      %v1107 = vadd.f32 %v1019, %v1106
      %v1108 = vpop.f32.mrf.mxu0
      %v1109 = vadd.f32 %v1019, %v1108
      %1110 = vmatmul.bf16.gmra.mxu0 %v1026
      %v1111 = vpop.f32.mrf.mxu0
      %v1112 = vadd.f32 %v1019, %v1111
      %v1113 = vpop.f32.mrf.mxu0
      %v1114 = vadd.f32 %v1019, %v1113
      %1115 = vdwg.mxu0
      %v1116 = vmax.f32 %v1107, 0.0
      %v1117 = vmax.f32 %v1109, 0.0
      %v1118 = vmax.f32 %v1112, 0.0
      %v1119 = vmax.f32 %v1114, 0.0
      %v1120 = vpack.c.bf16 %v1117, %v1116
      %v1121 = vpack.c.bf16 %v1119, %v1118
      %v1123 = vsel %vm1054, %v1120, 0
      %v1126 = vsel %vm1054, %v1121, 0
      %1128 = vmatpush.bf16.msra.mxu0 0
      %1129 = vmatpush.bf16.msra.mxu0 0
      %1130 = vmatpush.bf16.msra.mxu0 0
      %1131 = vmatpush.bf16.msra.mxu0 0
      %1132 = vmatpush.bf16.msra.mxu0 0
      %1133 = vmatpush.bf16.msra.mxu0 0
      %1134 = vmatpush.bf16.msra.mxu0 %v839
      %1135 = vmatpush.bf16.msra.mxu0 %v838
      %1136 = vmatmul.bf16.gmra.mxu0 %v1123
      %v1137 = vpop.f32.mrf.mxu0
      %v1138 = vadd.f32 %v1053, %v1137
      %v1139 = vpop.f32.mrf.mxu0
      %v1140 = vadd.f32 %v1053, %v1139
      %1141 = vmatmul.bf16.gmra.mxu0 %v1126
      %v1142 = vpop.f32.mrf.mxu0
      %v1143 = vadd.f32 %v1053, %v1142
      %v1144 = vpop.f32.mrf.mxu0
      %v1145 = vadd.f32 %v1053, %v1144
      %1146 = vdwg.mxu0
      %v1147 = vtanh.pop %v1138
      %v1148 = vtanh.pop %v1140
      %v1149 = vtanh.pop %v1143
      %v1150 = vtanh.pop %v1145
      %s1151 = scalar_lea.vmem %s693, 128
      %v1152 = vld [vmem:[%s1151] sm:$0xff]
      %v1153 = vld [vmem:[%s1151 + $0x8] sm:$0xff]
      %v1154 = vld [vmem:[%s1151 + $0x10] sm:$0xff]
      %v1155 = vld [vmem:[%s1151 + $0x18] sm:$0xff]
      %v1156 = vld [vmem:[%s1151 + $0x20] sm:$0xff]
      %v1157 = vld [vmem:[%s1151 + $0x28] sm:$0xff]
      %v1158 = vld [vmem:[%s1151 + $0x30] sm:$0xff]
      %v1159 = vld [vmem:[%s1151 + $0x38] sm:$0xff]
      %v1160 = vpack.c.bf16 %v1153, %v1152
      %v1161 = vpack.c.bf16 %v1155, %v1154
      %v1162 = vpack.c.bf16 %v1157, %v1156
      %v1163 = vpack.c.bf16 %v1159, %v1158
      %1164 = vmatpush.bf16.msra.mxu0 0
      %1165 = vmatpush.bf16.msra.mxu0 0
      %1166 = vmatpush.bf16.msra.mxu0 0
      %1167 = vmatpush.bf16.msra.mxu0 0
      %1168 = vmatpush.bf16.msra.mxu0 %v1163
      %1169 = vmatpush.bf16.msra.mxu0 %v1162
      %1170 = vmatpush.bf16.msra.mxu0 %v1161
      %1171 = vmatpush.bf16.msra.mxu0 %v1160
      %1172 = vmatmul.bf16.gmra.mxu0 %v1023
      %v1173 = vpop.f32.mrf.mxu0
      %v1174 = vadd.f32 %v1019, %v1173
      %v1175 = vpop.f32.mrf.mxu0
      %v1176 = vadd.f32 %v1019, %v1175
      %1177 = vmatmul.bf16.gmra.mxu0 %v1026
      %v1178 = vpop.f32.mrf.mxu0
      %v1179 = vadd.f32 %v1019, %v1178
      %v1180 = vpop.f32.mrf.mxu0
      %v1181 = vadd.f32 %v1019, %v1180
      %1182 = vdwg.mxu0
      %v1183 = vmax.f32 %v1174, 0.0
      %v1184 = vmax.f32 %v1176, 0.0
      %v1185 = vmax.f32 %v1179, 0.0
      %v1186 = vmax.f32 %v1181, 0.0
      %v1187 = vpack.c.bf16 %v1184, %v1183
      %v1188 = vpack.c.bf16 %v1186, %v1185
      %v1190 = vsel %vm1054, %v1187, 0
      %v1193 = vsel %vm1054, %v1188, 0
      %1195 = vmatpush.bf16.msra.mxu0 0
      %1196 = vmatpush.bf16.msra.mxu0 0
      %1197 = vmatpush.bf16.msra.mxu0 0
      %1198 = vmatpush.bf16.msra.mxu0 0
      %1199 = vmatpush.bf16.msra.mxu0 0
      %1200 = vmatpush.bf16.msra.mxu0 0
      %1201 = vmatpush.bf16.msra.mxu0 %v839
      %1202 = vmatpush.bf16.msra.mxu0 %v838
      %1203 = vmatmul.bf16.gmra.mxu0 %v1190
      %v1204 = vpop.f32.mrf.mxu0
      %v1205 = vadd.f32 %v1053, %v1204
      %v1206 = vpop.f32.mrf.mxu0
      %v1207 = vadd.f32 %v1053, %v1206
      %1208 = vmatmul.bf16.gmra.mxu0 %v1193
      %v1209 = vpop.f32.mrf.mxu0
      %v1210 = vadd.f32 %v1053, %v1209
      %v1211 = vpop.f32.mrf.mxu0
      %v1212 = vadd.f32 %v1053, %v1211
      %1213 = vdwg.mxu0
      %v1214 = vtanh.pop %v1205
      %v1215 = vtanh.pop %v1207
      %v1216 = vtanh.pop %v1210
      %v1217 = vtanh.pop %v1212
      %s1218 = scalar_lea.vmem %s693, 192
      %v1219 = vld [vmem:[%s1218] sm:$0xff]
      %v1220 = vld [vmem:[%s1218 + $0x8] sm:$0xff]
      %v1221 = vld [vmem:[%s1218 + $0x10] sm:$0xff]
      %v1222 = vld [vmem:[%s1218 + $0x18] sm:$0xff]
      %v1223 = vld [vmem:[%s1218 + $0x20] sm:$0xff]
      %v1224 = vld [vmem:[%s1218 + $0x28] sm:$0xff]
      %v1225 = vld [vmem:[%s1218 + $0x30] sm:$0xff]
      %v1226 = vld [vmem:[%s1218 + $0x38] sm:$0xff]
      %v1227 = vpack.c.bf16 %v1220, %v1219
      %v1228 = vpack.c.bf16 %v1222, %v1221
      %v1229 = vpack.c.bf16 %v1224, %v1223
      %v1230 = vpack.c.bf16 %v1226, %v1225
      %1231 = vmatpush.bf16.msra.mxu0 0
      %1232 = vmatpush.bf16.msra.mxu0 0
      %1233 = vmatpush.bf16.msra.mxu0 0
      %1234 = vmatpush.bf16.msra.mxu0 0
      %1235 = vmatpush.bf16.msra.mxu0 %v1230
      %1236 = vmatpush.bf16.msra.mxu0 %v1229
      %1237 = vmatpush.bf16.msra.mxu0 %v1228
      %1238 = vmatpush.bf16.msra.mxu0 %v1227
      %1239 = vmatmul.bf16.gmra.mxu0 %v1023
      %v1240 = vpop.f32.mrf.mxu0
      %v1241 = vadd.f32 %v1019, %v1240
      %v1242 = vpop.f32.mrf.mxu0
      %v1243 = vadd.f32 %v1019, %v1242
      %1244 = vmatmul.bf16.gmra.mxu0 %v1026
      %v1245 = vpop.f32.mrf.mxu0
      %v1246 = vadd.f32 %v1019, %v1245
      %v1247 = vpop.f32.mrf.mxu0
      %v1248 = vadd.f32 %v1019, %v1247
      %1249 = vdwg.mxu0
      %v1250 = vmax.f32 %v1241, 0.0
      %v1251 = vmax.f32 %v1243, 0.0
      %v1252 = vmax.f32 %v1246, 0.0
      %v1253 = vmax.f32 %v1248, 0.0
      %v1254 = vpack.c.bf16 %v1251, %v1250
      %v1255 = vpack.c.bf16 %v1253, %v1252
      %v1257 = vsel %vm1054, %v1254, 0
      %v1260 = vsel %vm1054, %v1255, 0
      %1262 = vmatpush.bf16.msra.mxu0 0
      %1263 = vmatpush.bf16.msra.mxu0 0
      %1264 = vmatpush.bf16.msra.mxu0 0
      %1265 = vmatpush.bf16.msra.mxu0 0
      %1266 = vmatpush.bf16.msra.mxu0 0
      %1267 = vmatpush.bf16.msra.mxu0 0
      %1268 = vmatpush.bf16.msra.mxu0 %v839
      %1269 = vmatpush.bf16.msra.mxu0 %v838
      %1270 = vmatmul.bf16.gmra.mxu0 %v1257
      %v1271 = vpop.f32.mrf.mxu0
      %v1272 = vadd.f32 %v1053, %v1271
      %v1273 = vpop.f32.mrf.mxu0
      %v1274 = vadd.f32 %v1053, %v1273
      %1275 = vmatmul.bf16.gmra.mxu0 %v1260
      %v1276 = vpop.f32.mrf.mxu0
      %v1277 = vadd.f32 %v1053, %v1276
      %v1278 = vpop.f32.mrf.mxu0
      %v1279 = vadd.f32 %v1053, %v1278
      %1280 = vdwg.mxu0
      %v1281 = vtanh.pop %v1272
      %v1282 = vtanh.pop %v1274
      %v1283 = vtanh.pop %v1277
      %v1284 = vtanh.pop %v1279
      %v1285 = vld [vmem:[%s678] sm:$0xff]
      %v1286 = vld [vmem:[%s678 + $0x8] sm:$0xff]
      %v1287 = vld [vmem:[%s678 + $0x10] sm:$0xff]
      %v1288 = vld [vmem:[%s678 + $0x18] sm:$0xff]
      %s1289 = scalar_lea.vmem %s678, 32
      %v1290 = vld [vmem:[%s1289] sm:$0xff]
      %v1291 = vld [vmem:[%s1289 + $0x8] sm:$0xff]
      %v1292 = vld [vmem:[%s1289 + $0x10] sm:$0xff]
      %v1293 = vld [vmem:[%s1289 + $0x18] sm:$0xff]
      %s1294 = scalar_lea.vmem %s678, 64
      %v1295 = vld [vmem:[%s1294] sm:$0xff]
      %v1296 = vld [vmem:[%s1294 + $0x8] sm:$0xff]
      %v1297 = vld [vmem:[%s1294 + $0x10] sm:$0xff]
      %v1298 = vld [vmem:[%s1294 + $0x18] sm:$0xff]
      %s1299 = scalar_lea.vmem %s678, 96
      %v1300 = vld [vmem:[%s1299] sm:$0xff]
      %v1301 = vld [vmem:[%s1299 + $0x8] sm:$0xff]
      %v1302 = vld [vmem:[%s1299 + $0x10] sm:$0xff]
      %v1303 = vld [vmem:[%s1299 + $0x18] sm:$0xff]
      %v1304 = vpack.c.bf16 %v1286, %v1285
      %v1305 = vpack.c.bf16 %v1288, %v1287
      %v1307 = vperm.slane %v860, 0
      %vm1309 = vcmask 64512
      %v1311 = vsel %vm1309, %v1304, 0
      %v1314 = vsel %vm1309, %v1305, 0
      %vm1316 = vcmask 1043456
      %v1318 = vsel %vm1316, %v859, 0
      %1320 = vmatpush.bf16.msra.mxu0 0
      %1321 = vmatpush.bf16.msra.mxu0 0
      %1322 = vmatpush.bf16.msra.mxu0 0
      %1323 = vmatpush.bf16.msra.mxu0 0
      %1324 = vmatpush.bf16.msra.mxu0 0
      %1325 = vmatpush.bf16.msra.mxu0 0
      %1326 = vmatpush.bf16.msra.mxu0 0
      %1327 = vmatpush.bf16.msra.mxu0 %v1318
      %1328 = vmatmul.bf16.gmra.mxu0 %v1311
      %v1329 = vpop.f32.mrf.mxu0
      %v1330 = vadd.f32 %v1307, %v1329
      %v1331 = vpop.f32.mrf.mxu0
      %v1332 = vadd.f32 %v1307, %v1331
      %1333 = vmatmul.bf16.gmra.mxu0 %v1314
      %v1334 = vpop.f32.mrf.mxu0
      %v1335 = vadd.f32 %v1307, %v1334
      %v1336 = vpop.f32.mrf.mxu0
      %v1337 = vadd.f32 %v1307, %v1336
      %1338 = vdwg.mxu0
      %vm1339 = vcmp.gt.f32.partialorder %v1330, 0.0
      %vm1340 = vcmp.gt.f32.partialorder %v1332, 0.0
      %vm1341 = vcmp.gt.f32.partialorder %v1335, 0.0
      %vm1342 = vcmp.gt.f32.partialorder %v1337, 0.0
      %v1343 = vmul.f32 %v1330, 0.2
      %v1344 = vmul.f32 %v1332, 0.2
      %v1345 = vmul.f32 %v1335, 0.2
      %v1346 = vmul.f32 %v1337, 0.2
      %v1347 = vsel %vm1339, %v1330, %v1343
      %v1348 = vsel %vm1340, %v1332, %v1344
      %v1349 = vsel %vm1341, %v1335, %v1345
      %v1350 = vsel %vm1342, %v1337, %v1346
      %v1351 = vpack.c.bf16 %v1291, %v1290
      %v1352 = vpack.c.bf16 %v1293, %v1292
      %v1354 = vsel %vm1309, %v1351, 0
      %v1357 = vsel %vm1309, %v1352, 0
      %1359 = vmatpush.bf16.msra.mxu0 0
      %1360 = vmatpush.bf16.msra.mxu0 0
      %1361 = vmatpush.bf16.msra.mxu0 0
      %1362 = vmatpush.bf16.msra.mxu0 0
      %1363 = vmatpush.bf16.msra.mxu0 0
      %1364 = vmatpush.bf16.msra.mxu0 0
      %1365 = vmatpush.bf16.msra.mxu0 0
      %1366 = vmatpush.bf16.msra.mxu0 %v1318
      %1367 = vmatmul.bf16.gmra.mxu0 %v1354
      %v1368 = vpop.f32.mrf.mxu0
      %v1369 = vadd.f32 %v1307, %v1368
      %v1370 = vpop.f32.mrf.mxu0
      %v1371 = vadd.f32 %v1307, %v1370
      %1372 = vmatmul.bf16.gmra.mxu0 %v1357
      %v1373 = vpop.f32.mrf.mxu0
      %v1374 = vadd.f32 %v1307, %v1373
      %v1375 = vpop.f32.mrf.mxu0
      %v1376 = vadd.f32 %v1307, %v1375
      %1377 = vdwg.mxu0
      %vm1378 = vcmp.gt.f32.partialorder %v1369, 0.0
      %vm1379 = vcmp.gt.f32.partialorder %v1371, 0.0
      %vm1380 = vcmp.gt.f32.partialorder %v1374, 0.0
      %vm1381 = vcmp.gt.f32.partialorder %v1376, 0.0
      %v1382 = vmul.f32 %v1369, 0.2
      %v1383 = vmul.f32 %v1371, 0.2
      %v1384 = vmul.f32 %v1374, 0.2
      %v1385 = vmul.f32 %v1376, 0.2
      %v1386 = vsel %vm1378, %v1369, %v1382
      %v1387 = vsel %vm1379, %v1371, %v1383
      %v1388 = vsel %vm1380, %v1374, %v1384
      %v1389 = vsel %vm1381, %v1376, %v1385
      %v1390 = vpack.c.bf16 %v1296, %v1295
      %v1391 = vpack.c.bf16 %v1298, %v1297
      %v1393 = vsel %vm1309, %v1390, 0
      %v1396 = vsel %vm1309, %v1391, 0
      %1398 = vmatpush.bf16.msra.mxu0 0
      %1399 = vmatpush.bf16.msra.mxu0 0
      %1400 = vmatpush.bf16.msra.mxu0 0
      %1401 = vmatpush.bf16.msra.mxu0 0
      %1402 = vmatpush.bf16.msra.mxu0 0
      %1403 = vmatpush.bf16.msra.mxu0 0
      %1404 = vmatpush.bf16.msra.mxu0 0
      %1405 = vmatpush.bf16.msra.mxu0 %v1318
      %1406 = vmatmul.bf16.gmra.mxu0 %v1393
      %v1407 = vpop.f32.mrf.mxu0
      %v1408 = vadd.f32 %v1307, %v1407
      %v1409 = vpop.f32.mrf.mxu0
      %v1410 = vadd.f32 %v1307, %v1409
      %1411 = vmatmul.bf16.gmra.mxu0 %v1396
      %v1412 = vpop.f32.mrf.mxu0
      %v1413 = vadd.f32 %v1307, %v1412
      %v1414 = vpop.f32.mrf.mxu0
      %v1415 = vadd.f32 %v1307, %v1414
      %1416 = vdwg.mxu0
      %vm1417 = vcmp.gt.f32.partialorder %v1408, 0.0
      %vm1418 = vcmp.gt.f32.partialorder %v1410, 0.0
      %vm1419 = vcmp.gt.f32.partialorder %v1413, 0.0
      %vm1420 = vcmp.gt.f32.partialorder %v1415, 0.0
      %v1421 = vmul.f32 %v1408, 0.2
      %v1422 = vmul.f32 %v1410, 0.2
      %v1423 = vmul.f32 %v1413, 0.2
      %v1424 = vmul.f32 %v1415, 0.2
      %v1425 = vsel %vm1417, %v1408, %v1421
      %v1426 = vsel %vm1418, %v1410, %v1422
      %v1427 = vsel %vm1419, %v1413, %v1423
      %v1428 = vsel %vm1420, %v1415, %v1424
      %v1429 = vpack.c.bf16 %v1301, %v1300
      %v1430 = vpack.c.bf16 %v1303, %v1302
      %v1432 = vsel %vm1309, %v1429, 0
      %v1435 = vsel %vm1309, %v1430, 0
      %1437 = vmatpush.bf16.msra.mxu0 0
      %1438 = vmatpush.bf16.msra.mxu0 0
      %1439 = vmatpush.bf16.msra.mxu0 0
      %1440 = vmatpush.bf16.msra.mxu0 0
      %1441 = vmatpush.bf16.msra.mxu0 0
      %1442 = vmatpush.bf16.msra.mxu0 0
      %1443 = vmatpush.bf16.msra.mxu0 0
      %1444 = vmatpush.bf16.msra.mxu0 %v1318
      %1445 = vmatmul.bf16.gmra.mxu0 %v1432
      %v1446 = vpop.f32.mrf.mxu0
      %v1447 = vadd.f32 %v1307, %v1446
      %v1448 = vpop.f32.mrf.mxu0
      %v1449 = vadd.f32 %v1307, %v1448
      %1450 = vmatmul.bf16.gmra.mxu0 %v1435
      %v1451 = vpop.f32.mrf.mxu0
      %v1452 = vadd.f32 %v1307, %v1451
      %v1453 = vpop.f32.mrf.mxu0
      %v1454 = vadd.f32 %v1307, %v1453
      %1455 = vdwg.mxu0
      %vm1456 = vcmp.gt.f32.partialorder %v1447, 0.0
      %vm1457 = vcmp.gt.f32.partialorder %v1449, 0.0
      %vm1458 = vcmp.gt.f32.partialorder %v1452, 0.0
      %vm1459 = vcmp.gt.f32.partialorder %v1454, 0.0
      %v1460 = vmul.f32 %v1447, 0.2
      %v1461 = vmul.f32 %v1449, 0.2
      %v1462 = vmul.f32 %v1452, 0.2
      %v1463 = vmul.f32 %v1454, 0.2
      %v1464 = vsel %vm1456, %v1447, %v1460
      %v1465 = vsel %vm1457, %v1449, %v1461
      %v1466 = vsel %vm1458, %v1452, %v1462
      %v1467 = vsel %vm1459, %v1454, %v1463
      %1472 = vrot.lane.b32.xlu0 %v1386, 32
      %v1473 = vpop.permute.xlu0 %1472
      %1474 = vrot.lane.b32.xlu0 %v1387, 32
      %v1475 = vpop.permute.xlu0 %1474
      %1476 = vrot.lane.b32.xlu0 %v1388, 32
      %v1477 = vpop.permute.xlu0 %1476
      %1478 = vrot.lane.b32.xlu0 %v1389, 32
      %v1479 = vpop.permute.xlu0 %1478
      %1488 = vrot.lane.b32.xlu0 %v1425, 64
      %v1489 = vpop.permute.xlu0 %1488
      %1490 = vrot.lane.b32.xlu0 %v1426, 64
      %v1491 = vpop.permute.xlu0 %1490
      %1492 = vrot.lane.b32.xlu0 %v1427, 64
      %v1493 = vpop.permute.xlu0 %1492
      %1494 = vrot.lane.b32.xlu0 %v1428, 64
      %v1495 = vpop.permute.xlu0 %1494
      %1504 = vrot.lane.b32.xlu0 %v1464, 96
      %v1505 = vpop.permute.xlu0 %1504
      %1506 = vrot.lane.b32.xlu0 %v1465, 96
      %v1507 = vpop.permute.xlu0 %1506
      %1508 = vrot.lane.b32.xlu0 %v1466, 96
      %v1509 = vpop.permute.xlu0 %1508
      %1510 = vrot.lane.b32.xlu0 %v1467, 96
      %v1511 = vpop.permute.xlu0 %1510
      %v1516 = vsel %vm1054, %v1347, %v1473
      %v1517 = vsel %vm1054, %v1348, %v1475
      %v1518 = vsel %vm1054, %v1349, %v1477
      %v1519 = vsel %vm1054, %v1350, %v1479
      %v1520 = vsel %vm1021, %v1516, %v1489
      %v1521 = vsel %vm1021, %v1517, %v1491
      %v1522 = vsel %vm1021, %v1518, %v1493
      %v1523 = vsel %vm1021, %v1519, %v1495
      %vm1524 = vcmask 785408
      %v1525 = vsel %vm1524, %v1520, %v1505
      %v1526 = vsel %vm1524, %v1521, %v1507
      %v1527 = vsel %vm1524, %v1522, %v1509
      %v1528 = vsel %vm1524, %v1523, %v1511
      %v1529 = vpack.c.bf16 %v1526, %v1525
      %v1530 = vpack.c.bf16 %v1528, %v1527
      %v1532 = vperm.slane %v885, 0
      %1534 = vmatpush.bf16.msra.mxu0 %v884
      %1535 = vmatpush.bf16.msra.mxu0 %v883
      %1536 = vmatpush.bf16.msra.mxu0 %v882
      %1537 = vmatpush.bf16.msra.mxu0 %v881
      %1538 = vmatpush.bf16.msra.mxu0 %v880
      %1539 = vmatpush.bf16.msra.mxu0 %v879
      %1540 = vmatpush.bf16.msra.mxu0 %v878
      %1541 = vmatpush.bf16.msra.mxu0 %v877
      %1542 = vmatmul.bf16.gmra.mxu0 %v1529
      %v1543 = vpop.f32.mrf.mxu0
      %v1544 = vadd.f32 %v1532, %v1543
      %v1545 = vpop.f32.mrf.mxu0
      %v1546 = vadd.f32 %v1532, %v1545
      %1547 = vmatmul.bf16.gmra.mxu0 %v1530
      %v1548 = vpop.f32.mrf.mxu0
      %v1549 = vadd.f32 %v1532, %v1548
      %v1550 = vpop.f32.mrf.mxu0
      %v1551 = vadd.f32 %v1532, %v1550
      %1552 = vdwg.mxu0
      %vm1553 = vcmp.gt.f32.partialorder %v1544, 0.0
      %vm1554 = vcmp.gt.f32.partialorder %v1546, 0.0
      %vm1555 = vcmp.gt.f32.partialorder %v1549, 0.0
      %vm1556 = vcmp.gt.f32.partialorder %v1551, 0.0
      %v1557 = vmul.f32 %v1544, 0.2
      %v1558 = vmul.f32 %v1546, 0.2
      %v1559 = vmul.f32 %v1549, 0.2
      %v1560 = vmul.f32 %v1551, 0.2
      %v1561 = vsel %vm1553, %v1544, %v1557
      %v1562 = vsel %vm1554, %v1546, %v1558
      %v1563 = vsel %vm1555, %v1549, %v1559
      %v1564 = vsel %vm1556, %v1551, %v1560
      %v1565 = vmul.f32 %v1561, %v886
      %v1566 = vmul.f32 %v1562, %v887
      %v1567 = vmul.f32 %v1563, %v886
      %v1568 = vmul.f32 %v1564, %v887
      %v1570 = vsel %vm1054, %v899, 0
      %1572 = vmatpush.msra.mxu0 0.0
      %1573 = vmatpush.msra.mxu0 0.0
      %1574 = vmatpush.msra.mxu0 0.0
      %1575 = vmatpush.msra.mxu0 0.0
      %1576 = vmatpush.msra.mxu0 0.0
      %1577 = vmatpush.msra.mxu0 0.0
      %1578 = vmatpush.msra.mxu0 0.0
      %1579 = vmatpush.msra.mxu0 0.0
      %1580 = vmatpush.msra.mxu0 0.0
      %1581 = vmatpush.msra.mxu0 0.0
      %1582 = vmatpush.msra.mxu0 0.0
      %1583 = vmatpush.msra.mxu0 0.0
      %1584 = vmatpush.msra.mxu0 %v1568
      %1585 = vmatpush.msra.mxu0 %v1567
      %1586 = vmatpush.msra.mxu0 %v1566
      %1587 = vmatpush.msra.mxu0 %v1565
      %1588 = vmatmul.f32.gmra.mxu0 %v1570
      %v1589 = vpop.f32.mrf.mxu0
      %v1590 = vadd.f32 0.0, %v1589
      %1591 = vdwg.mxu0
      %vm1592 = vcmask 517120
      %v1593 = vsel %vm1592, %v1590, 0.0
      %1594 = vadd.xlane.f32.xlu0 %v1593
      %v1595 = vpop.xlane.xlu0 %1594
      %v1597 = vperm.slane %v888, 0
      %v1599 = vadd.f32 %v1595, %v1597
      %v1600 = vpack.c.bf16 %v1081, %v1080
      %v1601 = vpack.c.bf16 %v1083, %v1082
      %v1603 = vsel %vm1309, %v1600, 0
      %v1606 = vsel %vm1309, %v1601, 0
      %1608 = vmatpush.bf16.msra.mxu0 0
      %1609 = vmatpush.bf16.msra.mxu0 0
      %1610 = vmatpush.bf16.msra.mxu0 0
      %1611 = vmatpush.bf16.msra.mxu0 0
      %1612 = vmatpush.bf16.msra.mxu0 0
      %1613 = vmatpush.bf16.msra.mxu0 0
      %1614 = vmatpush.bf16.msra.mxu0 0
      %1615 = vmatpush.bf16.msra.mxu0 %v1318
      %1616 = vmatmul.bf16.gmra.mxu0 %v1603
      %v1617 = vpop.f32.mrf.mxu0
      %v1618 = vadd.f32 %v1307, %v1617
      %v1619 = vpop.f32.mrf.mxu0
      %v1620 = vadd.f32 %v1307, %v1619
      %1621 = vmatmul.bf16.gmra.mxu0 %v1606
      %v1622 = vpop.f32.mrf.mxu0
      %v1623 = vadd.f32 %v1307, %v1622
      %v1624 = vpop.f32.mrf.mxu0
      %v1625 = vadd.f32 %v1307, %v1624
      %1626 = vdwg.mxu0
      %vm1627 = vcmp.gt.f32.partialorder %v1618, 0.0
      %vm1628 = vcmp.gt.f32.partialorder %v1620, 0.0
      %vm1629 = vcmp.gt.f32.partialorder %v1623, 0.0
      %vm1630 = vcmp.gt.f32.partialorder %v1625, 0.0
      %v1631 = vmul.f32 %v1618, 0.2
      %v1632 = vmul.f32 %v1620, 0.2
      %v1633 = vmul.f32 %v1623, 0.2
      %v1634 = vmul.f32 %v1625, 0.2
      %v1635 = vsel %vm1627, %v1618, %v1631
      %v1636 = vsel %vm1628, %v1620, %v1632
      %v1637 = vsel %vm1629, %v1623, %v1633
      %v1638 = vsel %vm1630, %v1625, %v1634
      %v1639 = vpack.c.bf16 %v1148, %v1147
      %v1640 = vpack.c.bf16 %v1150, %v1149
      %v1642 = vsel %vm1309, %v1639, 0
      %v1645 = vsel %vm1309, %v1640, 0
      %1647 = vmatpush.bf16.msra.mxu0 0
      %1648 = vmatpush.bf16.msra.mxu0 0
      %1649 = vmatpush.bf16.msra.mxu0 0
      %1650 = vmatpush.bf16.msra.mxu0 0
      %1651 = vmatpush.bf16.msra.mxu0 0
      %1652 = vmatpush.bf16.msra.mxu0 0
      %1653 = vmatpush.bf16.msra.mxu0 0
      %1654 = vmatpush.bf16.msra.mxu0 %v1318
      %1655 = vmatmul.bf16.gmra.mxu0 %v1642
      %v1656 = vpop.f32.mrf.mxu0
      %v1657 = vadd.f32 %v1307, %v1656
      %v1658 = vpop.f32.mrf.mxu0
      %v1659 = vadd.f32 %v1307, %v1658
      %1660 = vmatmul.bf16.gmra.mxu0 %v1645
      %v1661 = vpop.f32.mrf.mxu0
      %v1662 = vadd.f32 %v1307, %v1661
      %v1663 = vpop.f32.mrf.mxu0
      %v1664 = vadd.f32 %v1307, %v1663
      %1665 = vdwg.mxu0
      %vm1666 = vcmp.gt.f32.partialorder %v1657, 0.0
      %vm1667 = vcmp.gt.f32.partialorder %v1659, 0.0
      %vm1668 = vcmp.gt.f32.partialorder %v1662, 0.0
      %vm1669 = vcmp.gt.f32.partialorder %v1664, 0.0
      %v1670 = vmul.f32 %v1657, 0.2
      %v1671 = vmul.f32 %v1659, 0.2
      %v1672 = vmul.f32 %v1662, 0.2
      %v1673 = vmul.f32 %v1664, 0.2
      %v1674 = vsel %vm1666, %v1657, %v1670
      %v1675 = vsel %vm1667, %v1659, %v1671
      %v1676 = vsel %vm1668, %v1662, %v1672
      %v1677 = vsel %vm1669, %v1664, %v1673
      %v1678 = vpack.c.bf16 %v1215, %v1214
      %v1679 = vpack.c.bf16 %v1217, %v1216
      %v1681 = vsel %vm1309, %v1678, 0
      %v1684 = vsel %vm1309, %v1679, 0
      %1686 = vmatpush.bf16.msra.mxu0 0
      %1687 = vmatpush.bf16.msra.mxu0 0
      %1688 = vmatpush.bf16.msra.mxu0 0
      %1689 = vmatpush.bf16.msra.mxu0 0
      %1690 = vmatpush.bf16.msra.mxu0 0
      %1691 = vmatpush.bf16.msra.mxu0 0
      %1692 = vmatpush.bf16.msra.mxu0 0
      %1693 = vmatpush.bf16.msra.mxu0 %v1318
      %1694 = vmatmul.bf16.gmra.mxu0 %v1681
      %v1695 = vpop.f32.mrf.mxu0
      %v1696 = vadd.f32 %v1307, %v1695
      %v1697 = vpop.f32.mrf.mxu0
      %v1698 = vadd.f32 %v1307, %v1697
      %1699 = vmatmul.bf16.gmra.mxu0 %v1684
      %v1700 = vpop.f32.mrf.mxu0
      %v1701 = vadd.f32 %v1307, %v1700
      %v1702 = vpop.f32.mrf.mxu0
      %v1703 = vadd.f32 %v1307, %v1702
      %1704 = vdwg.mxu0
      %vm1705 = vcmp.gt.f32.partialorder %v1696, 0.0
      %vm1706 = vcmp.gt.f32.partialorder %v1698, 0.0
      %vm1707 = vcmp.gt.f32.partialorder %v1701, 0.0
      %vm1708 = vcmp.gt.f32.partialorder %v1703, 0.0
      %v1709 = vmul.f32 %v1696, 0.2
      %v1710 = vmul.f32 %v1698, 0.2
      %v1711 = vmul.f32 %v1701, 0.2
      %v1712 = vmul.f32 %v1703, 0.2
      %v1713 = vsel %vm1705, %v1696, %v1709
      %v1714 = vsel %vm1706, %v1698, %v1710
      %v1715 = vsel %vm1707, %v1701, %v1711
      %v1716 = vsel %vm1708, %v1703, %v1712
      %v1717 = vpack.c.bf16 %v1282, %v1281
      %v1718 = vpack.c.bf16 %v1284, %v1283
      %v1720 = vsel %vm1309, %v1717, 0
      %v1723 = vsel %vm1309, %v1718, 0
      %1725 = vmatpush.bf16.msra.mxu0 0
      %1726 = vmatpush.bf16.msra.mxu0 0
      %1727 = vmatpush.bf16.msra.mxu0 0
      %1728 = vmatpush.bf16.msra.mxu0 0
      %1729 = vmatpush.bf16.msra.mxu0 0
      %1730 = vmatpush.bf16.msra.mxu0 0
      %1731 = vmatpush.bf16.msra.mxu0 0
      %1732 = vmatpush.bf16.msra.mxu0 %v1318
      %1733 = vmatmul.bf16.gmra.mxu0 %v1720
      %v1734 = vpop.f32.mrf.mxu0
      %v1735 = vadd.f32 %v1307, %v1734
      %v1736 = vpop.f32.mrf.mxu0
      %v1737 = vadd.f32 %v1307, %v1736
      %1738 = vmatmul.bf16.gmra.mxu0 %v1723
      %v1739 = vpop.f32.mrf.mxu0
      %v1740 = vadd.f32 %v1307, %v1739
      %v1741 = vpop.f32.mrf.mxu0
      %v1742 = vadd.f32 %v1307, %v1741
      %1743 = vdwg.mxu0
      %vm1744 = vcmp.gt.f32.partialorder %v1735, 0.0
      %vm1745 = vcmp.gt.f32.partialorder %v1737, 0.0
      %vm1746 = vcmp.gt.f32.partialorder %v1740, 0.0
      %vm1747 = vcmp.gt.f32.partialorder %v1742, 0.0
      %v1748 = vmul.f32 %v1735, 0.2
      %v1749 = vmul.f32 %v1737, 0.2
      %v1750 = vmul.f32 %v1740, 0.2
      %v1751 = vmul.f32 %v1742, 0.2
      %v1752 = vsel %vm1744, %v1735, %v1748
      %v1753 = vsel %vm1745, %v1737, %v1749
      %v1754 = vsel %vm1746, %v1740, %v1750
      %v1755 = vsel %vm1747, %v1742, %v1751
      %1760 = vrot.lane.b32.xlu0 %v1674, 32
      %v1761 = vpop.permute.xlu0 %1760
      %1762 = vrot.lane.b32.xlu0 %v1675, 32
      %v1763 = vpop.permute.xlu0 %1762
      %1764 = vrot.lane.b32.xlu0 %v1676, 32
      %v1765 = vpop.permute.xlu0 %1764
      %1766 = vrot.lane.b32.xlu0 %v1677, 32
      %v1767 = vpop.permute.xlu0 %1766
      %1776 = vrot.lane.b32.xlu0 %v1713, 64
      %v1777 = vpop.permute.xlu0 %1776
      %1778 = vrot.lane.b32.xlu0 %v1714, 64
      %v1779 = vpop.permute.xlu0 %1778
      %1780 = vrot.lane.b32.xlu0 %v1715, 64
      %v1781 = vpop.permute.xlu0 %1780
      %1782 = vrot.lane.b32.xlu0 %v1716, 64
      %v1783 = vpop.permute.xlu0 %1782
      %1792 = vrot.lane.b32.xlu0 %v1752, 96
      %v1793 = vpop.permute.xlu0 %1792
      %1794 = vrot.lane.b32.xlu0 %v1753, 96
      %v1795 = vpop.permute.xlu0 %1794
      %1796 = vrot.lane.b32.xlu0 %v1754, 96
      %v1797 = vpop.permute.xlu0 %1796
      %1798 = vrot.lane.b32.xlu0 %v1755, 96
      %v1799 = vpop.permute.xlu0 %1798
      %v1804 = vsel %vm1054, %v1635, %v1761
      %v1805 = vsel %vm1054, %v1636, %v1763
      %v1806 = vsel %vm1054, %v1637, %v1765
      %v1807 = vsel %vm1054, %v1638, %v1767
      %v1808 = vsel %vm1021, %v1804, %v1777
      %v1809 = vsel %vm1021, %v1805, %v1779
      %v1810 = vsel %vm1021, %v1806, %v1781
      %v1811 = vsel %vm1021, %v1807, %v1783
      %v1812 = vsel %vm1524, %v1808, %v1793
      %v1813 = vsel %vm1524, %v1809, %v1795
      %v1814 = vsel %vm1524, %v1810, %v1797
      %v1815 = vsel %vm1524, %v1811, %v1799
      %v1816 = vpack.c.bf16 %v1813, %v1812
      %v1817 = vpack.c.bf16 %v1815, %v1814
      %1818 = vmatpush.bf16.msra.mxu0 %v884
      %1819 = vmatpush.bf16.msra.mxu0 %v883
      %1820 = vmatpush.bf16.msra.mxu0 %v882
      %1821 = vmatpush.bf16.msra.mxu0 %v881
      %1822 = vmatpush.bf16.msra.mxu0 %v880
      %1823 = vmatpush.bf16.msra.mxu0 %v879
      %1824 = vmatpush.bf16.msra.mxu0 %v878
      %1825 = vmatpush.bf16.msra.mxu0 %v877
      %1826 = vmatmul.bf16.gmra.mxu0 %v1816
      %v1827 = vpop.f32.mrf.mxu0
      %v1828 = vadd.f32 %v1532, %v1827
      %v1829 = vpop.f32.mrf.mxu0
      %v1830 = vadd.f32 %v1532, %v1829
      %1831 = vmatmul.bf16.gmra.mxu0 %v1817
      %v1832 = vpop.f32.mrf.mxu0
      %v1833 = vadd.f32 %v1532, %v1832
      %v1834 = vpop.f32.mrf.mxu0
      %v1835 = vadd.f32 %v1532, %v1834
      %1836 = vdwg.mxu0
      %vm1837 = vcmp.gt.f32.partialorder %v1828, 0.0
      %vm1838 = vcmp.gt.f32.partialorder %v1830, 0.0
      %vm1839 = vcmp.gt.f32.partialorder %v1833, 0.0
      %vm1840 = vcmp.gt.f32.partialorder %v1835, 0.0
      %v1841 = vmul.f32 %v1828, 0.2
      %v1842 = vmul.f32 %v1830, 0.2
      %v1843 = vmul.f32 %v1833, 0.2
      %v1844 = vmul.f32 %v1835, 0.2
      %v1845 = vsel %vm1837, %v1828, %v1841
      %v1846 = vsel %vm1838, %v1830, %v1842
      %v1847 = vsel %vm1839, %v1833, %v1843
      %v1848 = vsel %vm1840, %v1835, %v1844
      %v1849 = vmul.f32 %v1845, %v886
      %v1850 = vmul.f32 %v1846, %v887
      %v1851 = vmul.f32 %v1847, %v886
      %v1852 = vmul.f32 %v1848, %v887
      %1853 = vmatpush.msra.mxu0 0.0
      %1854 = vmatpush.msra.mxu0 0.0
      %1855 = vmatpush.msra.mxu0 0.0
      %1856 = vmatpush.msra.mxu0 0.0
      %1857 = vmatpush.msra.mxu0 0.0
      %1858 = vmatpush.msra.mxu0 0.0
      %1859 = vmatpush.msra.mxu0 0.0
      %1860 = vmatpush.msra.mxu0 0.0
      %1861 = vmatpush.msra.mxu0 0.0
      %1862 = vmatpush.msra.mxu0 0.0
      %1863 = vmatpush.msra.mxu0 0.0
      %1864 = vmatpush.msra.mxu0 0.0
      %1865 = vmatpush.msra.mxu0 %v1852
      %1866 = vmatpush.msra.mxu0 %v1851
      %1867 = vmatpush.msra.mxu0 %v1850
      %1868 = vmatpush.msra.mxu0 %v1849
      %1869 = vmatmul.f32.gmra.mxu0 %v1570
      %v1870 = vpop.f32.mrf.mxu0
      %v1871 = vadd.f32 0.0, %v1870
      %1872 = vdwg.mxu0
      %v1873 = vsel %vm1592, %v1871, 0.0
      %1874 = vadd.xlane.f32.xlu0 %v1873
      %v1875 = vpop.xlane.xlu0 %1874
      %v1876 = vadd.f32 %v1875, %v1597
      %v1877 = vsub.f32 0.0, %v1599
      %v1878 = vmax.f32 %v1877, 0.0
      %v1879 = vand.u32 2147483647, %v1877
      %v1880 = vsub.f32 0.0, %v1879
      %v1881 = vmul.f32 %v1880, 1.442695
      %v1882 = vpow.pop %v1881
      %v1883 = vadd.f32 %v1882, 1.0
      %v1884 = vlog2.pop %v1883
      %v1885 = vmul.f32 %v1884, 0.6931472
      %v1886 = vadd.f32 %v1878, %v1885
      %v1887 = vmax.f32 %v1876, 0.0
      %v1888 = vand.u32 2147483647, %v1876
      %v1889 = vsub.f32 0.0, %v1888
      %v1890 = vmul.f32 %v1889, 1.442695
      %v1891 = vpow.pop %v1890
      %v1892 = vadd.f32 %v1891, 1.0
      %v1893 = vlog2.pop %v1892
      %v1894 = vmul.f32 %v1893, 0.6931472
      %v1895 = vadd.f32 %v1887, %v1894
      %v1896 = vadd.f32 %v1886, %v1895
      %vm1897 = vcmask 1024
      %v1898 = vsel %vm1897, %v1896, 0.0
      %1899 = vadd.xlane.f32.xlu0 %v1898
      %v1900 = vpop.xlane.xlu0 %1899
      %v1901 = vrot.slane %v1900, 4
      %v1902 = vadd.f32 %v1900, %v1901
      %v1903 = vrot.slane %v1902, 2
      %v1904 = vadd.f32 %v1902, %v1903
      %v1905 = vrot.slane %v1904, 1
      %v1906 = vadd.f32 %v1904, %v1905
      %s1907 = vtos %v1906
      %v1908 = vrcp.pop 2.0
      %v1909 = vmul.f32 2.0, %v1908
      %v1910 = vsub.f32 1.0, %v1909
      %v1911 = vmul.f32 %v1908, %v1910
      %v1912 = vadd.f32 %v1908, %v1911
      %vm1913 = vweird.f32 %v1908
      %v1914 = vsel %vm1913, %v1908, %v1912
      %s1915 = vtos %v1914
      %s1916 = smul.f32 %s1907, %s1915
      %v1917 = vld [vmem:[%s1] sm:$0xff]
      %v1918 = vld [vmem:[%s1 + $0x8] sm:$0xff]
      %v1919 = vld [vmem:[%s1 + $0x10] sm:$0xff]
      %v1920 = vld [vmem:[%s1 + $0x18] sm:$0xff]
      %v1921 = vld [vmem:[%s1 + $0x20] sm:$0xff]
      %v1922 = vld [vmem:[%s1 + $0x28] sm:$0xff]
      %v1923 = vld [vmem:[%s1 + $0x30] sm:$0xff]
      %v1924 = vld [vmem:[%s1 + $0x38] sm:$0xff]
      %v1925 = vld [vmem:[%s1 + $0x40] sm:$0xff]
      %v1926 = vld [vmem:[%s1 + $0x48] sm:$0xff]
      %v1927 = vld [vmem:[%s1 + $0x50] sm:$0xff]
      %v1928 = vld [vmem:[%s1 + $0x58] sm:$0xff]
      %v1929 = vld [vmem:[%s1 + $0x60] sm:$0xff]
      %v1930 = vld [vmem:[%s1 + $0x68] sm:$0xff]
      %v1931 = vld [vmem:[%s1 + $0x70] sm:$0xff]
      %v1932 = vld [vmem:[%s1 + $0x78] sm:$0xff]
      %v1933 = vpack.c.bf16 %v1921, %v1917
      %v1934 = vpack.c.bf16 %v1922, %v1918
      %v1935 = vpack.c.bf16 %v1923, %v1919
      %v1936 = vpack.c.bf16 %v1924, %v1920
      %v1937 = vpack.c.bf16 %v1929, %v1925
      %v1938 = vpack.c.bf16 %v1930, %v1926
      %v1939 = vpack.c.bf16 %v1931, %v1927
      %v1940 = vpack.c.bf16 %v1932, %v1928
      %1941 = vmatpush.bf16.msra.mxu0 %v806
      %1942 = vmatpush.bf16.msra.mxu0 %v805
      %1943 = vmatpush.bf16.msra.mxu0 %v804
      %1944 = vmatpush.bf16.msra.mxu0 %v803
      %1945 = vmatpush.bf16.msra.mxu0 %v802
      %1946 = vmatpush.bf16.msra.mxu0 %v801
      %1947 = vmatpush.bf16.msra.mxu0 %v800
      %1948 = vmatpush.bf16.msra.mxu0 %v799
      %1949 = vmatmul.bf16.gmra.mxu0 %v1933
      %v1950 = vpop.f32.mrf.mxu0
      %v1951 = vadd.f32 %v831, %v1950
      %v1952 = vpop.f32.mrf.mxu0
      %v1953 = vadd.f32 %v832, %v1952
      %1954 = vmatmul.bf16.gmra.mxu0 %v1937
      %v1955 = vpop.f32.mrf.mxu0
      %v1956 = vadd.f32 %v831, %v1955
      %v1957 = vpop.f32.mrf.mxu0
      %v1958 = vadd.f32 %v832, %v1957
      %1959 = vdwg.mxu0
      %1960 = vmatpush.bf16.msra.mxu0 %v814
      %1961 = vmatpush.bf16.msra.mxu0 %v813
      %1962 = vmatpush.bf16.msra.mxu0 %v812
      %1963 = vmatpush.bf16.msra.mxu0 %v811
      %1964 = vmatpush.bf16.msra.mxu0 %v810
      %1965 = vmatpush.bf16.msra.mxu0 %v809
      %1966 = vmatpush.bf16.msra.mxu0 %v808
      %1967 = vmatpush.bf16.msra.mxu0 %v807
      %1968 = vmatmul.bf16.gmra.mxu0 %v1934
      %v1969 = vpop.f32.mrf.mxu0
      %v1970 = vadd.f32 %v1951, %v1969
      %v1971 = vpop.f32.mrf.mxu0
      %v1972 = vadd.f32 %v1953, %v1971
      %1973 = vmatmul.bf16.gmra.mxu0 %v1938
      %v1974 = vpop.f32.mrf.mxu0
      %v1975 = vadd.f32 %v1956, %v1974
      %v1976 = vpop.f32.mrf.mxu0
      %v1977 = vadd.f32 %v1958, %v1976
      %1978 = vdwg.mxu0
      %1979 = vmatpush.bf16.msra.mxu0 %v822
      %1980 = vmatpush.bf16.msra.mxu0 %v821
      %1981 = vmatpush.bf16.msra.mxu0 %v820
      %1982 = vmatpush.bf16.msra.mxu0 %v819
      %1983 = vmatpush.bf16.msra.mxu0 %v818
      %1984 = vmatpush.bf16.msra.mxu0 %v817
      %1985 = vmatpush.bf16.msra.mxu0 %v816
      %1986 = vmatpush.bf16.msra.mxu0 %v815
      %1987 = vmatmul.bf16.gmra.mxu0 %v1935
      %v1988 = vpop.f32.mrf.mxu0
      %v1989 = vadd.f32 %v1970, %v1988
      %v1990 = vpop.f32.mrf.mxu0
      %v1991 = vadd.f32 %v1972, %v1990
      %1992 = vmatmul.bf16.gmra.mxu0 %v1939
      %v1993 = vpop.f32.mrf.mxu0
      %v1994 = vadd.f32 %v1975, %v1993
      %v1995 = vpop.f32.mrf.mxu0
      %v1996 = vadd.f32 %v1977, %v1995
      %1997 = vdwg.mxu0
      %1998 = vmatpush.bf16.msra.mxu0 %v830
      %1999 = vmatpush.bf16.msra.mxu0 %v829
      %2000 = vmatpush.bf16.msra.mxu0 %v828
      %2001 = vmatpush.bf16.msra.mxu0 %v827
      %2002 = vmatpush.bf16.msra.mxu0 %v826
      %2003 = vmatpush.bf16.msra.mxu0 %v825
      %2004 = vmatpush.bf16.msra.mxu0 %v824
      %2005 = vmatpush.bf16.msra.mxu0 %v823
      %2006 = vmatmul.bf16.gmra.mxu0 %v1936
      %v2007 = vpop.f32.mrf.mxu0
      %v2008 = vadd.f32 %v1989, %v2007
      %v2009 = vpop.f32.mrf.mxu0
      %v2010 = vadd.f32 %v1991, %v2009
      %2011 = vmatmul.bf16.gmra.mxu0 %v1940
      %v2012 = vpop.f32.mrf.mxu0
      %v2013 = vadd.f32 %v1994, %v2012
      %v2014 = vpop.f32.mrf.mxu0
      %v2015 = vadd.f32 %v1996, %v2014
      %2016 = vdwg.mxu0
      %v2017 = vmax.f32 %v2008, 0.0
      %v2018 = vmax.f32 %v2010, 0.0
      %v2019 = vmax.f32 %v2013, 0.0
      %v2020 = vmax.f32 %v2015, 0.0
      %v2021 = vpack.c.bf16 %v2018, %v2017
      %v2022 = vpack.c.bf16 %v2020, %v2019
      %v2024 = vsel %vm1021, %v2021, 0
      %v2027 = vsel %vm1021, %v2022, 0
      %2029 = vmatpush.bf16.msra.mxu0 0
      %2030 = vmatpush.bf16.msra.mxu0 0
      %2031 = vmatpush.bf16.msra.mxu0 0
      %2032 = vmatpush.bf16.msra.mxu0 0
      %2033 = vmatpush.bf16.msra.mxu0 %v1017
      %2034 = vmatpush.bf16.msra.mxu0 %v1016
      %2035 = vmatpush.bf16.msra.mxu0 %v1015
      %2036 = vmatpush.bf16.msra.mxu0 %v1014
      %2037 = vmatmul.bf16.gmra.mxu0 %v2024
      %v2038 = vpop.f32.mrf.mxu0
      %v2039 = vadd.f32 %v1019, %v2038
      %v2040 = vpop.f32.mrf.mxu0
      %v2041 = vadd.f32 %v1019, %v2040
      %2042 = vmatmul.bf16.gmra.mxu0 %v2027
      %v2043 = vpop.f32.mrf.mxu0
      %v2044 = vadd.f32 %v1019, %v2043
      %v2045 = vpop.f32.mrf.mxu0
      %v2046 = vadd.f32 %v1019, %v2045
      %2047 = vdwg.mxu0
      %v2048 = vmax.f32 %v2039, 0.0
      %v2049 = vmax.f32 %v2041, 0.0
      %v2050 = vmax.f32 %v2044, 0.0
      %v2051 = vmax.f32 %v2046, 0.0
      %v2052 = vpack.c.bf16 %v2049, %v2048
      %v2053 = vpack.c.bf16 %v2051, %v2050
      %v2055 = vsel %vm1054, %v2052, 0
      %v2058 = vsel %vm1054, %v2053, 0
      %2060 = vmatpush.bf16.msra.mxu0 0
      %2061 = vmatpush.bf16.msra.mxu0 0
      %2062 = vmatpush.bf16.msra.mxu0 0
      %2063 = vmatpush.bf16.msra.mxu0 0
      %2064 = vmatpush.bf16.msra.mxu0 0
      %2065 = vmatpush.bf16.msra.mxu0 0
      %2066 = vmatpush.bf16.msra.mxu0 %v839
      %2067 = vmatpush.bf16.msra.mxu0 %v838
      %2068 = vmatmul.bf16.gmra.mxu0 %v2055
      %v2069 = vpop.f32.mrf.mxu0
      %v2070 = vadd.f32 %v1053, %v2069
      %v2071 = vpop.f32.mrf.mxu0
      %v2072 = vadd.f32 %v1053, %v2071
      %2073 = vmatmul.bf16.gmra.mxu0 %v2058
      %v2074 = vpop.f32.mrf.mxu0
      %v2075 = vadd.f32 %v1053, %v2074
      %v2076 = vpop.f32.mrf.mxu0
      %v2077 = vadd.f32 %v1053, %v2076
      %2078 = vdwg.mxu0
      %v2079 = vtanh.pop %v2070
      %v2080 = vtanh.pop %v2072
      %v2081 = vtanh.pop %v2075
      %v2082 = vtanh.pop %v2077
      %2083 = vmatpush.bf16.msra.mxu0 0
      %2084 = vmatpush.bf16.msra.mxu0 0
      %2085 = vmatpush.bf16.msra.mxu0 0
      %2086 = vmatpush.bf16.msra.mxu0 0
      %2087 = vmatpush.bf16.msra.mxu0 %v1096
      %2088 = vmatpush.bf16.msra.mxu0 %v1095
      %2089 = vmatpush.bf16.msra.mxu0 %v1094
      %2090 = vmatpush.bf16.msra.mxu0 %v1093
      %2091 = vmatmul.bf16.gmra.mxu0 %v2024
      %v2092 = vpop.f32.mrf.mxu0
      %v2093 = vadd.f32 %v1019, %v2092
      %v2094 = vpop.f32.mrf.mxu0
      %v2095 = vadd.f32 %v1019, %v2094
      %2096 = vmatmul.bf16.gmra.mxu0 %v2027
      %v2097 = vpop.f32.mrf.mxu0
      %v2098 = vadd.f32 %v1019, %v2097
      %v2099 = vpop.f32.mrf.mxu0
      %v2100 = vadd.f32 %v1019, %v2099
      %2101 = vdwg.mxu0
      %v2102 = vmax.f32 %v2093, 0.0
      %v2103 = vmax.f32 %v2095, 0.0
      %v2104 = vmax.f32 %v2098, 0.0
      %v2105 = vmax.f32 %v2100, 0.0
      %v2106 = vpack.c.bf16 %v2103, %v2102
      %v2107 = vpack.c.bf16 %v2105, %v2104
      %v2109 = vsel %vm1054, %v2106, 0
      %v2112 = vsel %vm1054, %v2107, 0
      %2114 = vmatpush.bf16.msra.mxu0 0
      %2115 = vmatpush.bf16.msra.mxu0 0
      %2116 = vmatpush.bf16.msra.mxu0 0
      %2117 = vmatpush.bf16.msra.mxu0 0
      %2118 = vmatpush.bf16.msra.mxu0 0
      %2119 = vmatpush.bf16.msra.mxu0 0
      %2120 = vmatpush.bf16.msra.mxu0 %v839
      %2121 = vmatpush.bf16.msra.mxu0 %v838
      %2122 = vmatmul.bf16.gmra.mxu0 %v2109
      %v2123 = vpop.f32.mrf.mxu0
      %v2124 = vadd.f32 %v1053, %v2123
      %v2125 = vpop.f32.mrf.mxu0
      %v2126 = vadd.f32 %v1053, %v2125
      %2127 = vmatmul.bf16.gmra.mxu0 %v2112
      %v2128 = vpop.f32.mrf.mxu0
      %v2129 = vadd.f32 %v1053, %v2128
      %v2130 = vpop.f32.mrf.mxu0
      %v2131 = vadd.f32 %v1053, %v2130
      %2132 = vdwg.mxu0
      %v2133 = vtanh.pop %v2124
      %v2134 = vtanh.pop %v2126
      %v2135 = vtanh.pop %v2129
      %v2136 = vtanh.pop %v2131
      %2137 = vmatpush.bf16.msra.mxu0 0
      %2138 = vmatpush.bf16.msra.mxu0 0
      %2139 = vmatpush.bf16.msra.mxu0 0
      %2140 = vmatpush.bf16.msra.mxu0 0
      %2141 = vmatpush.bf16.msra.mxu0 %v1163
      %2142 = vmatpush.bf16.msra.mxu0 %v1162
      %2143 = vmatpush.bf16.msra.mxu0 %v1161
      %2144 = vmatpush.bf16.msra.mxu0 %v1160
      %2145 = vmatmul.bf16.gmra.mxu0 %v2024
      %v2146 = vpop.f32.mrf.mxu0
      %v2147 = vadd.f32 %v1019, %v2146
      %v2148 = vpop.f32.mrf.mxu0
      %v2149 = vadd.f32 %v1019, %v2148
      %2150 = vmatmul.bf16.gmra.mxu0 %v2027
      %v2151 = vpop.f32.mrf.mxu0
      %v2152 = vadd.f32 %v1019, %v2151
      %v2153 = vpop.f32.mrf.mxu0
      %v2154 = vadd.f32 %v1019, %v2153
      %2155 = vdwg.mxu0
      %v2156 = vmax.f32 %v2147, 0.0
      %v2157 = vmax.f32 %v2149, 0.0
      %v2158 = vmax.f32 %v2152, 0.0
      %v2159 = vmax.f32 %v2154, 0.0
      %v2160 = vpack.c.bf16 %v2157, %v2156
      %v2161 = vpack.c.bf16 %v2159, %v2158
      %v2163 = vsel %vm1054, %v2160, 0
      %v2166 = vsel %vm1054, %v2161, 0
      %2168 = vmatpush.bf16.msra.mxu0 0
      %2169 = vmatpush.bf16.msra.mxu0 0
      %2170 = vmatpush.bf16.msra.mxu0 0
      %2171 = vmatpush.bf16.msra.mxu0 0
      %2172 = vmatpush.bf16.msra.mxu0 0
      %2173 = vmatpush.bf16.msra.mxu0 0
      %2174 = vmatpush.bf16.msra.mxu0 %v839
      %2175 = vmatpush.bf16.msra.mxu0 %v838
      %2176 = vmatmul.bf16.gmra.mxu0 %v2163
      %v2177 = vpop.f32.mrf.mxu0
      %v2178 = vadd.f32 %v1053, %v2177
      %v2179 = vpop.f32.mrf.mxu0
      %v2180 = vadd.f32 %v1053, %v2179
      %2181 = vmatmul.bf16.gmra.mxu0 %v2166
      %v2182 = vpop.f32.mrf.mxu0
      %v2183 = vadd.f32 %v1053, %v2182
      %v2184 = vpop.f32.mrf.mxu0
      %v2185 = vadd.f32 %v1053, %v2184
      %2186 = vdwg.mxu0
      %v2187 = vtanh.pop %v2178
      %v2188 = vtanh.pop %v2180
      %v2189 = vtanh.pop %v2183
      %v2190 = vtanh.pop %v2185
      %2191 = vmatpush.bf16.msra.mxu0 0
      %2192 = vmatpush.bf16.msra.mxu0 0
      %2193 = vmatpush.bf16.msra.mxu0 0
      %2194 = vmatpush.bf16.msra.mxu0 0
      %2195 = vmatpush.bf16.msra.mxu0 %v1230
      %2196 = vmatpush.bf16.msra.mxu0 %v1229
      %2197 = vmatpush.bf16.msra.mxu0 %v1228
      %2198 = vmatpush.bf16.msra.mxu0 %v1227
      %2199 = vmatmul.bf16.gmra.mxu0 %v2024
      %v2200 = vpop.f32.mrf.mxu0
      %v2201 = vadd.f32 %v1019, %v2200
      %v2202 = vpop.f32.mrf.mxu0
      %v2203 = vadd.f32 %v1019, %v2202
      %2204 = vmatmul.bf16.gmra.mxu0 %v2027
      %v2205 = vpop.f32.mrf.mxu0
      %v2206 = vadd.f32 %v1019, %v2205
      %v2207 = vpop.f32.mrf.mxu0
      %v2208 = vadd.f32 %v1019, %v2207
      %2209 = vdwg.mxu0
      %v2210 = vmax.f32 %v2201, 0.0
      %v2211 = vmax.f32 %v2203, 0.0
      %v2212 = vmax.f32 %v2206, 0.0
      %v2213 = vmax.f32 %v2208, 0.0
      %v2214 = vpack.c.bf16 %v2211, %v2210
      %v2215 = vpack.c.bf16 %v2213, %v2212
      %v2217 = vsel %vm1054, %v2214, 0
      %v2220 = vsel %vm1054, %v2215, 0
      %2222 = vmatpush.bf16.msra.mxu0 0
      %2223 = vmatpush.bf16.msra.mxu0 0
      %2224 = vmatpush.bf16.msra.mxu0 0
      %2225 = vmatpush.bf16.msra.mxu0 0
      %2226 = vmatpush.bf16.msra.mxu0 0
      %2227 = vmatpush.bf16.msra.mxu0 0
      %2228 = vmatpush.bf16.msra.mxu0 %v839
      %2229 = vmatpush.bf16.msra.mxu0 %v838
      %2230 = vmatmul.bf16.gmra.mxu0 %v2217
      %v2231 = vpop.f32.mrf.mxu0
      %v2232 = vadd.f32 %v1053, %v2231
      %v2233 = vpop.f32.mrf.mxu0
      %v2234 = vadd.f32 %v1053, %v2233
      %2235 = vmatmul.bf16.gmra.mxu0 %v2220
      %v2236 = vpop.f32.mrf.mxu0
      %v2237 = vadd.f32 %v1053, %v2236
      %v2238 = vpop.f32.mrf.mxu0
      %v2239 = vadd.f32 %v1053, %v2238
      %2240 = vdwg.mxu0
      %v2241 = vtanh.pop %v2232
      %v2242 = vtanh.pop %v2234
      %v2243 = vtanh.pop %v2237
      %v2244 = vtanh.pop %v2239
      %v2245 = vpack.c.bf16 %v2080, %v2079
      %v2246 = vpack.c.bf16 %v2082, %v2081
      %v2248 = vsel %vm1309, %v2245, 0
      %v2251 = vsel %vm1309, %v2246, 0
      %2253 = vmatpush.bf16.msra.mxu0 0
      %2254 = vmatpush.bf16.msra.mxu0 0
      %2255 = vmatpush.bf16.msra.mxu0 0
      %2256 = vmatpush.bf16.msra.mxu0 0
      %2257 = vmatpush.bf16.msra.mxu0 0
      %2258 = vmatpush.bf16.msra.mxu0 0
      %2259 = vmatpush.bf16.msra.mxu0 0
      %2260 = vmatpush.bf16.msra.mxu0 %v1318
      %2261 = vmatmul.bf16.gmra.mxu0 %v2248
      %v2262 = vpop.f32.mrf.mxu0
      %v2263 = vadd.f32 %v1307, %v2262
      %v2264 = vpop.f32.mrf.mxu0
      %v2265 = vadd.f32 %v1307, %v2264
      %2266 = vmatmul.bf16.gmra.mxu0 %v2251
      %v2267 = vpop.f32.mrf.mxu0
      %v2268 = vadd.f32 %v1307, %v2267
      %v2269 = vpop.f32.mrf.mxu0
      %v2270 = vadd.f32 %v1307, %v2269
      %2271 = vdwg.mxu0
      %vm2272 = vcmp.gt.f32.partialorder %v2263, 0.0
      %vm2273 = vcmp.gt.f32.partialorder %v2265, 0.0
      %vm2274 = vcmp.gt.f32.partialorder %v2268, 0.0
      %vm2275 = vcmp.gt.f32.partialorder %v2270, 0.0
      %v2276 = vmul.f32 %v2263, 0.2
      %v2277 = vmul.f32 %v2265, 0.2
      %v2278 = vmul.f32 %v2268, 0.2
      %v2279 = vmul.f32 %v2270, 0.2
      %v2280 = vsel %vm2272, %v2263, %v2276
      %v2281 = vsel %vm2273, %v2265, %v2277
      %v2282 = vsel %vm2274, %v2268, %v2278
      %v2283 = vsel %vm2275, %v2270, %v2279
      %v2284 = vpack.c.bf16 %v2134, %v2133
      %v2285 = vpack.c.bf16 %v2136, %v2135
      %v2287 = vsel %vm1309, %v2284, 0
      %v2290 = vsel %vm1309, %v2285, 0
      %2292 = vmatpush.bf16.msra.mxu0 0
      %2293 = vmatpush.bf16.msra.mxu0 0
      %2294 = vmatpush.bf16.msra.mxu0 0
      %2295 = vmatpush.bf16.msra.mxu0 0
      %2296 = vmatpush.bf16.msra.mxu0 0
      %2297 = vmatpush.bf16.msra.mxu0 0
      %2298 = vmatpush.bf16.msra.mxu0 0
      %2299 = vmatpush.bf16.msra.mxu0 %v1318
      %2300 = vmatmul.bf16.gmra.mxu0 %v2287
      %v2301 = vpop.f32.mrf.mxu0
      %v2302 = vadd.f32 %v1307, %v2301
      %v2303 = vpop.f32.mrf.mxu0
      %v2304 = vadd.f32 %v1307, %v2303
      %2305 = vmatmul.bf16.gmra.mxu0 %v2290
      %v2306 = vpop.f32.mrf.mxu0
      %v2307 = vadd.f32 %v1307, %v2306
      %v2308 = vpop.f32.mrf.mxu0
      %v2309 = vadd.f32 %v1307, %v2308
      %2310 = vdwg.mxu0
      %vm2311 = vcmp.gt.f32.partialorder %v2302, 0.0
      %vm2312 = vcmp.gt.f32.partialorder %v2304, 0.0
      %vm2313 = vcmp.gt.f32.partialorder %v2307, 0.0
      %vm2314 = vcmp.gt.f32.partialorder %v2309, 0.0
      %v2315 = vmul.f32 %v2302, 0.2
      %v2316 = vmul.f32 %v2304, 0.2
      %v2317 = vmul.f32 %v2307, 0.2
      %v2318 = vmul.f32 %v2309, 0.2
      %v2319 = vsel %vm2311, %v2302, %v2315
      %v2320 = vsel %vm2312, %v2304, %v2316
      %v2321 = vsel %vm2313, %v2307, %v2317
      %v2322 = vsel %vm2314, %v2309, %v2318
      %v2323 = vpack.c.bf16 %v2188, %v2187
      %v2324 = vpack.c.bf16 %v2190, %v2189
      %v2326 = vsel %vm1309, %v2323, 0
      %v2329 = vsel %vm1309, %v2324, 0
      %2331 = vmatpush.bf16.msra.mxu0 0
      %2332 = vmatpush.bf16.msra.mxu0 0
      %2333 = vmatpush.bf16.msra.mxu0 0
      %2334 = vmatpush.bf16.msra.mxu0 0
      %2335 = vmatpush.bf16.msra.mxu0 0
      %2336 = vmatpush.bf16.msra.mxu0 0
      %2337 = vmatpush.bf16.msra.mxu0 0
      %2338 = vmatpush.bf16.msra.mxu0 %v1318
      %2339 = vmatmul.bf16.gmra.mxu0 %v2326
      %v2340 = vpop.f32.mrf.mxu0
      %v2341 = vadd.f32 %v1307, %v2340
      %v2342 = vpop.f32.mrf.mxu0
      %v2343 = vadd.f32 %v1307, %v2342
      %2344 = vmatmul.bf16.gmra.mxu0 %v2329
      %v2345 = vpop.f32.mrf.mxu0
      %v2346 = vadd.f32 %v1307, %v2345
      %v2347 = vpop.f32.mrf.mxu0
      %v2348 = vadd.f32 %v1307, %v2347
      %2349 = vdwg.mxu0
      %vm2350 = vcmp.gt.f32.partialorder %v2341, 0.0
      %vm2351 = vcmp.gt.f32.partialorder %v2343, 0.0
      %vm2352 = vcmp.gt.f32.partialorder %v2346, 0.0
      %vm2353 = vcmp.gt.f32.partialorder %v2348, 0.0
      %v2354 = vmul.f32 %v2341, 0.2
      %v2355 = vmul.f32 %v2343, 0.2
      %v2356 = vmul.f32 %v2346, 0.2
      %v2357 = vmul.f32 %v2348, 0.2
      %v2358 = vsel %vm2350, %v2341, %v2354
      %v2359 = vsel %vm2351, %v2343, %v2355
      %v2360 = vsel %vm2352, %v2346, %v2356
      %v2361 = vsel %vm2353, %v2348, %v2357
      %v2362 = vpack.c.bf16 %v2242, %v2241
      %v2363 = vpack.c.bf16 %v2244, %v2243
      %v2365 = vsel %vm1309, %v2362, 0
      %v2368 = vsel %vm1309, %v2363, 0
      %2370 = vmatpush.bf16.msra.mxu0 0
      %2371 = vmatpush.bf16.msra.mxu0 0
      %2372 = vmatpush.bf16.msra.mxu0 0
      %2373 = vmatpush.bf16.msra.mxu0 0
      %2374 = vmatpush.bf16.msra.mxu0 0
      %2375 = vmatpush.bf16.msra.mxu0 0
      %2376 = vmatpush.bf16.msra.mxu0 0
      %2377 = vmatpush.bf16.msra.mxu0 %v1318
      %2378 = vmatmul.bf16.gmra.mxu0 %v2365
      %v2379 = vpop.f32.mrf.mxu0
      %v2380 = vadd.f32 %v1307, %v2379
      %v2381 = vpop.f32.mrf.mxu0
      %v2382 = vadd.f32 %v1307, %v2381
      %2383 = vmatmul.bf16.gmra.mxu0 %v2368
      %v2384 = vpop.f32.mrf.mxu0
      %v2385 = vadd.f32 %v1307, %v2384
      %v2386 = vpop.f32.mrf.mxu0
      %v2387 = vadd.f32 %v1307, %v2386
      %2388 = vdwg.mxu0
      %vm2389 = vcmp.gt.f32.partialorder %v2380, 0.0
      %vm2390 = vcmp.gt.f32.partialorder %v2382, 0.0
      %vm2391 = vcmp.gt.f32.partialorder %v2385, 0.0
      %vm2392 = vcmp.gt.f32.partialorder %v2387, 0.0
      %v2393 = vmul.f32 %v2380, 0.2
      %v2394 = vmul.f32 %v2382, 0.2
      %v2395 = vmul.f32 %v2385, 0.2
      %v2396 = vmul.f32 %v2387, 0.2
      %v2397 = vsel %vm2389, %v2380, %v2393
      %v2398 = vsel %vm2390, %v2382, %v2394
      %v2399 = vsel %vm2391, %v2385, %v2395
      %v2400 = vsel %vm2392, %v2387, %v2396
      %2405 = vrot.lane.b32.xlu0 %v2319, 32
      %v2406 = vpop.permute.xlu0 %2405
      %2407 = vrot.lane.b32.xlu0 %v2320, 32
      %v2408 = vpop.permute.xlu0 %2407
      %2409 = vrot.lane.b32.xlu0 %v2321, 32
      %v2410 = vpop.permute.xlu0 %2409
      %2411 = vrot.lane.b32.xlu0 %v2322, 32
      %v2412 = vpop.permute.xlu0 %2411
      %2421 = vrot.lane.b32.xlu0 %v2358, 64
      %v2422 = vpop.permute.xlu0 %2421
      %2423 = vrot.lane.b32.xlu0 %v2359, 64
      %v2424 = vpop.permute.xlu0 %2423
      %2425 = vrot.lane.b32.xlu0 %v2360, 64
      %v2426 = vpop.permute.xlu0 %2425
      %2427 = vrot.lane.b32.xlu0 %v2361, 64
      %v2428 = vpop.permute.xlu0 %2427
      %2437 = vrot.lane.b32.xlu0 %v2397, 96
      %v2438 = vpop.permute.xlu0 %2437
      %2439 = vrot.lane.b32.xlu0 %v2398, 96
      %v2440 = vpop.permute.xlu0 %2439
      %2441 = vrot.lane.b32.xlu0 %v2399, 96
      %v2442 = vpop.permute.xlu0 %2441
      %2443 = vrot.lane.b32.xlu0 %v2400, 96
      %v2444 = vpop.permute.xlu0 %2443
      %v2449 = vsel %vm1054, %v2280, %v2406
      %v2450 = vsel %vm1054, %v2281, %v2408
      %v2451 = vsel %vm1054, %v2282, %v2410
      %v2452 = vsel %vm1054, %v2283, %v2412
      %v2453 = vsel %vm1021, %v2449, %v2422
      %v2454 = vsel %vm1021, %v2450, %v2424
      %v2455 = vsel %vm1021, %v2451, %v2426
      %v2456 = vsel %vm1021, %v2452, %v2428
      %v2457 = vsel %vm1524, %v2453, %v2438
      %v2458 = vsel %vm1524, %v2454, %v2440
      %v2459 = vsel %vm1524, %v2455, %v2442
      %v2460 = vsel %vm1524, %v2456, %v2444
      %v2461 = vpack.c.bf16 %v2458, %v2457
      %v2462 = vpack.c.bf16 %v2460, %v2459
      %2463 = vmatpush.bf16.msra.mxu0 %v884
      %2464 = vmatpush.bf16.msra.mxu0 %v883
      %2465 = vmatpush.bf16.msra.mxu0 %v882
      %2466 = vmatpush.bf16.msra.mxu0 %v881
      %2467 = vmatpush.bf16.msra.mxu0 %v880
      %2468 = vmatpush.bf16.msra.mxu0 %v879
      %2469 = vmatpush.bf16.msra.mxu0 %v878
      %2470 = vmatpush.bf16.msra.mxu0 %v877
      %2471 = vmatmul.bf16.gmra.mxu0 %v2461
      %v2472 = vpop.f32.mrf.mxu0
      %v2473 = vadd.f32 %v1532, %v2472
      %v2474 = vpop.f32.mrf.mxu0
      %v2475 = vadd.f32 %v1532, %v2474
      %2476 = vmatmul.bf16.gmra.mxu0 %v2462
      %v2477 = vpop.f32.mrf.mxu0
      %v2478 = vadd.f32 %v1532, %v2477
      %v2479 = vpop.f32.mrf.mxu0
      %v2480 = vadd.f32 %v1532, %v2479
      %2481 = vdwg.mxu0
      %vm2482 = vcmp.gt.f32.partialorder %v2473, 0.0
      %vm2483 = vcmp.gt.f32.partialorder %v2475, 0.0
      %vm2484 = vcmp.gt.f32.partialorder %v2478, 0.0
      %vm2485 = vcmp.gt.f32.partialorder %v2480, 0.0
      %v2486 = vmul.f32 %v2473, 0.2
      %v2487 = vmul.f32 %v2475, 0.2
      %v2488 = vmul.f32 %v2478, 0.2
      %v2489 = vmul.f32 %v2480, 0.2
      %v2490 = vsel %vm2482, %v2473, %v2486
      %v2491 = vsel %vm2483, %v2475, %v2487
      %v2492 = vsel %vm2484, %v2478, %v2488
      %v2493 = vsel %vm2485, %v2480, %v2489
      %v2494 = vmul.f32 %v2490, %v886
      %v2495 = vmul.f32 %v2491, %v887
      %v2496 = vmul.f32 %v2492, %v886
      %v2497 = vmul.f32 %v2493, %v887
      %2498 = vmatpush.msra.mxu0 0.0
      %2499 = vmatpush.msra.mxu0 0.0
      %2500 = vmatpush.msra.mxu0 0.0
      %2501 = vmatpush.msra.mxu0 0.0
      %2502 = vmatpush.msra.mxu0 0.0
      %2503 = vmatpush.msra.mxu0 0.0
      %2504 = vmatpush.msra.mxu0 0.0
      %2505 = vmatpush.msra.mxu0 0.0
      %2506 = vmatpush.msra.mxu0 0.0
      %2507 = vmatpush.msra.mxu0 0.0
      %2508 = vmatpush.msra.mxu0 0.0
      %2509 = vmatpush.msra.mxu0 0.0
      %2510 = vmatpush.msra.mxu0 %v2497
      %2511 = vmatpush.msra.mxu0 %v2496
      %2512 = vmatpush.msra.mxu0 %v2495
      %2513 = vmatpush.msra.mxu0 %v2494
      %2514 = vmatmul.f32.gmra.mxu0 %v1570
      %v2515 = vpop.f32.mrf.mxu0
      %v2516 = vadd.f32 0.0, %v2515
      %2517 = vdwg.mxu0
      %v2518 = vsel %vm1592, %v2516, 0.0
      %2519 = vadd.xlane.f32.xlu0 %v2518
      %v2520 = vpop.xlane.xlu0 %2519
      %v2521 = vadd.f32 %v2520, %v1597
      %v2522 = vsub.f32 0.0, %v2521
      %v2523 = vmax.f32 %v2522, 0.0
      %v2524 = vand.u32 2147483647, %v2522
      %v2525 = vsub.f32 0.0, %v2524
      %v2526 = vmul.f32 %v2525, 1.442695
      %v2527 = vpow.pop %v2526
      %v2528 = vadd.f32 %v2527, 1.0
      %v2529 = vlog2.pop %v2528
      %v2530 = vmul.f32 %v2529, 0.6931472
      %v2531 = vadd.f32 %v2523, %v2530
      %v2532 = vsel %vm1897, %v2531, 0.0
      %2533 = vadd.xlane.f32.xlu0 %v2532
      %v2534 = vpop.xlane.xlu0 %2533
      %v2535 = vrot.slane %v2534, 4
      %v2536 = vadd.f32 %v2534, %v2535
      %v2537 = vrot.slane %v2536, 2
      %v2538 = vadd.f32 %v2536, %v2537
      %v2539 = vrot.slane %v2538, 1
      %v2540 = vadd.f32 %v2538, %v2539
      %s2541 = vtos %v2540
      %v2542 = vrcp.pop 2.0
      %v2543 = vmul.f32 2.0, %v2542
      %v2544 = vsub.f32 1.0, %v2543
      %v2545 = vmul.f32 %v2542, %v2544
      %v2546 = vadd.f32 %v2542, %v2545
      %vm2547 = vweird.f32 %v2542
      %v2548 = vsel %vm2547, %v2542, %v2546
      %s2549 = vtos %v2548
      %s2550 = smul.f32 %s2541, %s2549
      %v2551 = vstv %s1916
      %2552 = vst [vmem:[%s730] sm:$0x1] %v2551
      %v2553 = vstv %s2550
      %2554 = vst [vmem:[%s733] sm:$0x1] %v2553
      %p2555 = scmp.lt.s32.totalorder %s28, 5
      %s2556 = scalar_select %p2555, %s28, 5
      %s2557 = scalar_lea.vmem %s15, %s2556
      %p2558 = scmp.lt.s32.totalorder %s28, 5
      %s2559 = scalar_select %p2558, %s28, 5
      %s2560 = scalar_lea.vmem %s16, %s2559
      // Predicated region
      $region81: #{biogan_ind6class_forward.3} parent=79 // pred_check
        %p2561 = pneg %p426
      $region82: #{biogan_ind6class_forward.3} parent=79 // pred_check_branch
        %2563 = sbr.rel (%p2561) target = $region84
      $region83: #{biogan_ind6class_forward.3} parent=79 // pred_region
        _
      $region84: #{biogan_ind6class_forward.3} parent=79 // pred_fallthru
        _
      // Predicated region
      $region85: #{biogan_ind6class_forward.3} parent=79 // pred_check
        %p2564 = pneg %p452
      $region86: #{biogan_ind6class_forward.3} parent=79 // pred_check_branch
        %2566 = sbr.rel (%p2564) target = $region88
      $region87: #{biogan_ind6class_forward.3} parent=79 // pred_region
        _
      $region88: #{biogan_ind6class_forward.3} parent=79 // pred_fallthru
        _
    $region80: #{biogan_ind6class_forward.3} parent=5 // pred_fallthru
      _
    %p2567 = scmp.le.s32.totalorder 2, %s23
    // Predicated region
    $region89: #{biogan_ind6class_forward.3} parent=5 // pred_check
      %p2568 = pneg %p2567
    $region90: #{biogan_ind6class_forward.3} parent=5 // pred_check_branch
      %2570 = sbr.rel (%p2568) target = $region92
    $region91: #{biogan_ind6class_forward.3} parent=5 // pred_region
      %s2571 = ssub.s32 %s23, 2
      // Predicated region
      $region93: #{biogan_ind6class_forward.3} parent=91 // pred_check
        %p2572 = pneg %p432
      $region94: #{biogan_ind6class_forward.3} parent=91 // pred_check_branch
        %2574 = sbr.rel (%p2572) target = $region96
      $region95: #{biogan_ind6class_forward.3} parent=91 // pred_region
        %p2575 = scmp.lt.s32.totalorder %s29, 5
        %s2576 = scalar_select %p2575, %s29, 5
        %s2577 = scalar_lea.vmem %s15, %s2576
      $region96: #{biogan_ind6class_forward.3} parent=91 // pred_fallthru
        _
      // Predicated region
      $region97: #{biogan_ind6class_forward.3} parent=91 // pred_check
        %p2578 = pneg %p458
      $region98: #{biogan_ind6class_forward.3} parent=91 // pred_check_branch
        %2580 = sbr.rel (%p2578) target = $region100
      $region99: #{biogan_ind6class_forward.3} parent=91 // pred_region
        %p2581 = scmp.lt.s32.totalorder %s29, 5
        %s2582 = scalar_select %p2581, %s29, 5
        %s2583 = scalar_lea.vmem %s16, %s2582
      $region100: #{biogan_ind6class_forward.3} parent=91 // pred_fallthru
        _
    $region92: #{biogan_ind6class_forward.3} parent=5 // pred_fallthru
      _
  $region6: #{biogan_ind6class_forward.3} parent=0 // loop_footer
    %s27 = sadd.s32 1, %s23
  $region7: #{biogan_ind6class_forward.3} parent=0 // loop_footer_branch
    %22 = sbr.rel target = $region3
  $region8: #{biogan_ind6class_forward.3} parent=0 // loop_exit
    _

</llo_original>
